<compile_context>
chip_gen: v7x
topology: tpu7x:2x2x1
jax: 0.10.0
libtpu: 0.0.40
codegen_flags: <defaults>
</compile_context>

<pallas_src>
import jax
import jax.numpy as jnp
from jax.experimental import pallas as pl
from jax.experimental.pallas import tpu as pltpu


# ---------------------------------------------------------------------------
# Kernel
# ---------------------------------------------------------------------------
def make_nf_kernel(num_coupling):
    C = num_coupling

    def nf_kernel(sscale_ref,                  # SMEM (C,) f32
                  w1_ref, b1_ref,              # (C, 2W, 1), (C, 2W, 1)
                  w2_ref, b2_ref,              # (C, 2W, 2W), (C, 2W, 1)
                  w3_ref, b3_ref,              # (C, 2W, 2W), (C, 2W, 1)
                  w4_ref, b4_ref,              # (C, 2, 2W), (C, 2, 1)
                  x_ref,                       # (2, TN)   -- batch on the lane axis
                  y_ref, svals_ref):           # (2, TN), (C, TN)
        y1 = x_ref[0:1, :]                     # (1, TN)
        y2 = x_ref[1:2, :]                     # (1, TN)

        # Statically unrolled coupling-layer loop (C is small); parity is static.
        for i in range(C):
            cond = y1 if (i % 2 == 0) else y2                    # (1, TN)

            # Fused s/t backbone (column layout: h_out = W @ h_in + b).
            # Layer 1 is a rank-1 expansion; the heavy work is the (2W,2W) MXU matmuls.
            h = jnp.maximum(w1_ref[i] * cond + b1_ref[i], 0.0)   # (2W, TN)
            h = jnp.maximum(
                jnp.dot(w2_ref[i], h, preferred_element_type=jnp.float32)
                + b2_ref[i], 0.0)                                # (2W, TN)
            h = jnp.maximum(
                jnp.dot(w3_ref[i], h, preferred_element_type=jnp.float32)
                + b3_ref[i], 0.0)                                # (2W, TN)
            o = jnp.tanh(
                jnp.dot(w4_ref[i], h, preferred_element_type=jnp.float32)
                + b4_ref[i])                                     # (2, TN)

            s = sscale_ref[i] * o[0:1, :]                        # s head (1, TN)
            t = o[1:2, :]                                        # t head (1, TN)

            if i % 2 == 0:
                y2 = jnp.exp(s) * y2 + t
            else:
                y1 = jnp.exp(s) * y1 + t

            # Lane-dense direct store of this layer's s values (no concat, no relayout).
            svals_ref[i:i + 1, :] = s

        y_ref[0:1, :] = y1
        y_ref[1:2, :] = y2

    return nf_kernel


# ---------------------------------------------------------------------------
# One-time parameter fusion (hoisted out of the per-call wrapper)
# ---------------------------------------------------------------------------
def fuse_params(s_params, t_params):
    """Fuse per-layer s-net / t-net backbones into block-diagonal stacks in column layout
    (h_out = W @ h_in + b).  Inputs are PyTorch nn.Linear layout (weight (out,in),
    bias (out,)), stacked over the C coupling layers.  Call once when params are loaded."""
    sw1, sb1, sw2, sb2, sw3, sb3, sw4, sb4 = s_params
    tw1, tb1, tw2, tb2, tw3, tb3, tw4, tb4 = t_params
    C, W, _ = sw2.shape
    f32 = jnp.float32

    w1f = jnp.concatenate([sw1, tw1], axis=1).astype(f32)                 # (C, 2W, 1)
    b1f = jnp.concatenate([sb1, tb1], axis=1)[..., None].astype(f32)      # (C, 2W, 1)

    def block_diag(a, b):
        z = jnp.zeros((C, W, W), f32)
        top = jnp.concatenate([a, z], axis=2)
        bot = jnp.concatenate([z, b], axis=2)
        return jnp.concatenate([top, bot], axis=1)                        # (C, 2W, 2W)

    w2f = block_diag(sw2, tw2)
    b2f = jnp.concatenate([sb2, tb2], axis=1)[..., None].astype(f32)      # (C, 2W, 1)
    w3f = block_diag(sw3, tw3)
    b3f = jnp.concatenate([sb3, tb3], axis=1)[..., None].astype(f32)      # (C, 2W, 1)

    zrow = jnp.zeros((C, 1, W), f32)
    w4f = jnp.concatenate([jnp.concatenate([sw4, zrow], axis=2),          # s-head row
                           jnp.concatenate([zrow, tw4], axis=2)],         # t-head row
                          axis=1)                                         # (C, 2, 2W)
    b4f = jnp.concatenate([sb4, tb4], axis=1)[..., None].astype(f32)      # (C, 2, 1)
    return (w1f, b1f, w2f, b2f, w3f, b3f, w4f, b4f)


# ---------------------------------------------------------------------------
# Wrapper
# ---------------------------------------------------------------------------
def _pick_tile(n):
    for t in (2048, 1024, 512, 256, 128):
        if n % t == 0:
            return t
    return n  # fallback: single full-extent lane tile


def normalizing_flow_2d(x, s_scale, fused_params, *, tile_n=None):
    """x: (N, 2) f32.  s_scale: (C,) f32.  fused_params: output of fuse_params().
    Returns (y (N, 2), s_vals (C*N, 1)) matching the PyTorch training-mode forward."""
    N = x.shape[0]
    C = s_scale.shape[0]
    w1f, b1f, w2f, b2f, w3f, b3f, w4f, b4f = fused_params
    W2 = w2f.shape[-1]                     # 2W

    tn = tile_n if tile_n is not None else _pick_tile(N)
    if N % tn != 0:
        tn = N
    grid = (N // tn,)

    x_t = x.T                              # (2, N): batch on the lane axis

    def const3(shape):
        # Constant block index -> weight stack stays VMEM-resident across grid steps.
        return pl.BlockSpec(shape, lambda n: (0, 0, 0))

    grid_spec = pltpu.PrefetchScalarGridSpec(
        num_scalar_prefetch=0,
        grid=grid,
        in_specs=[
            pl.BlockSpec(memory_space=pltpu.MemorySpace.SMEM),   # s_scale (C,)
            const3((C, W2, 1)), const3((C, W2, 1)),              # w1f, b1f
            const3((C, W2, W2)), const3((C, W2, 1)),             # w2f, b2f
            const3((C, W2, W2)), const3((C, W2, 1)),             # w3f, b3f
            const3((C, 2, W2)), const3((C, 2, 1)),               # w4f, b4f
            pl.BlockSpec((2, tn), lambda n: (0, n)),             # x tile (lane-dense)
        ],
        out_specs=(
            pl.BlockSpec((2, tn), lambda n: (0, n)),             # y tile
            pl.BlockSpec((C, tn), lambda n: (0, n)),             # svals tile
        ),
    )

    y_t, svals = pl.pallas_call(
        make_nf_kernel(C),
        out_shape=(jax.ShapeDtypeStruct((2, N), jnp.float32),
                   jax.ShapeDtypeStruct((C, N), jnp.float32)),
        grid_spec=grid_spec,
        compiler_params=pltpu.CompilerParams(
            dimension_semantics=("parallel",)),                  # megacore-shards N on v7x
    )(s_scale, w1f, b1f, w2f, b2f, w3f, b3f, w4f, b4f, x_t)

    # torch.cat(s_vals) along dim 0 -> (C*N, 1): layer-major; free contiguous reshape here.
    return y_t.T, svals.reshape(C * N, 1)


# ---------------------------------------------------------------------------
# Deterministic synthetic parameters (PyTorch nn.Linear layout, stacked over C)
# ---------------------------------------------------------------------------
def init_backbone_stack(key, C, W):
    ks = jax.random.split(key, 8)
    sc = 0.3
    w1 = (jax.random.normal(ks[0], (C, W, 1)) * sc).astype(jnp.float32)
    b1 = (jax.random.normal(ks[1], (C, W)) * sc).astype(jnp.float32)
    w2 = (jax.random.normal(ks[2], (C, W, W)) * (sc / jnp.sqrt(W))).astype(jnp.float32)
    b2 = (jax.random.normal(ks[3], (C, W)) * sc).astype(jnp.float32)
    w3 = (jax.random.normal(ks[4], (C, W, W)) * (sc / jnp.sqrt(W))).astype(jnp.float32)
    b3 = (jax.random.normal(ks[5], (C, W)) * sc).astype(jnp.float32)
    w4 = (jax.random.normal(ks[6], (C, 1, W)) * (sc / jnp.sqrt(W))).astype(jnp.float32)
    b4 = (jax.random.normal(ks[7], (C, 1)) * sc).astype(jnp.float32)
    return [w1, b1, w2, b2, w3, b3, w4, b4]


# ---------------------------------------------------------------------------
# Pure-JAX reference (mirrors the PyTorch training-mode forward, unfused)
# ---------------------------------------------------------------------------
def _ref_mlp(x, p, i):
    w1, b1, w2, b2, w3, b3, w4, b4 = (a[i] for a in p)
    h = jnp.maximum(x @ w1.T + b1, 0.0)
    h = jnp.maximum(h @ w2.T + b2, 0.0)
    h = jnp.maximum(h @ w3.T + b3, 0.0)
    return jnp.tanh(h @ w4.T + b4)


def reference_forward(x, s_scale, s_params, t_params):
    C = s_scale.shape[0]
    y1, y2 = x[:, :1], x[:, 1:]
    svals = []
    for i in range(C):
        if i % 2 == 0:
            s = s_scale[i] * _ref_mlp(y1, s_params, i)
            y2 = jnp.exp(s) * y2 + _ref_mlp(y1, t_params, i)
        else:
            s = s_scale[i] * _ref_mlp(y2, s_params, i)
            y1 = jnp.exp(s) * y1 + _ref_mlp(y2, t_params, i)
        svals.append(s)
    return jnp.concatenate([y1, y2], 1), jnp.concatenate(svals, 0)


# ---------------------------------------------------------------------------
if __name__ == "__main__":
    N = 256            # batch: two 128-lane tiles -> grid of 2 (exercises pipelining)
    C = 4              # num_coupling
    W = 32             # backbone width

    key = jax.random.PRNGKey(0)
    kx, ks, kt, ksc = jax.random.split(key, 4)

    x = jax.random.normal(kx, (N, 2), dtype=jnp.float32)
    s_params = init_backbone_stack(ks, C, W)
    t_params = init_backbone_stack(kt, C, W)
    s_scale = jax.random.normal(ksc, (C,), dtype=jnp.float32)

    fused = fuse_params(s_params, t_params)    # one-time fusion, hoisted out of the call
    y, svals = normalizing_flow_2d(x, s_scale, fused, tile_n=128)
    y = jax.block_until_ready(y)
    svals = jax.block_until_ready(svals)

    y_ref, svals_ref = reference_forward(x, s_scale, s_params, t_params)

    assert y.shape == (N, 2) and svals.shape == (C * N, 1)
    assert jnp.allclose(y, y_ref, rtol=5e-4, atol=1e-4), "y mismatch vs reference"
    assert jnp.allclose(svals, svals_ref, rtol=5e-4, atol=1e-4), "s_vals mismatch vs reference"

    print("KERNEL_OK")
</pallas_src>

<mosaic_0001>
module attributes {stable_mosaic.version = 11 : i64} {
  func.func @nf_kernel(%arg0: i32, %arg1: memref<4xf32, #tpu.memory_space<smem>>, %arg2: memref<4x64x1xf32, #tpu.memory_space<vmem>>, %arg3: memref<4x64x1xf32, #tpu.memory_space<vmem>>, %arg4: memref<4x64x64xf32, #tpu.memory_space<vmem>>, %arg5: memref<4x64x1xf32, #tpu.memory_space<vmem>>, %arg6: memref<4x64x64xf32, #tpu.memory_space<vmem>>, %arg7: memref<4x64x1xf32, #tpu.memory_space<vmem>>, %arg8: memref<4x2x64xf32, #tpu.memory_space<vmem>>, %arg9: memref<4x2x1xf32, #tpu.memory_space<vmem>>, %arg10: memref<2x128xf32, #tpu.memory_space<vmem>>, %arg11: memref<2x128xf32, #tpu.memory_space<vmem>>, %arg12: memref<4x128xf32, #tpu.memory_space<vmem>>) attributes {dimension_semantics = [#tpu.dimension_semantics<parallel>], iteration_bounds = array<i64: 2>, scalar_prefetch = 0 : i64, scratch_operands = 0 : i64, tpu.core_type = #tpu.core_type<tc>, window_params = [{transform_indices = @transform_0, window_bounds = array<i64: 4>}, {pipeline_mode = #tpu.pipeline_mode<synchronous>, transform_indices = @transform_1, window_bounds = array<i64: 4, 64, 1>}, {pipeline_mode = #tpu.pipeline_mode<synchronous>, transform_indices = @transform_2, window_bounds = array<i64: 4, 64, 1>}, {pipeline_mode = #tpu.pipeline_mode<synchronous>, transform_indices = @transform_3, window_bounds = array<i64: 4, 64, 64>}, {pipeline_mode = #tpu.pipeline_mode<synchronous>, transform_indices = @transform_4, window_bounds = array<i64: 4, 64, 1>}, {pipeline_mode = #tpu.pipeline_mode<synchronous>, transform_indices = @transform_5, window_bounds = array<i64: 4, 64, 64>}, {pipeline_mode = #tpu.pipeline_mode<synchronous>, transform_indices = @transform_6, window_bounds = array<i64: 4, 64, 1>}, {pipeline_mode = #tpu.pipeline_mode<synchronous>, transform_indices = @transform_7, window_bounds = array<i64: 4, 2, 64>}, {pipeline_mode = #tpu.pipeline_mode<synchronous>, transform_indices = @transform_8, window_bounds = array<i64: 4, 2, 1>}, {transform_indices = @transform_9, window_bounds = array<i64: 2, 128>}, {transform_indices = @transform_10, window_bounds = array<i64: 2, 128>}, {transform_indices = @transform_11, window_bounds = array<i64: 4, 128>}]} {
    %c0 = arith.constant 0 : index
    %c0_0 = arith.constant 0 : index
    %0 = vector.load %arg10[%c0, %c0_0] : memref<2x128xf32, #tpu.memory_space<vmem>>, vector<1x128xf32>
    %c1 = arith.constant 1 : index
    %c0_1 = arith.constant 0 : index
    %1 = vector.load %arg10[%c1, %c0_1] : memref<2x128xf32, #tpu.memory_space<vmem>>, vector<1x128xf32>
    %c0_2 = arith.constant 0 : index
    %c0_3 = arith.constant 0 : index
    %c0_4 = arith.constant 0 : index
    %2 = vector.load %arg2[%c0_2, %c0_3, %c0_4] : memref<4x64x1xf32, #tpu.memory_space<vmem>>, vector<1x64x1xf32>
    %3 = vector.shape_cast %2 : vector<1x64x1xf32> to vector<64x1xf32>
    %4 = vector.broadcast %3 : vector<64x1xf32> to vector<64x128xf32>
    %5 = vector.broadcast %0 : vector<1x128xf32> to vector<64x128xf32>
    %6 = arith.mulf %4, %5 : vector<64x128xf32>
    %c0_5 = arith.constant 0 : index
    %c0_6 = arith.constant 0 : index
    %c0_7 = arith.constant 0 : index
    %7 = vector.load %arg3[%c0_5, %c0_6, %c0_7] : memref<4x64x1xf32, #tpu.memory_space<vmem>>, vector<1x64x1xf32>
    %8 = vector.shape_cast %7 : vector<1x64x1xf32> to vector<64x1xf32>
    %9 = vector.broadcast %8 : vector<64x1xf32> to vector<64x128xf32>
    %10 = arith.addf %6, %9 : vector<64x128xf32>
    %cst = arith.constant 0.000000e+00 : f32
    %11 = vector.broadcast %cst : f32 to vector<64x128xf32>
    %12 = arith.maximumf %10, %11 : vector<64x128xf32>
    %c0_8 = arith.constant 0 : index
    %c0_9 = arith.constant 0 : index
    %c0_10 = arith.constant 0 : index
    %13 = vector.load %arg4[%c0_8, %c0_9, %c0_10] : memref<4x64x64xf32, #tpu.memory_space<vmem>>, vector<1x64x64xf32>
    %14 = vector.shape_cast %13 : vector<1x64x64xf32> to vector<64x64xf32>
    %cst_11 = arith.constant dense<0.000000e+00> : vector<64x128xf32>
    %15 = tpu.matmul %14, %12, %cst_11 {dimension_numbers = #tpu.dot_dimension_numbers<[1], [0], [0], [1], [0, 0, 1, 1], [], []>} : vector<64x64xf32>, vector<64x128xf32>, vector<64x128xf32> -> vector<64x128xf32>
    %c0_12 = arith.constant 0 : index
    %c0_13 = arith.constant 0 : index
    %c0_14 = arith.constant 0 : index
    %16 = vector.load %arg5[%c0_12, %c0_13, %c0_14] : memref<4x64x1xf32, #tpu.memory_space<vmem>>, vector<1x64x1xf32>
    %17 = vector.shape_cast %16 : vector<1x64x1xf32> to vector<64x1xf32>
    %18 = vector.broadcast %17 : vector<64x1xf32> to vector<64x128xf32>
    %19 = arith.addf %15, %18 : vector<64x128xf32>
    %cst_15 = arith.constant 0.000000e+00 : f32
    %20 = vector.broadcast %cst_15 : f32 to vector<64x128xf32>
    %21 = arith.maximumf %19, %20 : vector<64x128xf32>
    %c0_16 = arith.constant 0 : index
    %c0_17 = arith.constant 0 : index
    %c0_18 = arith.constant 0 : index
    %22 = vector.load %arg6[%c0_16, %c0_17, %c0_18] : memref<4x64x64xf32, #tpu.memory_space<vmem>>, vector<1x64x64xf32>
    %23 = vector.shape_cast %22 : vector<1x64x64xf32> to vector<64x64xf32>
    %cst_19 = arith.constant dense<0.000000e+00> : vector<64x128xf32>
    %24 = tpu.matmul %23, %21, %cst_19 {dimension_numbers = #tpu.dot_dimension_numbers<[1], [0], [0], [1], [0, 0, 1, 1], [], []>} : vector<64x64xf32>, vector<64x128xf32>, vector<64x128xf32> -> vector<64x128xf32>
    %c0_20 = arith.constant 0 : index
    %c0_21 = arith.constant 0 : index
    %c0_22 = arith.constant 0 : index
    %25 = vector.load %arg7[%c0_20, %c0_21, %c0_22] : memref<4x64x1xf32, #tpu.memory_space<vmem>>, vector<1x64x1xf32>
    %26 = vector.shape_cast %25 : vector<1x64x1xf32> to vector<64x1xf32>
    %27 = vector.broadcast %26 : vector<64x1xf32> to vector<64x128xf32>
    %28 = arith.addf %24, %27 : vector<64x128xf32>
    %cst_23 = arith.constant 0.000000e+00 : f32
    %29 = vector.broadcast %cst_23 : f32 to vector<64x128xf32>
    %30 = arith.maximumf %28, %29 : vector<64x128xf32>
    %c0_24 = arith.constant 0 : index
    %c0_25 = arith.constant 0 : index
    %c0_26 = arith.constant 0 : index
    %31 = vector.load %arg8[%c0_24, %c0_25, %c0_26] : memref<4x2x64xf32, #tpu.memory_space<vmem>>, vector<1x2x64xf32>
    %32 = vector.shape_cast %31 : vector<1x2x64xf32> to vector<2x64xf32>
    %cst_27 = arith.constant dense<0.000000e+00> : vector<2x128xf32>
    %33 = tpu.matmul %32, %30, %cst_27 {dimension_numbers = #tpu.dot_dimension_numbers<[1], [0], [0], [1], [0, 0, 1, 1], [], []>} : vector<2x64xf32>, vector<64x128xf32>, vector<2x128xf32> -> vector<2x128xf32>
    %c0_28 = arith.constant 0 : index
    %c0_29 = arith.constant 0 : index
    %c0_30 = arith.constant 0 : index
    %34 = vector.load %arg9[%c0_28, %c0_29, %c0_30] : memref<4x2x1xf32, #tpu.memory_space<vmem>>, vector<1x2x1xf32>
    %35 = vector.shape_cast %34 : vector<1x2x1xf32> to vector<2x1xf32>
    %36 = vector.broadcast %35 : vector<2x1xf32> to vector<2x128xf32>
    %37 = arith.addf %33, %36 : vector<2x128xf32>
    %38 = math.tanh %37 : vector<2x128xf32>
    %c0_31 = arith.constant 0 : index
    %39 = memref.load %arg1[%c0_31] : memref<4xf32, #tpu.memory_space<smem>>
    %40 = vector.extract_strided_slice %38 {offsets = [0, 0], sizes = [1, 128], strides = [1, 1]} : vector<2x128xf32> to vector<1x128xf32>
    %41 = vector.broadcast %39 : f32 to vector<1x128xf32>
    %42 = arith.mulf %41, %40 : vector<1x128xf32>
    %43 = vector.extract_strided_slice %38 {offsets = [1, 0], sizes = [1, 128], strides = [1, 1]} : vector<2x128xf32> to vector<1x128xf32>
    %44 = math.exp %42 : vector<1x128xf32>
    %45 = arith.mulf %44, %1 : vector<1x128xf32>
    %46 = arith.addf %45, %43 : vector<1x128xf32>
    %c0_32 = arith.constant 0 : index
    %c0_33 = arith.constant 0 : index
    %47 = vector.load %arg12[%c0_32, %c0_33] : memref<4x128xf32, #tpu.memory_space<vmem>>, vector<1x128xf32>
    tpu.vector_store %arg12[%c0_32, %c0_33], %42 {strides = array<i32>} : memref<4x128xf32, #tpu.memory_space<vmem>>, vector<1x128xf32>,
    %c1_34 = arith.constant 1 : index
    %c0_35 = arith.constant 0 : index
    %c0_36 = arith.constant 0 : index
    %48 = vector.load %arg2[%c1_34, %c0_35, %c0_36] : memref<4x64x1xf32, #tpu.memory_space<vmem>>, vector<1x64x1xf32>
    %49 = vector.shape_cast %48 : vector<1x64x1xf32> to vector<64x1xf32>
    %50 = vector.broadcast %49 : vector<64x1xf32> to vector<64x128xf32>
    %51 = vector.broadcast %46 : vector<1x128xf32> to vector<64x128xf32>
    %52 = arith.mulf %50, %51 : vector<64x128xf32>
    %c1_37 = arith.constant 1 : index
    %c0_38 = arith.constant 0 : index
    %c0_39 = arith.constant 0 : index
    %53 = vector.load %arg3[%c1_37, %c0_38, %c0_39] : memref<4x64x1xf32, #tpu.memory_space<vmem>>, vector<1x64x1xf32>
    %54 = vector.shape_cast %53 : vector<1x64x1xf32> to vector<64x1xf32>
    %55 = vector.broadcast %54 : vector<64x1xf32> to vector<64x128xf32>
    %56 = arith.addf %52, %55 : vector<64x128xf32>
    %cst_40 = arith.constant 0.000000e+00 : f32
    %57 = vector.broadcast %cst_40 : f32 to vector<64x128xf32>
    %58 = arith.maximumf %56, %57 : vector<64x128xf32>
    %c1_41 = arith.constant 1 : index
    %c0_42 = arith.constant 0 : index
    %c0_43 = arith.constant 0 : index
    %59 = vector.load %arg4[%c1_41, %c0_42, %c0_43] : memref<4x64x64xf32, #tpu.memory_space<vmem>>, vector<1x64x64xf32>
    %60 = vector.shape_cast %59 : vector<1x64x64xf32> to vector<64x64xf32>
    %cst_44 = arith.constant dense<0.000000e+00> : vector<64x128xf32>
    %61 = tpu.matmul %60, %58, %cst_44 {dimension_numbers = #tpu.dot_dimension_numbers<[1], [0], [0], [1], [0, 0, 1, 1], [], []>} : vector<64x64xf32>, vector<64x128xf32>, vector<64x128xf32> -> vector<64x128xf32>
    %c1_45 = arith.constant 1 : index
    %c0_46 = arith.constant 0 : index
    %c0_47 = arith.constant 0 : index
    %62 = vector.load %arg5[%c1_45, %c0_46, %c0_47] : memref<4x64x1xf32, #tpu.memory_space<vmem>>, vector<1x64x1xf32>
    %63 = vector.shape_cast %62 : vector<1x64x1xf32> to vector<64x1xf32>
    %64 = vector.broadcast %63 : vector<64x1xf32> to vector<64x128xf32>
    %65 = arith.addf %61, %64 : vector<64x128xf32>
    %cst_48 = arith.constant 0.000000e+00 : f32
    %66 = vector.broadcast %cst_48 : f32 to vector<64x128xf32>
    %67 = arith.maximumf %65, %66 : vector<64x128xf32>
    %c1_49 = arith.constant 1 : index
    %c0_50 = arith.constant 0 : index
    %c0_51 = arith.constant 0 : index
    %68 = vector.load %arg6[%c1_49, %c0_50, %c0_51] : memref<4x64x64xf32, #tpu.memory_space<vmem>>, vector<1x64x64xf32>
    %69 = vector.shape_cast %68 : vector<1x64x64xf32> to vector<64x64xf32>
    %cst_52 = arith.constant dense<0.000000e+00> : vector<64x128xf32>
    %70 = tpu.matmul %69, %67, %cst_52 {dimension_numbers = #tpu.dot_dimension_numbers<[1], [0], [0], [1], [0, 0, 1, 1], [], []>} : vector<64x64xf32>, vector<64x128xf32>, vector<64x128xf32> -> vector<64x128xf32>
    %c1_53 = arith.constant 1 : index
    %c0_54 = arith.constant 0 : index
    %c0_55 = arith.constant 0 : index
    %71 = vector.load %arg7[%c1_53, %c0_54, %c0_55] : memref<4x64x1xf32, #tpu.memory_space<vmem>>, vector<1x64x1xf32>
    %72 = vector.shape_cast %71 : vector<1x64x1xf32> to vector<64x1xf32>
    %73 = vector.broadcast %72 : vector<64x1xf32> to vector<64x128xf32>
    %74 = arith.addf %70, %73 : vector<64x128xf32>
    %cst_56 = arith.constant 0.000000e+00 : f32
    %75 = vector.broadcast %cst_56 : f32 to vector<64x128xf32>
    %76 = arith.maximumf %74, %75 : vector<64x128xf32>
    %c1_57 = arith.constant 1 : index
    %c0_58 = arith.constant 0 : index
    %c0_59 = arith.constant 0 : index
    %77 = vector.load %arg8[%c1_57, %c0_58, %c0_59] : memref<4x2x64xf32, #tpu.memory_space<vmem>>, vector<1x2x64xf32>
    %78 = vector.shape_cast %77 : vector<1x2x64xf32> to vector<2x64xf32>
    %cst_60 = arith.constant dense<0.000000e+00> : vector<2x128xf32>
    %79 = tpu.matmul %78, %76, %cst_60 {dimension_numbers = #tpu.dot_dimension_numbers<[1], [0], [0], [1], [0, 0, 1, 1], [], []>} : vector<2x64xf32>, vector<64x128xf32>, vector<2x128xf32> -> vector<2x128xf32>
    %c1_61 = arith.constant 1 : index
    %c0_62 = arith.constant 0 : index
    %c0_63 = arith.constant 0 : index
    %80 = vector.load %arg9[%c1_61, %c0_62, %c0_63] : memref<4x2x1xf32, #tpu.memory_space<vmem>>, vector<1x2x1xf32>
    %81 = vector.shape_cast %80 : vector<1x2x1xf32> to vector<2x1xf32>
    %82 = vector.broadcast %81 : vector<2x1xf32> to vector<2x128xf32>
    %83 = arith.addf %79, %82 : vector<2x128xf32>
    %84 = math.tanh %83 : vector<2x128xf32>
    %c1_64 = arith.constant 1 : index
    %85 = memref.load %arg1[%c1_64] : memref<4xf32, #tpu.memory_space<smem>>
    %86 = vector.extract_strided_slice %84 {offsets = [0, 0], sizes = [1, 128], strides = [1, 1]} : vector<2x128xf32> to vector<1x128xf32>
    %87 = vector.broadcast %85 : f32 to vector<1x128xf32>
    %88 = arith.mulf %87, %86 : vector<1x128xf32>
    %89 = vector.extract_strided_slice %84 {offsets = [1, 0], sizes = [1, 128], strides = [1, 1]} : vector<2x128xf32> to vector<1x128xf32>
    %90 = math.exp %88 : vector<1x128xf32>
    %91 = arith.mulf %90, %0 : vector<1x128xf32>
    %92 = arith.addf %91, %89 : vector<1x128xf32>
    %c1_65 = arith.constant 1 : index
    %c0_66 = arith.constant 0 : index
    %93 = vector.load %arg12[%c1_65, %c0_66] : memref<4x128xf32, #tpu.memory_space<vmem>>, vector<1x128xf32>
    tpu.vector_store %arg12[%c1_65, %c0_66], %88 {strides = array<i32>} : memref<4x128xf32, #tpu.memory_space<vmem>>, vector<1x128xf32>,
    %c2 = arith.constant 2 : index
    %c0_67 = arith.constant 0 : index
    %c0_68 = arith.constant 0 : index
    %94 = vector.load %arg2[%c2, %c0_67, %c0_68] : memref<4x64x1xf32, #tpu.memory_space<vmem>>, vector<1x64x1xf32>
    %95 = vector.shape_cast %94 : vector<1x64x1xf32> to vector<64x1xf32>
    %96 = vector.broadcast %95 : vector<64x1xf32> to vector<64x128xf32>
    %97 = vector.broadcast %92 : vector<1x128xf32> to vector<64x128xf32>
    %98 = arith.mulf %96, %97 : vector<64x128xf32>
    %c2_69 = arith.constant 2 : index
    %c0_70 = arith.constant 0 : index
    %c0_71 = arith.constant 0 : index
    %99 = vector.load %arg3[%c2_69, %c0_70, %c0_71] : memref<4x64x1xf32, #tpu.memory_space<vmem>>, vector<1x64x1xf32>
    %100 = vector.shape_cast %99 : vector<1x64x1xf32> to vector<64x1xf32>
    %101 = vector.broadcast %100 : vector<64x1xf32> to vector<64x128xf32>
    %102 = arith.addf %98, %101 : vector<64x128xf32>
    %cst_72 = arith.constant 0.000000e+00 : f32
    %103 = vector.broadcast %cst_72 : f32 to vector<64x128xf32>
    %104 = arith.maximumf %102, %103 : vector<64x128xf32>
    %c2_73 = arith.constant 2 : index
    %c0_74 = arith.constant 0 : index
    %c0_75 = arith.constant 0 : index
    %105 = vector.load %arg4[%c2_73, %c0_74, %c0_75] : memref<4x64x64xf32, #tpu.memory_space<vmem>>, vector<1x64x64xf32>
    %106 = vector.shape_cast %105 : vector<1x64x64xf32> to vector<64x64xf32>
    %cst_76 = arith.constant dense<0.000000e+00> : vector<64x128xf32>
    %107 = tpu.matmul %106, %104, %cst_76 {dimension_numbers = #tpu.dot_dimension_numbers<[1], [0], [0], [1], [0, 0, 1, 1], [], []>} : vector<64x64xf32>, vector<64x128xf32>, vector<64x128xf32> -> vector<64x128xf32>
    %c2_77 = arith.constant 2 : index
    %c0_78 = arith.constant 0 : index
    %c0_79 = arith.constant 0 : index
    %108 = vector.load %arg5[%c2_77, %c0_78, %c0_79] : memref<4x64x1xf32, #tpu.memory_space<vmem>>, vector<1x64x1xf32>
    %109 = vector.shape_cast %108 : vector<1x64x1xf32> to vector<64x1xf32>
    %110 = vector.broadcast %109 : vector<64x1xf32> to vector<64x128xf32>
    %111 = arith.addf %107, %110 : vector<64x128xf32>
    %cst_80 = arith.constant 0.000000e+00 : f32
    %112 = vector.broadcast %cst_80 : f32 to vector<64x128xf32>
    %113 = arith.maximumf %111, %112 : vector<64x128xf32>
    %c2_81 = arith.constant 2 : index
    %c0_82 = arith.constant 0 : index
    %c0_83 = arith.constant 0 : index
    %114 = vector.load %arg6[%c2_81, %c0_82, %c0_83] : memref<4x64x64xf32, #tpu.memory_space<vmem>>, vector<1x64x64xf32>
    %115 = vector.shape_cast %114 : vector<1x64x64xf32> to vector<64x64xf32>
    %cst_84 = arith.constant dense<0.000000e+00> : vector<64x128xf32>
    %116 = tpu.matmul %115, %113, %cst_84 {dimension_numbers = #tpu.dot_dimension_numbers<[1], [0], [0], [1], [0, 0, 1, 1], [], []>} : vector<64x64xf32>, vector<64x128xf32>, vector<64x128xf32> -> vector<64x128xf32>
    %c2_85 = arith.constant 2 : index
    %c0_86 = arith.constant 0 : index
    %c0_87 = arith.constant 0 : index
    %117 = vector.load %arg7[%c2_85, %c0_86, %c0_87] : memref<4x64x1xf32, #tpu.memory_space<vmem>>, vector<1x64x1xf32>
    %118 = vector.shape_cast %117 : vector<1x64x1xf32> to vector<64x1xf32>
    %119 = vector.broadcast %118 : vector<64x1xf32> to vector<64x128xf32>
    %120 = arith.addf %116, %119 : vector<64x128xf32>
    %cst_88 = arith.constant 0.000000e+00 : f32
    %121 = vector.broadcast %cst_88 : f32 to vector<64x128xf32>
    %122 = arith.maximumf %120, %121 : vector<64x128xf32>
    %c2_89 = arith.constant 2 : index
    %c0_90 = arith.constant 0 : index
    %c0_91 = arith.constant 0 : index
    %123 = vector.load %arg8[%c2_89, %c0_90, %c0_91] : memref<4x2x64xf32, #tpu.memory_space<vmem>>, vector<1x2x64xf32>
    %124 = vector.shape_cast %123 : vector<1x2x64xf32> to vector<2x64xf32>
    %cst_92 = arith.constant dense<0.000000e+00> : vector<2x128xf32>
    %125 = tpu.matmul %124, %122, %cst_92 {dimension_numbers = #tpu.dot_dimension_numbers<[1], [0], [0], [1], [0, 0, 1, 1], [], []>} : vector<2x64xf32>, vector<64x128xf32>, vector<2x128xf32> -> vector<2x128xf32>
    %c2_93 = arith.constant 2 : index
    %c0_94 = arith.constant 0 : index
    %c0_95 = arith.constant 0 : index
    %126 = vector.load %arg9[%c2_93, %c0_94, %c0_95] : memref<4x2x1xf32, #tpu.memory_space<vmem>>, vector<1x2x1xf32>
    %127 = vector.shape_cast %126 : vector<1x2x1xf32> to vector<2x1xf32>
    %128 = vector.broadcast %127 : vector<2x1xf32> to vector<2x128xf32>
    %129 = arith.addf %125, %128 : vector<2x128xf32>
    %130 = math.tanh %129 : vector<2x128xf32>
    %c2_96 = arith.constant 2 : index
    %131 = memref.load %arg1[%c2_96] : memref<4xf32, #tpu.memory_space<smem>>
    %132 = vector.extract_strided_slice %130 {offsets = [0, 0], sizes = [1, 128], strides = [1, 1]} : vector<2x128xf32> to vector<1x128xf32>
    %133 = vector.broadcast %131 : f32 to vector<1x128xf32>
    %134 = arith.mulf %133, %132 : vector<1x128xf32>
    %135 = vector.extract_strided_slice %130 {offsets = [1, 0], sizes = [1, 128], strides = [1, 1]} : vector<2x128xf32> to vector<1x128xf32>
    %136 = math.exp %134 : vector<1x128xf32>
    %137 = arith.mulf %136, %46 : vector<1x128xf32>
    %138 = arith.addf %137, %135 : vector<1x128xf32>
    %c2_97 = arith.constant 2 : index
    %c0_98 = arith.constant 0 : index
    %139 = vector.load %arg12[%c2_97, %c0_98] : memref<4x128xf32, #tpu.memory_space<vmem>>, vector<1x128xf32>
    tpu.vector_store %arg12[%c2_97, %c0_98], %134 {strides = array<i32>} : memref<4x128xf32, #tpu.memory_space<vmem>>, vector<1x128xf32>,
    %c3 = arith.constant 3 : index
    %c0_99 = arith.constant 0 : index
    %c0_100 = arith.constant 0 : index
    %140 = vector.load %arg2[%c3, %c0_99, %c0_100] : memref<4x64x1xf32, #tpu.memory_space<vmem>>, vector<1x64x1xf32>
    %141 = vector.shape_cast %140 : vector<1x64x1xf32> to vector<64x1xf32>
    %142 = vector.broadcast %141 : vector<64x1xf32> to vector<64x128xf32>
    %143 = vector.broadcast %138 : vector<1x128xf32> to vector<64x128xf32>
    %144 = arith.mulf %142, %143 : vector<64x128xf32>
    %c3_101 = arith.constant 3 : index
    %c0_102 = arith.constant 0 : index
    %c0_103 = arith.constant 0 : index
    %145 = vector.load %arg3[%c3_101, %c0_102, %c0_103] : memref<4x64x1xf32, #tpu.memory_space<vmem>>, vector<1x64x1xf32>
    %146 = vector.shape_cast %145 : vector<1x64x1xf32> to vector<64x1xf32>
    %147 = vector.broadcast %146 : vector<64x1xf32> to vector<64x128xf32>
    %148 = arith.addf %144, %147 : vector<64x128xf32>
    %cst_104 = arith.constant 0.000000e+00 : f32
    %149 = vector.broadcast %cst_104 : f32 to vector<64x128xf32>
    %150 = arith.maximumf %148, %149 : vector<64x128xf32>
    %c3_105 = arith.constant 3 : index
    %c0_106 = arith.constant 0 : index
    %c0_107 = arith.constant 0 : index
    %151 = vector.load %arg4[%c3_105, %c0_106, %c0_107] : memref<4x64x64xf32, #tpu.memory_space<vmem>>, vector<1x64x64xf32>
    %152 = vector.shape_cast %151 : vector<1x64x64xf32> to vector<64x64xf32>
    %cst_108 = arith.constant dense<0.000000e+00> : vector<64x128xf32>
    %153 = tpu.matmul %152, %150, %cst_108 {dimension_numbers = #tpu.dot_dimension_numbers<[1], [0], [0], [1], [0, 0, 1, 1], [], []>} : vector<64x64xf32>, vector<64x128xf32>, vector<64x128xf32> -> vector<64x128xf32>
    %c3_109 = arith.constant 3 : index
    %c0_110 = arith.constant 0 : index
    %c0_111 = arith.constant 0 : index
    %154 = vector.load %arg5[%c3_109, %c0_110, %c0_111] : memref<4x64x1xf32, #tpu.memory_space<vmem>>, vector<1x64x1xf32>
    %155 = vector.shape_cast %154 : vector<1x64x1xf32> to vector<64x1xf32>
    %156 = vector.broadcast %155 : vector<64x1xf32> to vector<64x128xf32>
    %157 = arith.addf %153, %156 : vector<64x128xf32>
    %cst_112 = arith.constant 0.000000e+00 : f32
    %158 = vector.broadcast %cst_112 : f32 to vector<64x128xf32>
    %159 = arith.maximumf %157, %158 : vector<64x128xf32>
    %c3_113 = arith.constant 3 : index
    %c0_114 = arith.constant 0 : index
    %c0_115 = arith.constant 0 : index
    %160 = vector.load %arg6[%c3_113, %c0_114, %c0_115] : memref<4x64x64xf32, #tpu.memory_space<vmem>>, vector<1x64x64xf32>
    %161 = vector.shape_cast %160 : vector<1x64x64xf32> to vector<64x64xf32>
    %cst_116 = arith.constant dense<0.000000e+00> : vector<64x128xf32>
    %162 = tpu.matmul %161, %159, %cst_116 {dimension_numbers = #tpu.dot_dimension_numbers<[1], [0], [0], [1], [0, 0, 1, 1], [], []>} : vector<64x64xf32>, vector<64x128xf32>, vector<64x128xf32> -> vector<64x128xf32>
    %c3_117 = arith.constant 3 : index
    %c0_118 = arith.constant 0 : index
    %c0_119 = arith.constant 0 : index
    %163 = vector.load %arg7[%c3_117, %c0_118, %c0_119] : memref<4x64x1xf32, #tpu.memory_space<vmem>>, vector<1x64x1xf32>
    %164 = vector.shape_cast %163 : vector<1x64x1xf32> to vector<64x1xf32>
    %165 = vector.broadcast %164 : vector<64x1xf32> to vector<64x128xf32>
    %166 = arith.addf %162, %165 : vector<64x128xf32>
    %cst_120 = arith.constant 0.000000e+00 : f32
    %167 = vector.broadcast %cst_120 : f32 to vector<64x128xf32>
    %168 = arith.maximumf %166, %167 : vector<64x128xf32>
    %c3_121 = arith.constant 3 : index
    %c0_122 = arith.constant 0 : index
    %c0_123 = arith.constant 0 : index
    %169 = vector.load %arg8[%c3_121, %c0_122, %c0_123] : memref<4x2x64xf32, #tpu.memory_space<vmem>>, vector<1x2x64xf32>
    %170 = vector.shape_cast %169 : vector<1x2x64xf32> to vector<2x64xf32>
    %cst_124 = arith.constant dense<0.000000e+00> : vector<2x128xf32>
    %171 = tpu.matmul %170, %168, %cst_124 {dimension_numbers = #tpu.dot_dimension_numbers<[1], [0], [0], [1], [0, 0, 1, 1], [], []>} : vector<2x64xf32>, vector<64x128xf32>, vector<2x128xf32> -> vector<2x128xf32>
    %c3_125 = arith.constant 3 : index
    %c0_126 = arith.constant 0 : index
    %c0_127 = arith.constant 0 : index
    %172 = vector.load %arg9[%c3_125, %c0_126, %c0_127] : memref<4x2x1xf32, #tpu.memory_space<vmem>>, vector<1x2x1xf32>
    %173 = vector.shape_cast %172 : vector<1x2x1xf32> to vector<2x1xf32>
    %174 = vector.broadcast %173 : vector<2x1xf32> to vector<2x128xf32>
    %175 = arith.addf %171, %174 : vector<2x128xf32>
    %176 = math.tanh %175 : vector<2x128xf32>
    %c3_128 = arith.constant 3 : index
    %177 = memref.load %arg1[%c3_128] : memref<4xf32, #tpu.memory_space<smem>>
    %178 = vector.extract_strided_slice %176 {offsets = [0, 0], sizes = [1, 128], strides = [1, 1]} : vector<2x128xf32> to vector<1x128xf32>
    %179 = vector.broadcast %177 : f32 to vector<1x128xf32>
    %180 = arith.mulf %179, %178 : vector<1x128xf32>
    %181 = vector.extract_strided_slice %176 {offsets = [1, 0], sizes = [1, 128], strides = [1, 1]} : vector<2x128xf32> to vector<1x128xf32>
    %182 = math.exp %180 : vector<1x128xf32>
    %183 = arith.mulf %182, %92 : vector<1x128xf32>
    %184 = arith.addf %183, %181 : vector<1x128xf32>
    %c3_129 = arith.constant 3 : index
    %c0_130 = arith.constant 0 : index
    %185 = vector.load %arg12[%c3_129, %c0_130] : memref<4x128xf32, #tpu.memory_space<vmem>>, vector<1x128xf32>
    tpu.vector_store %arg12[%c3_129, %c0_130], %180 {strides = array<i32>} : memref<4x128xf32, #tpu.memory_space<vmem>>, vector<1x128xf32>,
    %c0_131 = arith.constant 0 : index
    %c0_132 = arith.constant 0 : index
    %186 = vector.load %arg11[%c0_131, %c0_132] : memref<2x128xf32, #tpu.memory_space<vmem>>, vector<1x128xf32>
    tpu.vector_store %arg11[%c0_131, %c0_132], %184 {strides = array<i32>} : memref<2x128xf32, #tpu.memory_space<vmem>>, vector<1x128xf32>,
    %c1_133 = arith.constant 1 : index
    %c0_134 = arith.constant 0 : index
    %187 = vector.load %arg11[%c1_133, %c0_134] : memref<2x128xf32, #tpu.memory_space<vmem>>, vector<1x128xf32>
    tpu.vector_store %arg11[%c1_133, %c0_134], %138 {strides = array<i32>} : memref<2x128xf32, #tpu.memory_space<vmem>>, vector<1x128xf32>,
    return
  }
  func.func @transform_0(%arg0: i32) -> i32 {
    %c0_i32 = arith.constant 0 : i32
    %c0_i32_0 = arith.constant 0 : i32
    return %c0_i32 : i32
  }
  func.func @transform_1(%arg0: i32) -> (i32, i32, i32) {
    %c0_i32 = arith.constant 0 : i32
    %c0_i32_0 = arith.constant 0 : i32
    %c0_i32_1 = arith.constant 0 : i32
    %c0_i32_2 = arith.constant 0 : i32
    return %c0_i32, %c0_i32_0, %c0_i32_1 : i32, i32, i32
  }
  func.func @transform_2(%arg0: i32) -> (i32, i32, i32) {
    %c0_i32 = arith.constant 0 : i32
    %c0_i32_0 = arith.constant 0 : i32
    %c0_i32_1 = arith.constant 0 : i32
    %c0_i32_2 = arith.constant 0 : i32
    return %c0_i32, %c0_i32_0, %c0_i32_1 : i32, i32, i32
  }
  func.func @transform_3(%arg0: i32) -> (i32, i32, i32) {
    %c0_i32 = arith.constant 0 : i32
    %c0_i32_0 = arith.constant 0 : i32
    %c0_i32_1 = arith.constant 0 : i32
    %c0_i32_2 = arith.constant 0 : i32
    return %c0_i32, %c0_i32_0, %c0_i32_1 : i32, i32, i32
  }
  func.func @transform_4(%arg0: i32) -> (i32, i32, i32) {
    %c0_i32 = arith.constant 0 : i32
    %c0_i32_0 = arith.constant 0 : i32
    %c0_i32_1 = arith.constant 0 : i32
    %c0_i32_2 = arith.constant 0 : i32
    return %c0_i32, %c0_i32_0, %c0_i32_1 : i32, i32, i32
  }
  func.func @transform_5(%arg0: i32) -> (i32, i32, i32) {
    %c0_i32 = arith.constant 0 : i32
    %c0_i32_0 = arith.constant 0 : i32
    %c0_i32_1 = arith.constant 0 : i32
    %c0_i32_2 = arith.constant 0 : i32
    return %c0_i32, %c0_i32_0, %c0_i32_1 : i32, i32, i32
  }
  func.func @transform_6(%arg0: i32) -> (i32, i32, i32) {
    %c0_i32 = arith.constant 0 : i32
    %c0_i32_0 = arith.constant 0 : i32
    %c0_i32_1 = arith.constant 0 : i32
    %c0_i32_2 = arith.constant 0 : i32
    return %c0_i32, %c0_i32_0, %c0_i32_1 : i32, i32, i32
  }
  func.func @transform_7(%arg0: i32) -> (i32, i32, i32) {
    %c0_i32 = arith.constant 0 : i32
    %c0_i32_0 = arith.constant 0 : i32
    %c0_i32_1 = arith.constant 0 : i32
    %c0_i32_2 = arith.constant 0 : i32
    return %c0_i32, %c0_i32_0, %c0_i32_1 : i32, i32, i32
  }
  func.func @transform_8(%arg0: i32) -> (i32, i32, i32) {
    %c0_i32 = arith.constant 0 : i32
    %c0_i32_0 = arith.constant 0 : i32
    %c0_i32_1 = arith.constant 0 : i32
    %c0_i32_2 = arith.constant 0 : i32
    return %c0_i32, %c0_i32_0, %c0_i32_1 : i32, i32, i32
  }
  func.func @transform_9(%arg0: i32) -> (i32, i32) {
    %c0_i32 = arith.constant 0 : i32
    %c0_i32_0 = arith.constant 0 : i32
    return %c0_i32, %arg0 : i32, i32
  }
  func.func @transform_10(%arg0: i32) -> (i32, i32) {
    %c0_i32 = arith.constant 0 : i32
    %c0_i32_0 = arith.constant 0 : i32
    return %c0_i32, %arg0 : i32, i32
  }
  func.func @transform_11(%arg0: i32) -> (i32, i32) {
    %c0_i32 = arith.constant 0 : i32
    %c0_i32_0 = arith.constant 0 : i32
    return %c0_i32, %arg0 : i32, i32
  }
}

</mosaic_0001>

<llo_original>
// kernel: tpu_custom_call.1
$region0: #{tpu_custom_call.1}
  #allocation0 [shape = 'u32[]', space=smem, size = 0x4, offset = 0x4, fixed_abs, tag = 'smem constant byte address 0x4 - core index']
  #allocation1 [shape = 'u32[144,128]{1,0:T(1,128)}', space=vmem, size = 0x12000, scoped, tag = 'internal scratch']
  %s0 = inlined_call_operand.vmem [shape: f32[4], index: 0, kind: input, shape index: {}]
  %s1 = inlined_call_operand.vmem [shape: f32[4,64,1], index: 1, kind: input, shape index: {}]
  %s2 = inlined_call_operand.vmem [shape: f32[4,64,1], index: 2, kind: input, shape index: {}]
  %s3 = inlined_call_operand.vmem [shape: f32[4,64,64], index: 3, kind: input, shape index: {}]
  %s4 = inlined_call_operand.vmem [shape: f32[4,64,1], index: 4, kind: input, shape index: {}]
  %s5 = inlined_call_operand.vmem [shape: f32[4,64,64], index: 5, kind: input, shape index: {}]
  %s6 = inlined_call_operand.vmem [shape: f32[4,64,1], index: 6, kind: input, shape index: {}]
  %s7 = inlined_call_operand.vmem [shape: f32[4,2,64], index: 7, kind: input, shape index: {}]
  %s8 = inlined_call_operand.vmem [shape: f32[4,2,1], index: 8, kind: input, shape index: {}]
  %s9 = inlined_call_operand.vmem [shape: f32[2,256], index: 9, kind: input, shape index: {}]
  %s10 = inlined_call_operand.hbm [shape: f32[2,256], index: 10, kind: output, shape index: {0}]
  %s11 = inlined_call_operand.hbm [shape: f32[4,256], index: 11, kind: output, shape index: {1}]
  %12 = xla_tuple %s10, %s11
  %s13 = sld [smem:[#allocation0]]
  $region85: #{tpu_custom_call.1} parent=0
    _
  %s15 = ssub.s32 1, %s13
  %s16 = scalar_select 0, %s15, %s13
  $region1: #{tpu_custom_call.1} parent=0
    #allocation2 [shape = 'u8[512]{0}', space=smem, size = 0x200, scoped, tag = 'input window, operand 0, single buffered']
    #allocation3 [shape = 's32[2]{0}', space=sflag, size = 0x8, scoped, tag = 'scoped memory for tpu_custom_call.1']
    #allocation4 [shape = 's32[2]{0}', space=sflag, size = 0x8, scoped, tag = 'scoped memory for tpu_custom_call.1']
    #allocation5 [shape = 'u8[2048]{0}', space=vmem, size = 0x800, scoped, tag = 'output window, operand 0']
    #allocation6 [shape = 'u8[4096]{0}', space=vmem, size = 0x1000, scoped, tag = 'output window, operand 1']
    #allocation7 [shape = 's32[2]{0}', space=sflag, size = 0x8, scoped, tag = 'scoped memory for tpu_custom_call.1']
    %17 = vsyncpa [#allocation4], 0
    %18 = vsyncpa [#allocation3], 0
    %s19 = scalar_lea.sflag [#allocation3], 1
    %20 = vsyncpa %s19, 0
    %21 = vsyncpa [#allocation7], 0
    %s22 = scalar_lea.sflag [#allocation7], 1
    %23 = vsyncpa %s22, 0
    loop: start=0, step=1, limit=4
    $region2: #{tpu_custom_call.1} parent=1 // loop_pre_header
      _
    $region3: #{tpu_custom_call.1} parent=1 // loop_header
      %s25 = sphi 0, %s29
      %p26 = scmp.ge.s32.totalorder %s25, 4
      %s33 = sphi 0, %s33
      %s35 = sphi 0, %s33
      %s36 = sphi 0, %s35
      %s50 = sphi 0, %s36
      %s54 = sphi 0, %s54
      %s56 = sphi 0, %s54
      %s57 = sphi 0, %s56
      %s71 = sphi 0, %s57
      %s75 = sphi 0, %s75
      %s77 = sphi 0, %s75
      %s78 = sphi 0, %s77
      %s92 = sphi 0, %s78
      %s96 = sphi 0, %s96
      %s98 = sphi 0, %s96
      %s99 = sphi 0, %s98
      %s113 = sphi 0, %s99
      %s117 = sphi 0, %s117
      %s119 = sphi 0, %s117
      %s120 = sphi 0, %s119
      %s134 = sphi 0, %s120
      %s138 = sphi 0, %s138
      %s140 = sphi 0, %s138
      %s141 = sphi 0, %s140
      %s155 = sphi 0, %s141
      %s159 = sphi 0, %s159
      %s161 = sphi 0, %s159
      %s162 = sphi 0, %s161
      %s176 = sphi 0, %s162
      %s180 = sphi 0, %s180
      %s182 = sphi 0, %s180
      %s183 = sphi 0, %s182
      %s197 = sphi 0, %s183
      %s201 = sphi 0, %s201
      %s203 = sphi 0, %s201
      %s204 = sphi 0, %s203
      %s218 = sphi 0, %s204
      %s224 = sphi 0, %s226
      %s227 = sphi 0, %s224
      %s228 = sphi 0, %s227
      %s244 = sphi 0, %s228
      %s250 = sphi 0, %s252
      %s253 = sphi 0, %s250
      %s254 = sphi 0, %s253
      %s270 = sphi 0, %s254
      %s276 = sphi 0, %s278
      %s279 = sphi 0, %s276
      %s280 = sphi 0, %s279
      %s296 = sphi 0, %s280
    $region4: #{tpu_custom_call.1} parent=1 // loop_header_branch
      %28 = sbr.rel (%p26) target = $region8
    $region5: #{tpu_custom_call.1} parent=1 // loop_body
      %s30 = ssub.s32 %s25, 1
      %s31 = ssub.s32 %s25, 2
      %s32 = sadd.s32 %s25, 1
      %s34 = sadd.s32 %s33, 1
      %p37 = scmp.eq.s32.totalorder %s25, 1
      %p38 = scmp.ne.s32.totalorder %s33, %s35
      %p39 = scmp.eq.s32.totalorder %s25, 0
      %p40 = por %p38, %p39
      %p41 = scmp.ne.s32.totalorder %s33, %s35
      %p42 = scmp.eq.s32.totalorder %s30, 1
      %p43 = por %p41, %p42
      %p44 = scmp.ne.s32.totalorder %s35, %s36
      %p45 = scmp.eq.s32.totalorder %s30, 0
      %p46 = por %p44, %p45
      %p47 = scmp.ne.s32.totalorder %s35, %s36
      %p48 = scmp.eq.s32.totalorder %s31, 1
      %p49 = por %p47, %p48
      %p51 = scmp.ne.s32.totalorder %s36, %s50
      %p52 = scmp.eq.s32.totalorder %s31, 0
      %p53 = por %p51, %p52
      %s55 = sadd.s32 %s54, 1
      %p58 = scmp.eq.s32.totalorder %s25, 1
      %p59 = scmp.ne.s32.totalorder %s54, %s56
      %p60 = scmp.eq.s32.totalorder %s25, 0
      %p61 = por %p59, %p60
      %p62 = scmp.ne.s32.totalorder %s54, %s56
      %p63 = scmp.eq.s32.totalorder %s30, 1
      %p64 = por %p62, %p63
      %p65 = scmp.ne.s32.totalorder %s56, %s57
      %p66 = scmp.eq.s32.totalorder %s30, 0
      %p67 = por %p65, %p66
      %p68 = scmp.ne.s32.totalorder %s56, %s57
      %p69 = scmp.eq.s32.totalorder %s31, 1
      %p70 = por %p68, %p69
      %p72 = scmp.ne.s32.totalorder %s57, %s71
      %p73 = scmp.eq.s32.totalorder %s31, 0
      %p74 = por %p72, %p73
      %s76 = sadd.s32 %s75, 1
      %p79 = scmp.eq.s32.totalorder %s25, 1
      %p80 = scmp.ne.s32.totalorder %s75, %s77
      %p81 = scmp.eq.s32.totalorder %s25, 0
      %p82 = por %p80, %p81
      %p83 = scmp.ne.s32.totalorder %s75, %s77
      %p84 = scmp.eq.s32.totalorder %s30, 1
      %p85 = por %p83, %p84
      %p86 = scmp.ne.s32.totalorder %s77, %s78
      %p87 = scmp.eq.s32.totalorder %s30, 0
      %p88 = por %p86, %p87
      %p89 = scmp.ne.s32.totalorder %s77, %s78
      %p90 = scmp.eq.s32.totalorder %s31, 1
      %p91 = por %p89, %p90
      %p93 = scmp.ne.s32.totalorder %s78, %s92
      %p94 = scmp.eq.s32.totalorder %s31, 0
      %p95 = por %p93, %p94
      %s97 = sadd.s32 %s96, 1
      %p100 = scmp.eq.s32.totalorder %s25, 1
      %p101 = scmp.ne.s32.totalorder %s96, %s98
      %p102 = scmp.eq.s32.totalorder %s25, 0
      %p103 = por %p101, %p102
      %p104 = scmp.ne.s32.totalorder %s96, %s98
      %p105 = scmp.eq.s32.totalorder %s30, 1
      %p106 = por %p104, %p105
      %p107 = scmp.ne.s32.totalorder %s98, %s99
      %p108 = scmp.eq.s32.totalorder %s30, 0
      %p109 = por %p107, %p108
      %p110 = scmp.ne.s32.totalorder %s98, %s99
      %p111 = scmp.eq.s32.totalorder %s31, 1
      %p112 = por %p110, %p111
      %p114 = scmp.ne.s32.totalorder %s99, %s113
      %p115 = scmp.eq.s32.totalorder %s31, 0
      %p116 = por %p114, %p115
      %s118 = sadd.s32 %s117, 1
      %p121 = scmp.eq.s32.totalorder %s25, 1
      %p122 = scmp.ne.s32.totalorder %s117, %s119
      %p123 = scmp.eq.s32.totalorder %s25, 0
      %p124 = por %p122, %p123
      %p125 = scmp.ne.s32.totalorder %s117, %s119
      %p126 = scmp.eq.s32.totalorder %s30, 1
      %p127 = por %p125, %p126
      %p128 = scmp.ne.s32.totalorder %s119, %s120
      %p129 = scmp.eq.s32.totalorder %s30, 0
      %p130 = por %p128, %p129
      %p131 = scmp.ne.s32.totalorder %s119, %s120
      %p132 = scmp.eq.s32.totalorder %s31, 1
      %p133 = por %p131, %p132
      %p135 = scmp.ne.s32.totalorder %s120, %s134
      %p136 = scmp.eq.s32.totalorder %s31, 0
      %p137 = por %p135, %p136
      %s139 = sadd.s32 %s138, 1
      %p142 = scmp.eq.s32.totalorder %s25, 1
      %p143 = scmp.ne.s32.totalorder %s138, %s140
      %p144 = scmp.eq.s32.totalorder %s25, 0
      %p145 = por %p143, %p144
      %p146 = scmp.ne.s32.totalorder %s138, %s140
      %p147 = scmp.eq.s32.totalorder %s30, 1
      %p148 = por %p146, %p147
      %p149 = scmp.ne.s32.totalorder %s140, %s141
      %p150 = scmp.eq.s32.totalorder %s30, 0
      %p151 = por %p149, %p150
      %p152 = scmp.ne.s32.totalorder %s140, %s141
      %p153 = scmp.eq.s32.totalorder %s31, 1
      %p154 = por %p152, %p153
      %p156 = scmp.ne.s32.totalorder %s141, %s155
      %p157 = scmp.eq.s32.totalorder %s31, 0
      %p158 = por %p156, %p157
      %s160 = sadd.s32 %s159, 1
      %p163 = scmp.eq.s32.totalorder %s25, 1
      %p164 = scmp.ne.s32.totalorder %s159, %s161
      %p165 = scmp.eq.s32.totalorder %s25, 0
      %p166 = por %p164, %p165
      %p167 = scmp.ne.s32.totalorder %s159, %s161
      %p168 = scmp.eq.s32.totalorder %s30, 1
      %p169 = por %p167, %p168
      %p170 = scmp.ne.s32.totalorder %s161, %s162
      %p171 = scmp.eq.s32.totalorder %s30, 0
      %p172 = por %p170, %p171
      %p173 = scmp.ne.s32.totalorder %s161, %s162
      %p174 = scmp.eq.s32.totalorder %s31, 1
      %p175 = por %p173, %p174
      %p177 = scmp.ne.s32.totalorder %s162, %s176
      %p178 = scmp.eq.s32.totalorder %s31, 0
      %p179 = por %p177, %p178
      %s181 = sadd.s32 %s180, 1
      %p184 = scmp.eq.s32.totalorder %s25, 1
      %p185 = scmp.ne.s32.totalorder %s180, %s182
      %p186 = scmp.eq.s32.totalorder %s25, 0
      %p187 = por %p185, %p186
      %p188 = scmp.ne.s32.totalorder %s180, %s182
      %p189 = scmp.eq.s32.totalorder %s30, 1
      %p190 = por %p188, %p189
      %p191 = scmp.ne.s32.totalorder %s182, %s183
      %p192 = scmp.eq.s32.totalorder %s30, 0
      %p193 = por %p191, %p192
      %p194 = scmp.ne.s32.totalorder %s182, %s183
      %p195 = scmp.eq.s32.totalorder %s31, 1
      %p196 = por %p194, %p195
      %p198 = scmp.ne.s32.totalorder %s183, %s197
      %p199 = scmp.eq.s32.totalorder %s31, 0
      %p200 = por %p198, %p199
      %s202 = sadd.s32 %s201, 1
      %p205 = scmp.eq.s32.totalorder %s25, 1
      %p206 = scmp.ne.s32.totalorder %s201, %s203
      %p207 = scmp.eq.s32.totalorder %s25, 0
      %p208 = por %p206, %p207
      %p209 = scmp.ne.s32.totalorder %s201, %s203
      %p210 = scmp.eq.s32.totalorder %s30, 1
      %p211 = por %p209, %p210
      %p212 = scmp.ne.s32.totalorder %s203, %s204
      %p213 = scmp.eq.s32.totalorder %s30, 0
      %p214 = por %p212, %p213
      %p215 = scmp.ne.s32.totalorder %s203, %s204
      %p216 = scmp.eq.s32.totalorder %s31, 1
      %p217 = por %p215, %p216
      %p219 = scmp.ne.s32.totalorder %s204, %s218
      %p220 = scmp.eq.s32.totalorder %s31, 0
      %p221 = por %p219, %p220
      %s222 = ssub.s32 %s25, %s32
      %p223 = scmp.eq.s32.totalorder %s222, 0
      %s225 = sadd.s32 %s224, 1
      %s226 = scalar_select %p223, %s224, %s225
      %p229 = pneg %p223
      %p230 = scmp.eq.s32.totalorder %s25, 1
      %p231 = por %p229, %p230
      %p232 = scmp.ne.s32.totalorder %s224, %s227
      %p233 = scmp.eq.s32.totalorder %s25, 0
      %p234 = por %p232, %p233
      %p235 = scmp.ne.s32.totalorder %s224, %s227
      %p236 = scmp.eq.s32.totalorder %s30, 1
      %p237 = por %p235, %p236
      %p238 = scmp.ne.s32.totalorder %s227, %s228
      %p239 = scmp.eq.s32.totalorder %s30, 0
      %p240 = por %p238, %p239
      %p241 = scmp.ne.s32.totalorder %s227, %s228
      %p242 = scmp.eq.s32.totalorder %s31, 1
      %p243 = por %p241, %p242
      %p245 = scmp.ne.s32.totalorder %s228, %s244
      %p246 = scmp.eq.s32.totalorder %s31, 0
      %p247 = por %p245, %p246
      %s248 = ssub.s32 %s25, %s32
      %p249 = scmp.eq.s32.totalorder %s248, 0
      %s251 = sadd.s32 %s250, 1
      %s252 = scalar_select %p249, %s250, %s251
      %p255 = pneg %p249
      %p256 = scmp.eq.s32.totalorder %s25, 1
      %p257 = por %p255, %p256
      %p258 = scmp.ne.s32.totalorder %s250, %s253
      %p259 = scmp.eq.s32.totalorder %s25, 0
      %p260 = por %p258, %p259
      %p261 = scmp.ne.s32.totalorder %s250, %s253
      %p262 = scmp.eq.s32.totalorder %s30, 1
      %p263 = por %p261, %p262
      %p264 = scmp.ne.s32.totalorder %s253, %s254
      %p265 = scmp.eq.s32.totalorder %s30, 0
      %p266 = por %p264, %p265
      %p267 = scmp.ne.s32.totalorder %s253, %s254
      %p268 = scmp.eq.s32.totalorder %s31, 1
      %p269 = por %p267, %p268
      %p271 = scmp.ne.s32.totalorder %s254, %s270
      %p272 = scmp.eq.s32.totalorder %s31, 0
      %p273 = por %p271, %p272
      %s274 = ssub.s32 %s25, %s32
      %p275 = scmp.eq.s32.totalorder %s274, 0
      %s277 = sadd.s32 %s276, 1
      %s278 = scalar_select %p275, %s276, %s277
      %p281 = pneg %p275
      %p282 = scmp.eq.s32.totalorder %s25, 1
      %p283 = por %p281, %p282
      %p284 = scmp.ne.s32.totalorder %s276, %s279
      %p285 = scmp.eq.s32.totalorder %s25, 0
      %p286 = por %p284, %p285
      %p287 = scmp.ne.s32.totalorder %s276, %s279
      %p288 = scmp.eq.s32.totalorder %s30, 1
      %p289 = por %p287, %p288
      %p290 = scmp.ne.s32.totalorder %s279, %s280
      %p291 = scmp.eq.s32.totalorder %s30, 0
      %p292 = por %p290, %p291
      %p293 = scmp.ne.s32.totalorder %s279, %s280
      %p294 = scmp.eq.s32.totalorder %s31, 1
      %p295 = por %p293, %p294
      %p297 = scmp.ne.s32.totalorder %s280, %s296
      %p298 = scmp.eq.s32.totalorder %s31, 0
      %p299 = por %p297, %p298
      %p300 = scmp.le.s32.totalorder 1, %s25
      %p301 = scmp.lt.s32.totalorder %s25, 3
      %p302 = pnand %p300, %p301
      %p303 = pneg %p302
      // Predicated region
      $region9: #{tpu_custom_call.1} parent=5 // pred_check
        _
      $region10: #{tpu_custom_call.1} parent=5 // pred_check_branch
        %305 = sbr.rel (%p302) target = $region12
      $region11: #{tpu_custom_call.1} parent=5 // pred_region
        %s306 = ssub.s32 %s25, 1
        // Predicated region
        $region13: #{tpu_custom_call.1} parent=11 // pred_check
          %p307 = pneg %p46
        $region14: #{tpu_custom_call.1} parent=11 // pred_check_branch
          %309 = sbr.rel (%p307) target = $region16
        $region15: #{tpu_custom_call.1} parent=11 // pred_region
          %s311 = ssub.s32 16, 16
          %312 = vsyncadd [#allocation4], %s311
          %s314 = sshll.u32 %s0, 4
          %s315 = int_to_ptr.vmem [resolvable:$true] %s314
          %317 = dma.vmem_to_smem %s315, 16, [#allocation2], [#allocation4]
        $region16: #{tpu_custom_call.1} parent=11 // pred_fallthru
          _
        // Predicated region
        $region17: #{tpu_custom_call.1} parent=11 // pred_check
          %p318 = pneg %p67
        $region18: #{tpu_custom_call.1} parent=11 // pred_check_branch
          %320 = sbr.rel (%p318) target = $region20
        $region19: #{tpu_custom_call.1} parent=11 // pred_region
          _
        $region20: #{tpu_custom_call.1} parent=11 // pred_fallthru
          _
        // Predicated region
        $region21: #{tpu_custom_call.1} parent=11 // pred_check
          %p321 = pneg %p88
        $region22: #{tpu_custom_call.1} parent=11 // pred_check_branch
          %323 = sbr.rel (%p321) target = $region24
        $region23: #{tpu_custom_call.1} parent=11 // pred_region
          _
        $region24: #{tpu_custom_call.1} parent=11 // pred_fallthru
          _
        // Predicated region
        $region25: #{tpu_custom_call.1} parent=11 // pred_check
          %p324 = pneg %p109
        $region26: #{tpu_custom_call.1} parent=11 // pred_check_branch
          %326 = sbr.rel (%p324) target = $region28
        $region27: #{tpu_custom_call.1} parent=11 // pred_region
          _
        $region28: #{tpu_custom_call.1} parent=11 // pred_fallthru
          _
        // Predicated region
        $region29: #{tpu_custom_call.1} parent=11 // pred_check
          %p327 = pneg %p130
        $region30: #{tpu_custom_call.1} parent=11 // pred_check_branch
          %329 = sbr.rel (%p327) target = $region32
        $region31: #{tpu_custom_call.1} parent=11 // pred_region
          _
        $region32: #{tpu_custom_call.1} parent=11 // pred_fallthru
          _
        // Predicated region
        $region33: #{tpu_custom_call.1} parent=11 // pred_check
          %p330 = pneg %p151
        $region34: #{tpu_custom_call.1} parent=11 // pred_check_branch
          %332 = sbr.rel (%p330) target = $region36
        $region35: #{tpu_custom_call.1} parent=11 // pred_region
          _
        $region36: #{tpu_custom_call.1} parent=11 // pred_fallthru
          _
        // Predicated region
        $region37: #{tpu_custom_call.1} parent=11 // pred_check
          %p333 = pneg %p172
        $region38: #{tpu_custom_call.1} parent=11 // pred_check_branch
          %335 = sbr.rel (%p333) target = $region40
        $region39: #{tpu_custom_call.1} parent=11 // pred_region
          _
        $region40: #{tpu_custom_call.1} parent=11 // pred_fallthru
          _
        // Predicated region
        $region41: #{tpu_custom_call.1} parent=11 // pred_check
          %p336 = pneg %p193
        $region42: #{tpu_custom_call.1} parent=11 // pred_check_branch
          %338 = sbr.rel (%p336) target = $region44
        $region43: #{tpu_custom_call.1} parent=11 // pred_region
          _
        $region44: #{tpu_custom_call.1} parent=11 // pred_fallthru
          _
        // Predicated region
        $region45: #{tpu_custom_call.1} parent=11 // pred_check
          %p339 = pneg %p214
        $region46: #{tpu_custom_call.1} parent=11 // pred_check_branch
          %341 = sbr.rel (%p339) target = $region48
        $region47: #{tpu_custom_call.1} parent=11 // pred_region
          _
        $region48: #{tpu_custom_call.1} parent=11 // pred_fallthru
          _
      $region12: #{tpu_custom_call.1} parent=5 // pred_fallthru
        _
      %p342 = scmp.lt.s32.totalorder %s25, 2
      // Predicated region
      $region49: #{tpu_custom_call.1} parent=5 // pred_check
        %p343 = pneg %p342
      $region50: #{tpu_custom_call.1} parent=5 // pred_check_branch
        %345 = sbr.rel (%p343) target = $region52
      $region51: #{tpu_custom_call.1} parent=5 // pred_region
        // Predicated region
        $region53: #{tpu_custom_call.1} parent=51 // pred_check
          %p346 = pneg %p234
        $region54: #{tpu_custom_call.1} parent=51 // pred_check_branch
          %348 = sbr.rel (%p346) target = $region56
        $region55: #{tpu_custom_call.1} parent=51 // pred_region
          %p349 = scmp.lt.s32.totalorder %s25, 1
          %s350 = scalar_select %p349, %s25, 1
          %s351 = smul.addr %s350, 2
          %s352 = scalar_lea.vmem %s9, %s351
        $region56: #{tpu_custom_call.1} parent=51 // pred_fallthru
          _
      $region52: #{tpu_custom_call.1} parent=5 // pred_fallthru
        _
      %p353 = scmp.le.s32.totalorder 1, %s25
      %p354 = scmp.lt.s32.totalorder %s25, 3
      %p355 = pnand %p353, %p354
      %p356 = pneg %p355
      // Predicated region
      $region57: #{tpu_custom_call.1} parent=5 // pred_check
        _
      $region58: #{tpu_custom_call.1} parent=5 // pred_check_branch
        %358 = sbr.rel (%p355) target = $region60
      $region59: #{tpu_custom_call.1} parent=5 // pred_region
        %s359 = ssub.s32 %s25, 1
        // Predicated region
        $region61: #{tpu_custom_call.1} parent=59 // pred_check
          %p360 = pneg %p46
        $region62: #{tpu_custom_call.1} parent=59 // pred_check_branch
          %362 = sbr.rel (%p360) target = $region64
        $region63: #{tpu_custom_call.1} parent=59 // pred_region
          %363 = dma.done [#allocation4], 16
        $region64: #{tpu_custom_call.1} parent=59 // pred_fallthru
          _
        %364 = sfence
        %p365 = pneg %p46
        %p366 = pneg %p43
        %p367 = pneg %p67
        %p368 = pneg %p64
        %p369 = pneg %p88
        %p370 = pneg %p85
        %p371 = pneg %p109
        %p372 = pneg %p106
        %p373 = pneg %p130
        %p374 = pneg %p127
        %p375 = pneg %p151
        %p376 = pneg %p148
        %p377 = pneg %p172
        %p378 = pneg %p169
        %p379 = pneg %p193
        %p380 = pneg %p190
        %p381 = pneg %p214
        %p382 = pneg %p211
        %p383 = scmp.lt.s32.totalorder %s30, 1
        %s384 = scalar_select %p383, %s30, 1
        %s385 = smul.addr %s384, 2
        %s386 = scalar_lea.vmem %s9, %s385
        %p387 = pneg %p240
        %p388 = pneg %p237
        %p389 = pneg %p266
        %p390 = pneg %p263
        %s391 = sand.u32 %s253, 1
        %s392 = scalar_lea.sflag [#allocation3], %s391
        %s393 = sand.u32 %s253, 1
        %s394 = smul.addr %s393, 2
        %s395 = scalar_lea.vmem [#allocation5], %s394
        %p396 = pneg %p292
        %p397 = pneg %p289
        %s398 = sand.u32 %s279, 1
        %s399 = scalar_lea.sflag [#allocation7], %s398
        %s400 = sand.u32 %s279, 1
        %s401 = smul.addr %s400, 4
        %s402 = scalar_lea.vmem [#allocation6], %s401
        %p403 = scmp.lt.s32.totalorder %s30, 1
        %s404 = scalar_select %p403, %s30, 1
        %s405 = smul.addr %s404, 2
        %s406 = scalar_lea.vmem %s9, %s405
        %v407 = vld [vmem:[%s406] sm:$0x1]
        %v408 = vld [vmem:[%s406 + $0x1] sm:$0x1]
        %v409 = vld [vmem:[%s1] sm:$0xff]
        %v410 = vld [vmem:[%s1 + $0x8] sm:$0xff]
        %v411 = vld [vmem:[%s1 + $0x10] sm:$0xff]
        %v412 = vld [vmem:[%s1 + $0x18] sm:$0xff]
        %v413 = vld [vmem:[%s1 + $0x20] sm:$0xff]
        %v414 = vld [vmem:[%s1 + $0x28] sm:$0xff]
        %v415 = vld [vmem:[%s1 + $0x30] sm:$0xff]
        %v416 = vld [vmem:[%s1 + $0x38] sm:$0xff]
        %418 = vset.pattern.permute.xlu0 0
        %419 = vperm.xlu0 %418, %v409
        %v420 = vpop.permute.xlu0 %419
        %423 = vset.pattern.permute.xlu0 0
        %424 = vperm.xlu0 %423, %v410
        %v425 = vpop.permute.xlu0 %424
        %428 = vset.pattern.permute.xlu0 0
        %429 = vperm.xlu0 %428, %v411
        %v430 = vpop.permute.xlu0 %429
        %433 = vset.pattern.permute.xlu0 0
        %434 = vperm.xlu0 %433, %v412
        %v435 = vpop.permute.xlu0 %434
        %438 = vset.pattern.permute.xlu0 0
        %439 = vperm.xlu0 %438, %v413
        %v440 = vpop.permute.xlu0 %439
        %443 = vset.pattern.permute.xlu0 0
        %444 = vperm.xlu0 %443, %v414
        %v445 = vpop.permute.xlu0 %444
        %448 = vset.pattern.permute.xlu0 0
        %449 = vperm.xlu0 %448, %v415
        %v450 = vpop.permute.xlu0 %449
        %453 = vset.pattern.permute.xlu0 0
        %454 = vperm.xlu0 %453, %v416
        %v455 = vpop.permute.xlu0 %454
        %v457 = vlaneseq
        %v458 = vshrl.u32 %v457, 7
        %v459 = vsub.s32 0, %v458
        %v460 = vrot.slane %v407, %v459
        %v461 = vmul.f32 %v420, %v460
        %v462 = vmul.f32 %v425, %v460
        %v463 = vmul.f32 %v430, %v460
        %v464 = vmul.f32 %v435, %v460
        %v465 = vmul.f32 %v440, %v460
        %v466 = vmul.f32 %v445, %v460
        %v467 = vmul.f32 %v450, %v460
        %v468 = vmul.f32 %v455, %v460
        %v469 = vld [vmem:[%s2] sm:$0xff]
        %v470 = vld [vmem:[%s2 + $0x8] sm:$0xff]
        %v471 = vld [vmem:[%s2 + $0x10] sm:$0xff]
        %v472 = vld [vmem:[%s2 + $0x18] sm:$0xff]
        %v473 = vld [vmem:[%s2 + $0x20] sm:$0xff]
        %v474 = vld [vmem:[%s2 + $0x28] sm:$0xff]
        %v475 = vld [vmem:[%s2 + $0x30] sm:$0xff]
        %v476 = vld [vmem:[%s2 + $0x38] sm:$0xff]
        %478 = vset.pattern.permute.xlu0 0
        %479 = vperm.xlu0 %478, %v469
        %v480 = vpop.permute.xlu0 %479
        %483 = vset.pattern.permute.xlu0 0
        %484 = vperm.xlu0 %483, %v470
        %v485 = vpop.permute.xlu0 %484
        %488 = vset.pattern.permute.xlu0 0
        %489 = vperm.xlu0 %488, %v471
        %v490 = vpop.permute.xlu0 %489
        %493 = vset.pattern.permute.xlu0 0
        %494 = vperm.xlu0 %493, %v472
        %v495 = vpop.permute.xlu0 %494
        %498 = vset.pattern.permute.xlu0 0
        %499 = vperm.xlu0 %498, %v473
        %v500 = vpop.permute.xlu0 %499
        %503 = vset.pattern.permute.xlu0 0
        %504 = vperm.xlu0 %503, %v474
        %v505 = vpop.permute.xlu0 %504
        %508 = vset.pattern.permute.xlu0 0
        %509 = vperm.xlu0 %508, %v475
        %v510 = vpop.permute.xlu0 %509
        %513 = vset.pattern.permute.xlu0 0
        %514 = vperm.xlu0 %513, %v476
        %v515 = vpop.permute.xlu0 %514
        %v517 = vadd.f32 %v461, %v480
        %v518 = vadd.f32 %v462, %v485
        %v519 = vadd.f32 %v463, %v490
        %v520 = vadd.f32 %v464, %v495
        %v521 = vadd.f32 %v465, %v500
        %v522 = vadd.f32 %v466, %v505
        %v523 = vadd.f32 %v467, %v510
        %v524 = vadd.f32 %v468, %v515
        %v525 = vmax.f32 %v517, 0.0
        %v526 = vmax.f32 %v518, 0.0
        %v527 = vmax.f32 %v519, 0.0
        %v528 = vmax.f32 %v520, 0.0
        %v529 = vmax.f32 %v521, 0.0
        %v530 = vmax.f32 %v522, 0.0
        %v531 = vmax.f32 %v523, 0.0
        %v532 = vmax.f32 %v524, 0.0
        %v533 = vld [vmem:[%s3] sm:$0xff]
        %v534 = vld [vmem:[%s3 + $0x8] sm:$0xff]
        %v535 = vld [vmem:[%s3 + $0x10] sm:$0xff]
        %v536 = vld [vmem:[%s3 + $0x18] sm:$0xff]
        %v537 = vld [vmem:[%s3 + $0x20] sm:$0xff]
        %v538 = vld [vmem:[%s3 + $0x28] sm:$0xff]
        %v539 = vld [vmem:[%s3 + $0x30] sm:$0xff]
        %v540 = vld [vmem:[%s3 + $0x38] sm:$0xff]
        %v541 = vld [vmem:[%s4] sm:$0xff]
        %v542 = vld [vmem:[%s4 + $0x8] sm:$0xff]
        %v543 = vld [vmem:[%s4 + $0x10] sm:$0xff]
        %v544 = vld [vmem:[%s4 + $0x18] sm:$0xff]
        %v545 = vld [vmem:[%s4 + $0x20] sm:$0xff]
        %v546 = vld [vmem:[%s4 + $0x28] sm:$0xff]
        %v547 = vld [vmem:[%s4 + $0x30] sm:$0xff]
        %v548 = vld [vmem:[%s4 + $0x38] sm:$0xff]
        %550 = vset.pattern.permute.xlu0 0
        %551 = vperm.xlu0 %550, %v541
        %v552 = vpop.permute.xlu0 %551
        %555 = vset.pattern.permute.xlu0 0
        %556 = vperm.xlu0 %555, %v542
        %v557 = vpop.permute.xlu0 %556
        %560 = vset.pattern.permute.xlu0 0
        %561 = vperm.xlu0 %560, %v543
        %v562 = vpop.permute.xlu0 %561
        %565 = vset.pattern.permute.xlu0 0
        %566 = vperm.xlu0 %565, %v544
        %v567 = vpop.permute.xlu0 %566
        %570 = vset.pattern.permute.xlu0 0
        %571 = vperm.xlu0 %570, %v545
        %v572 = vpop.permute.xlu0 %571
        %575 = vset.pattern.permute.xlu0 0
        %576 = vperm.xlu0 %575, %v546
        %v577 = vpop.permute.xlu0 %576
        %580 = vset.pattern.permute.xlu0 0
        %581 = vperm.xlu0 %580, %v547
        %v582 = vpop.permute.xlu0 %581
        %585 = vset.pattern.permute.xlu0 0
        %586 = vperm.xlu0 %585, %v548
        %v587 = vpop.permute.xlu0 %586
        %vm589 = vcmask 523264
        %v591 = vsel %vm589, %v533, 0
        %v594 = vsel %vm589, %v534, 0
        %v597 = vsel %vm589, %v535, 0
        %v600 = vsel %vm589, %v536, 0
        %v603 = vsel %vm589, %v537, 0
        %v606 = vsel %vm589, %v538, 0
        %v609 = vsel %vm589, %v539, 0
        %v612 = vsel %vm589, %v540, 0
        %614 = vmatprep.subr.mxu0 0.0
        %615 = vmatpush1.msra.mxu0 %v525
        %616 = vmatprep.subr.mxu0 0.0
        %617 = vmatpush1.msra.mxu0 %v526
        %618 = vmatprep.subr.mxu0 0.0
        %619 = vmatpush1.msra.mxu0 %v527
        %620 = vmatprep.subr.mxu0 0.0
        %621 = vmatpush1.msra.mxu0 %v528
        %622 = vmatprep.subr.mxu0 0.0
        %623 = vmatpush1.msra.mxu0 %v529
        %624 = vmatprep.subr.mxu0 0.0
        %625 = vmatpush1.msra.mxu0 %v530
        %626 = vmatprep.subr.mxu0 0.0
        %627 = vmatpush1.msra.mxu0 %v531
        %628 = vmatprep.subr.mxu0 0.0
        %629 = vmatpush1.msra.mxu0 %v532
        %630 = vmatprep.subr.mxu0 0.0
        %631 = vmatpush1.msra.mxu0 0.0
        %632 = vmatprep.subr.mxu0 0.0
        %633 = vmatpush1.msra.mxu0 0.0
        %634 = vmatprep.subr.mxu0 0.0
        %635 = vmatpush1.msra.mxu0 0.0
        %636 = vmatprep.subr.mxu0 0.0
        %637 = vmatpush1.msra.mxu0 0.0
        %638 = vmatprep.subr.mxu0 0.0
        %639 = vmatpush1.msra.mxu0 0.0
        %640 = vmatprep.subr.mxu0 0.0
        %641 = vmatpush1.msra.mxu0 0.0
        %642 = vmatprep.subr.mxu0 0.0
        %643 = vmatpush1.msra.mxu0 0.0
        %644 = vmatprep.subr.mxu0 0.0
        %645 = vmatpush1.msra.mxu0 0.0
        %646 = vmatprep.subr.mxu0 0.0
        %647 = vmatpush1.msra.mxu0 0.0
        %648 = vmatprep.subr.mxu0 0.0
        %649 = vmatpush1.msra.mxu0 0.0
        %650 = vmatprep.subr.mxu0 0.0
        %651 = vmatpush1.msra.mxu0 0.0
        %652 = vmatprep.subr.mxu0 0.0
        %653 = vmatpush1.msra.mxu0 0.0
        %654 = vmatprep.subr.mxu0 0.0
        %655 = vmatpush1.msra.mxu0 0.0
        %656 = vmatprep.subr.mxu0 0.0
        %657 = vmatpush1.msra.mxu0 0.0
        %658 = vmatprep.subr.mxu0 0.0
        %659 = vmatpush1.msra.mxu0 0.0
        %660 = vmatprep.subr.mxu0 0.0
        %661 = vmatpush1.msra.mxu0 0.0
        %662 = vmatprep.subr.mxu0 0.0
        %663 = vmatpush1.msra.mxu0 0.0
        %664 = vmatprep.subr.mxu0 0.0
        %665 = vmatpush1.msra.mxu0 0.0
        %666 = vmatprep.subr.mxu0 0.0
        %667 = vmatpush1.msra.mxu0 0.0
        %668 = vmatprep.subr.mxu0 0.0
        %669 = vmatpush1.msra.mxu0 0.0
        %670 = vmatprep.subr.mxu0 0.0
        %671 = vmatpush1.msra.mxu0 0.0
        %672 = vmatprep.subr.mxu0 0.0
        %673 = vmatpush1.msra.mxu0 0.0
        %674 = vmatprep.subr.mxu0 0.0
        %675 = vmatpush1.msra.mxu0 0.0
        %676 = vmatprep.subr.mxu0 0.0
        %677 = vmatpush1.msra.mxu0 0.0
        %678 = vmatprep.mubr.f32.mxu0 0.0
        %679 = vmatmul.mubr.f32.gmra.mrb[0].mxu0 %v591
        %v680 = vpop.f32.mrb[0].mxu0
        %v681 = vadd.f32 %v552, %v680
        %v682 = vpop.f32.mrb[0].mxu0
        %683 = vmatprep.mubr.f32.mxu0 0.0
        %684 = vmatmul.mubr.f32.gmra.mrb[0].mxu0 %v594
        %v685 = vpop.f32.mrb[0].mxu0
        %v686 = vadd.f32 %v557, %v685
        %v687 = vpop.f32.mrb[0].mxu0
        %688 = vmatprep.mubr.f32.mxu0 0.0
        %689 = vmatmul.mubr.f32.gmra.mrb[0].mxu0 %v597
        %v690 = vpop.f32.mrb[0].mxu0
        %v691 = vadd.f32 %v562, %v690
        %v692 = vpop.f32.mrb[0].mxu0
        %693 = vmatprep.mubr.f32.mxu0 0.0
        %694 = vmatmul.mubr.f32.gmra.mrb[0].mxu0 %v600
        %v695 = vpop.f32.mrb[0].mxu0
        %v696 = vadd.f32 %v567, %v695
        %v697 = vpop.f32.mrb[0].mxu0
        %698 = vmatprep.mubr.f32.mxu0 0.0
        %699 = vmatmul.mubr.f32.gmra.mrb[0].mxu0 %v603
        %v700 = vpop.f32.mrb[0].mxu0
        %v701 = vadd.f32 %v572, %v700
        %v702 = vpop.f32.mrb[0].mxu0
        %703 = vmatprep.mubr.f32.mxu0 0.0
        %704 = vmatmul.mubr.f32.gmra.mrb[0].mxu0 %v606
        %v705 = vpop.f32.mrb[0].mxu0
        %v706 = vadd.f32 %v577, %v705
        %v707 = vpop.f32.mrb[0].mxu0
        %708 = vmatprep.mubr.f32.mxu0 0.0
        %709 = vmatmul.mubr.f32.gmra.mrb[0].mxu0 %v609
        %v710 = vpop.f32.mrb[0].mxu0
        %v711 = vadd.f32 %v582, %v710
        %v712 = vpop.f32.mrb[0].mxu0
        %713 = vmatprep.mubr.f32.mxu0 0.0
        %714 = vmatmul.mubr.f32.gmra.mrb[0].mxu0 %v612
        %v715 = vpop.f32.mrb[0].mxu0
        %v716 = vadd.f32 %v587, %v715
        %v717 = vpop.f32.mrb[0].mxu0
        %718 = vdwg.mxu0
        %v719 = vmax.f32 %v681, 0.0
        %v720 = vmax.f32 %v686, 0.0
        %v721 = vmax.f32 %v691, 0.0
        %v722 = vmax.f32 %v696, 0.0
        %v723 = vmax.f32 %v701, 0.0
        %v724 = vmax.f32 %v706, 0.0
        %v725 = vmax.f32 %v711, 0.0
        %v726 = vmax.f32 %v716, 0.0
        %v727 = vld [vmem:[%s5] sm:$0xff]
        %v728 = vld [vmem:[%s5 + $0x8] sm:$0xff]
        %v729 = vld [vmem:[%s5 + $0x10] sm:$0xff]
        %v730 = vld [vmem:[%s5 + $0x18] sm:$0xff]
        %v731 = vld [vmem:[%s5 + $0x20] sm:$0xff]
        %v732 = vld [vmem:[%s5 + $0x28] sm:$0xff]
        %v733 = vld [vmem:[%s5 + $0x30] sm:$0xff]
        %v734 = vld [vmem:[%s5 + $0x38] sm:$0xff]
        %v735 = vld [vmem:[%s6] sm:$0xff]
        %v736 = vld [vmem:[%s6 + $0x8] sm:$0xff]
        %v737 = vld [vmem:[%s6 + $0x10] sm:$0xff]
        %v738 = vld [vmem:[%s6 + $0x18] sm:$0xff]
        %v739 = vld [vmem:[%s6 + $0x20] sm:$0xff]
        %v740 = vld [vmem:[%s6 + $0x28] sm:$0xff]
        %v741 = vld [vmem:[%s6 + $0x30] sm:$0xff]
        %v742 = vld [vmem:[%s6 + $0x38] sm:$0xff]
        %744 = vset.pattern.permute.xlu0 0
        %745 = vperm.xlu0 %744, %v735
        %v746 = vpop.permute.xlu0 %745
        %749 = vset.pattern.permute.xlu0 0
        %750 = vperm.xlu0 %749, %v736
        %v751 = vpop.permute.xlu0 %750
        %754 = vset.pattern.permute.xlu0 0
        %755 = vperm.xlu0 %754, %v737
        %v756 = vpop.permute.xlu0 %755
        %759 = vset.pattern.permute.xlu0 0
        %760 = vperm.xlu0 %759, %v738
        %v761 = vpop.permute.xlu0 %760
        %764 = vset.pattern.permute.xlu0 0
        %765 = vperm.xlu0 %764, %v739
        %v766 = vpop.permute.xlu0 %765
        %769 = vset.pattern.permute.xlu0 0
        %770 = vperm.xlu0 %769, %v740
        %v771 = vpop.permute.xlu0 %770
        %774 = vset.pattern.permute.xlu0 0
        %775 = vperm.xlu0 %774, %v741
        %v776 = vpop.permute.xlu0 %775
        %779 = vset.pattern.permute.xlu0 0
        %780 = vperm.xlu0 %779, %v742
        %v781 = vpop.permute.xlu0 %780
        %v784 = vsel %vm589, %v727, 0
        %v787 = vsel %vm589, %v728, 0
        %v790 = vsel %vm589, %v729, 0
        %v793 = vsel %vm589, %v730, 0
        %v796 = vsel %vm589, %v731, 0
        %v799 = vsel %vm589, %v732, 0
        %v802 = vsel %vm589, %v733, 0
        %v805 = vsel %vm589, %v734, 0
        %807 = vmatprep.subr.mxu0 0.0
        %808 = vmatpush1.msra.mxu0 %v719
        %809 = vmatprep.subr.mxu0 0.0
        %810 = vmatpush1.msra.mxu0 %v720
        %811 = vmatprep.subr.mxu0 0.0
        %812 = vmatpush1.msra.mxu0 %v721
        %813 = vmatprep.subr.mxu0 0.0
        %814 = vmatpush1.msra.mxu0 %v722
        %815 = vmatprep.subr.mxu0 0.0
        %816 = vmatpush1.msra.mxu0 %v723
        %817 = vmatprep.subr.mxu0 0.0
        %818 = vmatpush1.msra.mxu0 %v724
        %819 = vmatprep.subr.mxu0 0.0
        %820 = vmatpush1.msra.mxu0 %v725
        %821 = vmatprep.subr.mxu0 0.0
        %822 = vmatpush1.msra.mxu0 %v726
        %823 = vmatprep.subr.mxu0 0.0
        %824 = vmatpush1.msra.mxu0 0.0
        %825 = vmatprep.subr.mxu0 0.0
        %826 = vmatpush1.msra.mxu0 0.0
        %827 = vmatprep.subr.mxu0 0.0
        %828 = vmatpush1.msra.mxu0 0.0
        %829 = vmatprep.subr.mxu0 0.0
        %830 = vmatpush1.msra.mxu0 0.0
        %831 = vmatprep.subr.mxu0 0.0
        %832 = vmatpush1.msra.mxu0 0.0
        %833 = vmatprep.subr.mxu0 0.0
        %834 = vmatpush1.msra.mxu0 0.0
        %835 = vmatprep.subr.mxu0 0.0
        %836 = vmatpush1.msra.mxu0 0.0
        %837 = vmatprep.subr.mxu0 0.0
        %838 = vmatpush1.msra.mxu0 0.0
        %839 = vmatprep.subr.mxu0 0.0
        %840 = vmatpush1.msra.mxu0 0.0
        %841 = vmatprep.subr.mxu0 0.0
        %842 = vmatpush1.msra.mxu0 0.0
        %843 = vmatprep.subr.mxu0 0.0
        %844 = vmatpush1.msra.mxu0 0.0
        %845 = vmatprep.subr.mxu0 0.0
        %846 = vmatpush1.msra.mxu0 0.0
        %847 = vmatprep.subr.mxu0 0.0
        %848 = vmatpush1.msra.mxu0 0.0
        %849 = vmatprep.subr.mxu0 0.0
        %850 = vmatpush1.msra.mxu0 0.0
        %851 = vmatprep.subr.mxu0 0.0
        %852 = vmatpush1.msra.mxu0 0.0
        %853 = vmatprep.subr.mxu0 0.0
        %854 = vmatpush1.msra.mxu0 0.0
        %855 = vmatprep.subr.mxu0 0.0
        %856 = vmatpush1.msra.mxu0 0.0
        %857 = vmatprep.subr.mxu0 0.0
        %858 = vmatpush1.msra.mxu0 0.0
        %859 = vmatprep.subr.mxu0 0.0
        %860 = vmatpush1.msra.mxu0 0.0
        %861 = vmatprep.subr.mxu0 0.0
        %862 = vmatpush1.msra.mxu0 0.0
        %863 = vmatprep.subr.mxu0 0.0
        %864 = vmatpush1.msra.mxu0 0.0
        %865 = vmatprep.subr.mxu0 0.0
        %866 = vmatpush1.msra.mxu0 0.0
        %867 = vmatprep.subr.mxu0 0.0
        %868 = vmatpush1.msra.mxu0 0.0
        %869 = vmatprep.subr.mxu0 0.0
        %870 = vmatpush1.msra.mxu0 0.0
        %871 = vmatprep.mubr.f32.mxu0 0.0
        %872 = vmatmul.mubr.f32.gmra.mrb[0].mxu0 %v784
        %v873 = vpop.f32.mrb[0].mxu0
        %v874 = vadd.f32 %v746, %v873
        %v875 = vpop.f32.mrb[0].mxu0
        %876 = vmatprep.mubr.f32.mxu0 0.0
        %877 = vmatmul.mubr.f32.gmra.mrb[0].mxu0 %v787
        %v878 = vpop.f32.mrb[0].mxu0
        %v879 = vadd.f32 %v751, %v878
        %v880 = vpop.f32.mrb[0].mxu0
        %881 = vmatprep.mubr.f32.mxu0 0.0
        %882 = vmatmul.mubr.f32.gmra.mrb[0].mxu0 %v790
        %v883 = vpop.f32.mrb[0].mxu0
        %v884 = vadd.f32 %v756, %v883
        %v885 = vpop.f32.mrb[0].mxu0
        %886 = vmatprep.mubr.f32.mxu0 0.0
        %887 = vmatmul.mubr.f32.gmra.mrb[0].mxu0 %v793
        %v888 = vpop.f32.mrb[0].mxu0
        %v889 = vadd.f32 %v761, %v888
        %v890 = vpop.f32.mrb[0].mxu0
        %891 = vmatprep.mubr.f32.mxu0 0.0
        %892 = vmatmul.mubr.f32.gmra.mrb[0].mxu0 %v796
        %v893 = vpop.f32.mrb[0].mxu0
        %v894 = vadd.f32 %v766, %v893
        %v895 = vpop.f32.mrb[0].mxu0
        %896 = vmatprep.mubr.f32.mxu0 0.0
        %897 = vmatmul.mubr.f32.gmra.mrb[0].mxu0 %v799
        %v898 = vpop.f32.mrb[0].mxu0
        %v899 = vadd.f32 %v771, %v898
        %v900 = vpop.f32.mrb[0].mxu0
        %901 = vmatprep.mubr.f32.mxu0 0.0
        %902 = vmatmul.mubr.f32.gmra.mrb[0].mxu0 %v802
        %v903 = vpop.f32.mrb[0].mxu0
        %v904 = vadd.f32 %v776, %v903
        %v905 = vpop.f32.mrb[0].mxu0
        %906 = vmatprep.mubr.f32.mxu0 0.0
        %907 = vmatmul.mubr.f32.gmra.mrb[0].mxu0 %v805
        %v908 = vpop.f32.mrb[0].mxu0
        %v909 = vadd.f32 %v781, %v908
        %v910 = vpop.f32.mrb[0].mxu0
        %911 = vdwg.mxu0
        %v912 = vmax.f32 %v874, 0.0
        %v913 = vmax.f32 %v879, 0.0
        %v914 = vmax.f32 %v884, 0.0
        %v915 = vmax.f32 %v889, 0.0
        %v916 = vmax.f32 %v894, 0.0
        %v917 = vmax.f32 %v899, 0.0
        %v918 = vmax.f32 %v904, 0.0
        %v919 = vmax.f32 %v909, 0.0
        %v920 = vld [vmem:[%s7] sm:$0x3]
        %v921 = vld [vmem:[%s8] sm:$0x3]
        %923 = vset.pattern.permute.xlu0 0
        %924 = vperm.xlu0 %923, %v921
        %v925 = vpop.permute.xlu0 %924
        %v928 = vsel %vm589, %v920, 0
        %930 = vmatprep.subr.mxu0 0.0
        %931 = vmatpush1.msra.mxu0 %v912
        %932 = vmatprep.subr.mxu0 0.0
        %933 = vmatpush1.msra.mxu0 %v913
        %934 = vmatprep.subr.mxu0 0.0
        %935 = vmatpush1.msra.mxu0 %v914
        %936 = vmatprep.subr.mxu0 0.0
        %937 = vmatpush1.msra.mxu0 %v915
        %938 = vmatprep.subr.mxu0 0.0
        %939 = vmatpush1.msra.mxu0 %v916
        %940 = vmatprep.subr.mxu0 0.0
        %941 = vmatpush1.msra.mxu0 %v917
        %942 = vmatprep.subr.mxu0 0.0
        %943 = vmatpush1.msra.mxu0 %v918
        %944 = vmatprep.subr.mxu0 0.0
        %945 = vmatpush1.msra.mxu0 %v919
        %946 = vmatprep.subr.mxu0 0.0
        %947 = vmatpush1.msra.mxu0 0.0
        %948 = vmatprep.subr.mxu0 0.0
        %949 = vmatpush1.msra.mxu0 0.0
        %950 = vmatprep.subr.mxu0 0.0
        %951 = vmatpush1.msra.mxu0 0.0
        %952 = vmatprep.subr.mxu0 0.0
        %953 = vmatpush1.msra.mxu0 0.0
        %954 = vmatprep.subr.mxu0 0.0
        %955 = vmatpush1.msra.mxu0 0.0
        %956 = vmatprep.subr.mxu0 0.0
        %957 = vmatpush1.msra.mxu0 0.0
        %958 = vmatprep.subr.mxu0 0.0
        %959 = vmatpush1.msra.mxu0 0.0
        %960 = vmatprep.subr.mxu0 0.0
        %961 = vmatpush1.msra.mxu0 0.0
        %962 = vmatprep.subr.mxu0 0.0
        %963 = vmatpush1.msra.mxu0 0.0
        %964 = vmatprep.subr.mxu0 0.0
        %965 = vmatpush1.msra.mxu0 0.0
        %966 = vmatprep.subr.mxu0 0.0
        %967 = vmatpush1.msra.mxu0 0.0
        %968 = vmatprep.subr.mxu0 0.0
        %969 = vmatpush1.msra.mxu0 0.0
        %970 = vmatprep.subr.mxu0 0.0
        %971 = vmatpush1.msra.mxu0 0.0
        %972 = vmatprep.subr.mxu0 0.0
        %973 = vmatpush1.msra.mxu0 0.0
        %974 = vmatprep.subr.mxu0 0.0
        %975 = vmatpush1.msra.mxu0 0.0
        %976 = vmatprep.subr.mxu0 0.0
        %977 = vmatpush1.msra.mxu0 0.0
        %978 = vmatprep.subr.mxu0 0.0
        %979 = vmatpush1.msra.mxu0 0.0
        %980 = vmatprep.subr.mxu0 0.0
        %981 = vmatpush1.msra.mxu0 0.0
        %982 = vmatprep.subr.mxu0 0.0
        %983 = vmatpush1.msra.mxu0 0.0
        %984 = vmatprep.subr.mxu0 0.0
        %985 = vmatpush1.msra.mxu0 0.0
        %986 = vmatprep.subr.mxu0 0.0
        %987 = vmatpush1.msra.mxu0 0.0
        %988 = vmatprep.subr.mxu0 0.0
        %989 = vmatpush1.msra.mxu0 0.0
        %990 = vmatprep.subr.mxu0 0.0
        %991 = vmatpush1.msra.mxu0 0.0
        %992 = vmatprep.subr.mxu0 0.0
        %993 = vmatpush1.msra.mxu0 0.0
        %994 = vmatprep.mubr.f32.mxu0 0.0
        %995 = vmatmul.mubr.f32.gmra.mrb[0].mxu0 %v928
        %v996 = vpop.f32.mrb[0].mxu0
        %v997 = vadd.f32 %v925, %v996
        %v998 = vpop.f32.mrb[0].mxu0
        %999 = vdwg.mxu0
        %v1000 = vtanh.pop %v997
        %s1001 = sld [smem:[#allocation2]]
        %v1002 = vstv %s1001
        %v1003 = vmul.f32 %v1002, %v1000
        %v1004 = vmul.f32 %v1003, 1.442695
        %v1005 = vpow.pop %v1004
        %v1006 = vmul.f32 %v1005, %v408
        %v1008 = vrot.slane %v1000, 1
        %v1010 = vadd.f32 %v1006, %v1008
        %1011 = vst [vmem:[%s402] sm:$0x1] %v1003
        %s1012 = scalar_lea.vmem %s1, 64
        %v1013 = vld [vmem:[%s1012] sm:$0xff]
        %v1014 = vld [vmem:[%s1012 + $0x8] sm:$0xff]
        %v1015 = vld [vmem:[%s1012 + $0x10] sm:$0xff]
        %v1016 = vld [vmem:[%s1012 + $0x18] sm:$0xff]
        %v1017 = vld [vmem:[%s1012 + $0x20] sm:$0xff]
        %v1018 = vld [vmem:[%s1012 + $0x28] sm:$0xff]
        %v1019 = vld [vmem:[%s1012 + $0x30] sm:$0xff]
        %v1020 = vld [vmem:[%s1012 + $0x38] sm:$0xff]
        %1022 = vset.pattern.permute.xlu0 0
        %1023 = vperm.xlu0 %1022, %v1013
        %v1024 = vpop.permute.xlu0 %1023
        %1027 = vset.pattern.permute.xlu0 0
        %1028 = vperm.xlu0 %1027, %v1014
        %v1029 = vpop.permute.xlu0 %1028
        %1032 = vset.pattern.permute.xlu0 0
        %1033 = vperm.xlu0 %1032, %v1015
        %v1034 = vpop.permute.xlu0 %1033
        %1037 = vset.pattern.permute.xlu0 0
        %1038 = vperm.xlu0 %1037, %v1016
        %v1039 = vpop.permute.xlu0 %1038
        %1042 = vset.pattern.permute.xlu0 0
        %1043 = vperm.xlu0 %1042, %v1017
        %v1044 = vpop.permute.xlu0 %1043
        %1047 = vset.pattern.permute.xlu0 0
        %1048 = vperm.xlu0 %1047, %v1018
        %v1049 = vpop.permute.xlu0 %1048
        %1052 = vset.pattern.permute.xlu0 0
        %1053 = vperm.xlu0 %1052, %v1019
        %v1054 = vpop.permute.xlu0 %1053
        %1057 = vset.pattern.permute.xlu0 0
        %1058 = vperm.xlu0 %1057, %v1020
        %v1059 = vpop.permute.xlu0 %1058
        %v1061 = vlaneseq
        %v1062 = vshrl.u32 %v1061, 7
        %v1063 = vsub.s32 0, %v1062
        %v1064 = vrot.slane %v1010, %v1063
        %v1065 = vmul.f32 %v1024, %v1064
        %v1066 = vmul.f32 %v1029, %v1064
        %v1067 = vmul.f32 %v1034, %v1064
        %v1068 = vmul.f32 %v1039, %v1064
        %v1069 = vmul.f32 %v1044, %v1064
        %v1070 = vmul.f32 %v1049, %v1064
        %v1071 = vmul.f32 %v1054, %v1064
        %v1072 = vmul.f32 %v1059, %v1064
        %s1073 = scalar_lea.vmem %s2, 64
        %v1074 = vld [vmem:[%s1073] sm:$0xff]
        %v1075 = vld [vmem:[%s1073 + $0x8] sm:$0xff]
        %v1076 = vld [vmem:[%s1073 + $0x10] sm:$0xff]
        %v1077 = vld [vmem:[%s1073 + $0x18] sm:$0xff]
        %v1078 = vld [vmem:[%s1073 + $0x20] sm:$0xff]
        %v1079 = vld [vmem:[%s1073 + $0x28] sm:$0xff]
        %v1080 = vld [vmem:[%s1073 + $0x30] sm:$0xff]
        %v1081 = vld [vmem:[%s1073 + $0x38] sm:$0xff]
        %1083 = vset.pattern.permute.xlu0 0
        %1084 = vperm.xlu0 %1083, %v1074
        %v1085 = vpop.permute.xlu0 %1084
        %1088 = vset.pattern.permute.xlu0 0
        %1089 = vperm.xlu0 %1088, %v1075
        %v1090 = vpop.permute.xlu0 %1089
        %1093 = vset.pattern.permute.xlu0 0
        %1094 = vperm.xlu0 %1093, %v1076
        %v1095 = vpop.permute.xlu0 %1094
        %1098 = vset.pattern.permute.xlu0 0
        %1099 = vperm.xlu0 %1098, %v1077
        %v1100 = vpop.permute.xlu0 %1099
        %1103 = vset.pattern.permute.xlu0 0
        %1104 = vperm.xlu0 %1103, %v1078
        %v1105 = vpop.permute.xlu0 %1104
        %1108 = vset.pattern.permute.xlu0 0
        %1109 = vperm.xlu0 %1108, %v1079
        %v1110 = vpop.permute.xlu0 %1109
        %1113 = vset.pattern.permute.xlu0 0
        %1114 = vperm.xlu0 %1113, %v1080
        %v1115 = vpop.permute.xlu0 %1114
        %1118 = vset.pattern.permute.xlu0 0
        %1119 = vperm.xlu0 %1118, %v1081
        %v1120 = vpop.permute.xlu0 %1119
        %v1122 = vadd.f32 %v1065, %v1085
        %v1123 = vadd.f32 %v1066, %v1090
        %v1124 = vadd.f32 %v1067, %v1095
        %v1125 = vadd.f32 %v1068, %v1100
        %v1126 = vadd.f32 %v1069, %v1105
        %v1127 = vadd.f32 %v1070, %v1110
        %v1128 = vadd.f32 %v1071, %v1115
        %v1129 = vadd.f32 %v1072, %v1120
        %v1130 = vmax.f32 %v1122, 0.0
        %v1131 = vmax.f32 %v1123, 0.0
        %v1132 = vmax.f32 %v1124, 0.0
        %v1133 = vmax.f32 %v1125, 0.0
        %v1134 = vmax.f32 %v1126, 0.0
        %v1135 = vmax.f32 %v1127, 0.0
        %v1136 = vmax.f32 %v1128, 0.0
        %v1137 = vmax.f32 %v1129, 0.0
        %s1138 = scalar_lea.vmem %s3, 64
        %v1139 = vld [vmem:[%s1138] sm:$0xff]
        %v1140 = vld [vmem:[%s1138 + $0x8] sm:$0xff]
        %v1141 = vld [vmem:[%s1138 + $0x10] sm:$0xff]
        %v1142 = vld [vmem:[%s1138 + $0x18] sm:$0xff]
        %v1143 = vld [vmem:[%s1138 + $0x20] sm:$0xff]
        %v1144 = vld [vmem:[%s1138 + $0x28] sm:$0xff]
        %v1145 = vld [vmem:[%s1138 + $0x30] sm:$0xff]
        %v1146 = vld [vmem:[%s1138 + $0x38] sm:$0xff]
        %s1147 = scalar_lea.vmem %s4, 64
        %v1148 = vld [vmem:[%s1147] sm:$0xff]
        %v1149 = vld [vmem:[%s1147 + $0x8] sm:$0xff]
        %v1150 = vld [vmem:[%s1147 + $0x10] sm:$0xff]
        %v1151 = vld [vmem:[%s1147 + $0x18] sm:$0xff]
        %v1152 = vld [vmem:[%s1147 + $0x20] sm:$0xff]
        %v1153 = vld [vmem:[%s1147 + $0x28] sm:$0xff]
        %v1154 = vld [vmem:[%s1147 + $0x30] sm:$0xff]
        %v1155 = vld [vmem:[%s1147 + $0x38] sm:$0xff]
        %1157 = vset.pattern.permute.xlu0 0
        %1158 = vperm.xlu0 %1157, %v1148
        %v1159 = vpop.permute.xlu0 %1158
        %1162 = vset.pattern.permute.xlu0 0
        %1163 = vperm.xlu0 %1162, %v1149
        %v1164 = vpop.permute.xlu0 %1163
        %1167 = vset.pattern.permute.xlu0 0
        %1168 = vperm.xlu0 %1167, %v1150
        %v1169 = vpop.permute.xlu0 %1168
        %1172 = vset.pattern.permute.xlu0 0
        %1173 = vperm.xlu0 %1172, %v1151
        %v1174 = vpop.permute.xlu0 %1173
        %1177 = vset.pattern.permute.xlu0 0
        %1178 = vperm.xlu0 %1177, %v1152
        %v1179 = vpop.permute.xlu0 %1178
        %1182 = vset.pattern.permute.xlu0 0
        %1183 = vperm.xlu0 %1182, %v1153
        %v1184 = vpop.permute.xlu0 %1183
        %1187 = vset.pattern.permute.xlu0 0
        %1188 = vperm.xlu0 %1187, %v1154
        %v1189 = vpop.permute.xlu0 %1188
        %1192 = vset.pattern.permute.xlu0 0
        %1193 = vperm.xlu0 %1192, %v1155
        %v1194 = vpop.permute.xlu0 %1193
        %v1197 = vsel %vm589, %v1139, 0
        %v1200 = vsel %vm589, %v1140, 0
        %v1203 = vsel %vm589, %v1141, 0
        %v1206 = vsel %vm589, %v1142, 0
        %v1209 = vsel %vm589, %v1143, 0
        %v1212 = vsel %vm589, %v1144, 0
        %v1215 = vsel %vm589, %v1145, 0
        %v1218 = vsel %vm589, %v1146, 0
        %1220 = vmatprep.subr.mxu0 0.0
        %1221 = vmatpush1.msra.mxu0 %v1130
        %1222 = vmatprep.subr.mxu0 0.0
        %1223 = vmatpush1.msra.mxu0 %v1131
        %1224 = vmatprep.subr.mxu0 0.0
        %1225 = vmatpush1.msra.mxu0 %v1132
        %1226 = vmatprep.subr.mxu0 0.0
        %1227 = vmatpush1.msra.mxu0 %v1133
        %1228 = vmatprep.subr.mxu0 0.0
        %1229 = vmatpush1.msra.mxu0 %v1134
        %1230 = vmatprep.subr.mxu0 0.0
        %1231 = vmatpush1.msra.mxu0 %v1135
        %1232 = vmatprep.subr.mxu0 0.0
        %1233 = vmatpush1.msra.mxu0 %v1136
        %1234 = vmatprep.subr.mxu0 0.0
        %1235 = vmatpush1.msra.mxu0 %v1137
        %1236 = vmatprep.subr.mxu0 0.0
        %1237 = vmatpush1.msra.mxu0 0.0
        %1238 = vmatprep.subr.mxu0 0.0
        %1239 = vmatpush1.msra.mxu0 0.0
        %1240 = vmatprep.subr.mxu0 0.0
        %1241 = vmatpush1.msra.mxu0 0.0
        %1242 = vmatprep.subr.mxu0 0.0
        %1243 = vmatpush1.msra.mxu0 0.0
        %1244 = vmatprep.subr.mxu0 0.0
        %1245 = vmatpush1.msra.mxu0 0.0
        %1246 = vmatprep.subr.mxu0 0.0
        %1247 = vmatpush1.msra.mxu0 0.0
        %1248 = vmatprep.subr.mxu0 0.0
        %1249 = vmatpush1.msra.mxu0 0.0
        %1250 = vmatprep.subr.mxu0 0.0
        %1251 = vmatpush1.msra.mxu0 0.0
        %1252 = vmatprep.subr.mxu0 0.0
        %1253 = vmatpush1.msra.mxu0 0.0
        %1254 = vmatprep.subr.mxu0 0.0
        %1255 = vmatpush1.msra.mxu0 0.0
        %1256 = vmatprep.subr.mxu0 0.0
        %1257 = vmatpush1.msra.mxu0 0.0
        %1258 = vmatprep.subr.mxu0 0.0
        %1259 = vmatpush1.msra.mxu0 0.0
        %1260 = vmatprep.subr.mxu0 0.0
        %1261 = vmatpush1.msra.mxu0 0.0
        %1262 = vmatprep.subr.mxu0 0.0
        %1263 = vmatpush1.msra.mxu0 0.0
        %1264 = vmatprep.subr.mxu0 0.0
        %1265 = vmatpush1.msra.mxu0 0.0
        %1266 = vmatprep.subr.mxu0 0.0
        %1267 = vmatpush1.msra.mxu0 0.0
        %1268 = vmatprep.subr.mxu0 0.0
        %1269 = vmatpush1.msra.mxu0 0.0
        %1270 = vmatprep.subr.mxu0 0.0
        %1271 = vmatpush1.msra.mxu0 0.0
        %1272 = vmatprep.subr.mxu0 0.0
        %1273 = vmatpush1.msra.mxu0 0.0
        %1274 = vmatprep.subr.mxu0 0.0
        %1275 = vmatpush1.msra.mxu0 0.0
        %1276 = vmatprep.subr.mxu0 0.0
        %1277 = vmatpush1.msra.mxu0 0.0
        %1278 = vmatprep.subr.mxu0 0.0
        %1279 = vmatpush1.msra.mxu0 0.0
        %1280 = vmatprep.subr.mxu0 0.0
        %1281 = vmatpush1.msra.mxu0 0.0
        %1282 = vmatprep.subr.mxu0 0.0
        %1283 = vmatpush1.msra.mxu0 0.0
        %1284 = vmatprep.mubr.f32.mxu0 0.0
        %1285 = vmatmul.mubr.f32.gmra.mrb[0].mxu0 %v1197
        %v1286 = vpop.f32.mrb[0].mxu0
        %v1287 = vadd.f32 %v1159, %v1286
        %v1288 = vpop.f32.mrb[0].mxu0
        %1289 = vmatprep.mubr.f32.mxu0 0.0
        %1290 = vmatmul.mubr.f32.gmra.mrb[0].mxu0 %v1200
        %v1291 = vpop.f32.mrb[0].mxu0
        %v1292 = vadd.f32 %v1164, %v1291
        %v1293 = vpop.f32.mrb[0].mxu0
        %1294 = vmatprep.mubr.f32.mxu0 0.0
        %1295 = vmatmul.mubr.f32.gmra.mrb[0].mxu0 %v1203
        %v1296 = vpop.f32.mrb[0].mxu0
        %v1297 = vadd.f32 %v1169, %v1296
        %v1298 = vpop.f32.mrb[0].mxu0
        %1299 = vmatprep.mubr.f32.mxu0 0.0
        %1300 = vmatmul.mubr.f32.gmra.mrb[0].mxu0 %v1206
        %v1301 = vpop.f32.mrb[0].mxu0
        %v1302 = vadd.f32 %v1174, %v1301
        %v1303 = vpop.f32.mrb[0].mxu0
        %1304 = vmatprep.mubr.f32.mxu0 0.0
        %1305 = vmatmul.mubr.f32.gmra.mrb[0].mxu0 %v1209
        %v1306 = vpop.f32.mrb[0].mxu0
        %v1307 = vadd.f32 %v1179, %v1306
        %v1308 = vpop.f32.mrb[0].mxu0
        %1309 = vmatprep.mubr.f32.mxu0 0.0
        %1310 = vmatmul.mubr.f32.gmra.mrb[0].mxu0 %v1212
        %v1311 = vpop.f32.mrb[0].mxu0
        %v1312 = vadd.f32 %v1184, %v1311
        %v1313 = vpop.f32.mrb[0].mxu0
        %1314 = vmatprep.mubr.f32.mxu0 0.0
        %1315 = vmatmul.mubr.f32.gmra.mrb[0].mxu0 %v1215
        %v1316 = vpop.f32.mrb[0].mxu0
        %v1317 = vadd.f32 %v1189, %v1316
        %v1318 = vpop.f32.mrb[0].mxu0
        %1319 = vmatprep.mubr.f32.mxu0 0.0
        %1320 = vmatmul.mubr.f32.gmra.mrb[0].mxu0 %v1218
        %v1321 = vpop.f32.mrb[0].mxu0
        %v1322 = vadd.f32 %v1194, %v1321
        %v1323 = vpop.f32.mrb[0].mxu0
        %1324 = vdwg.mxu0
        %v1325 = vmax.f32 %v1287, 0.0
        %v1326 = vmax.f32 %v1292, 0.0
        %v1327 = vmax.f32 %v1297, 0.0
        %v1328 = vmax.f32 %v1302, 0.0
        %v1329 = vmax.f32 %v1307, 0.0
        %v1330 = vmax.f32 %v1312, 0.0
        %v1331 = vmax.f32 %v1317, 0.0
        %v1332 = vmax.f32 %v1322, 0.0
        %s1333 = scalar_lea.vmem %s5, 64
        %v1334 = vld [vmem:[%s1333] sm:$0xff]
        %v1335 = vld [vmem:[%s1333 + $0x8] sm:$0xff]
        %v1336 = vld [vmem:[%s1333 + $0x10] sm:$0xff]
        %v1337 = vld [vmem:[%s1333 + $0x18] sm:$0xff]
        %v1338 = vld [vmem:[%s1333 + $0x20] sm:$0xff]
        %v1339 = vld [vmem:[%s1333 + $0x28] sm:$0xff]
        %v1340 = vld [vmem:[%s1333 + $0x30] sm:$0xff]
        %v1341 = vld [vmem:[%s1333 + $0x38] sm:$0xff]
        %s1342 = scalar_lea.vmem %s6, 64
        %v1343 = vld [vmem:[%s1342] sm:$0xff]
        %v1344 = vld [vmem:[%s1342 + $0x8] sm:$0xff]
        %v1345 = vld [vmem:[%s1342 + $0x10] sm:$0xff]
        %v1346 = vld [vmem:[%s1342 + $0x18] sm:$0xff]
        %v1347 = vld [vmem:[%s1342 + $0x20] sm:$0xff]
        %v1348 = vld [vmem:[%s1342 + $0x28] sm:$0xff]
        %v1349 = vld [vmem:[%s1342 + $0x30] sm:$0xff]
        %v1350 = vld [vmem:[%s1342 + $0x38] sm:$0xff]
        %1352 = vset.pattern.permute.xlu0 0
        %1353 = vperm.xlu0 %1352, %v1343
        %v1354 = vpop.permute.xlu0 %1353
        %1357 = vset.pattern.permute.xlu0 0
        %1358 = vperm.xlu0 %1357, %v1344
        %v1359 = vpop.permute.xlu0 %1358
        %1362 = vset.pattern.permute.xlu0 0
        %1363 = vperm.xlu0 %1362, %v1345
        %v1364 = vpop.permute.xlu0 %1363
        %1367 = vset.pattern.permute.xlu0 0
        %1368 = vperm.xlu0 %1367, %v1346
        %v1369 = vpop.permute.xlu0 %1368
        %1372 = vset.pattern.permute.xlu0 0
        %1373 = vperm.xlu0 %1372, %v1347
        %v1374 = vpop.permute.xlu0 %1373
        %1377 = vset.pattern.permute.xlu0 0
        %1378 = vperm.xlu0 %1377, %v1348
        %v1379 = vpop.permute.xlu0 %1378
        %1382 = vset.pattern.permute.xlu0 0
        %1383 = vperm.xlu0 %1382, %v1349
        %v1384 = vpop.permute.xlu0 %1383
        %1387 = vset.pattern.permute.xlu0 0
        %1388 = vperm.xlu0 %1387, %v1350
        %v1389 = vpop.permute.xlu0 %1388
        %v1392 = vsel %vm589, %v1334, 0
        %v1395 = vsel %vm589, %v1335, 0
        %v1398 = vsel %vm589, %v1336, 0
        %v1401 = vsel %vm589, %v1337, 0
        %v1404 = vsel %vm589, %v1338, 0
        %v1407 = vsel %vm589, %v1339, 0
        %v1410 = vsel %vm589, %v1340, 0
        %v1413 = vsel %vm589, %v1341, 0
        %1415 = vmatprep.subr.mxu0 0.0
        %1416 = vmatpush1.msra.mxu0 %v1325
        %1417 = vmatprep.subr.mxu0 0.0
        %1418 = vmatpush1.msra.mxu0 %v1326
        %1419 = vmatprep.subr.mxu0 0.0
        %1420 = vmatpush1.msra.mxu0 %v1327
        %1421 = vmatprep.subr.mxu0 0.0
        %1422 = vmatpush1.msra.mxu0 %v1328
        %1423 = vmatprep.subr.mxu0 0.0
        %1424 = vmatpush1.msra.mxu0 %v1329
        %1425 = vmatprep.subr.mxu0 0.0
        %1426 = vmatpush1.msra.mxu0 %v1330
        %1427 = vmatprep.subr.mxu0 0.0
        %1428 = vmatpush1.msra.mxu0 %v1331
        %1429 = vmatprep.subr.mxu0 0.0
        %1430 = vmatpush1.msra.mxu0 %v1332
        %1431 = vmatprep.subr.mxu0 0.0
        %1432 = vmatpush1.msra.mxu0 0.0
        %1433 = vmatprep.subr.mxu0 0.0
        %1434 = vmatpush1.msra.mxu0 0.0
        %1435 = vmatprep.subr.mxu0 0.0
        %1436 = vmatpush1.msra.mxu0 0.0
        %1437 = vmatprep.subr.mxu0 0.0
        %1438 = vmatpush1.msra.mxu0 0.0
        %1439 = vmatprep.subr.mxu0 0.0
        %1440 = vmatpush1.msra.mxu0 0.0
        %1441 = vmatprep.subr.mxu0 0.0
        %1442 = vmatpush1.msra.mxu0 0.0
        %1443 = vmatprep.subr.mxu0 0.0
        %1444 = vmatpush1.msra.mxu0 0.0
        %1445 = vmatprep.subr.mxu0 0.0
        %1446 = vmatpush1.msra.mxu0 0.0
        %1447 = vmatprep.subr.mxu0 0.0
        %1448 = vmatpush1.msra.mxu0 0.0
        %1449 = vmatprep.subr.mxu0 0.0
        %1450 = vmatpush1.msra.mxu0 0.0
        %1451 = vmatprep.subr.mxu0 0.0
        %1452 = vmatpush1.msra.mxu0 0.0
        %1453 = vmatprep.subr.mxu0 0.0
        %1454 = vmatpush1.msra.mxu0 0.0
        %1455 = vmatprep.subr.mxu0 0.0
        %1456 = vmatpush1.msra.mxu0 0.0
        %1457 = vmatprep.subr.mxu0 0.0
        %1458 = vmatpush1.msra.mxu0 0.0
        %1459 = vmatprep.subr.mxu0 0.0
        %1460 = vmatpush1.msra.mxu0 0.0
        %1461 = vmatprep.subr.mxu0 0.0
        %1462 = vmatpush1.msra.mxu0 0.0
        %1463 = vmatprep.subr.mxu0 0.0
        %1464 = vmatpush1.msra.mxu0 0.0
        %1465 = vmatprep.subr.mxu0 0.0
        %1466 = vmatpush1.msra.mxu0 0.0
        %1467 = vmatprep.subr.mxu0 0.0
        %1468 = vmatpush1.msra.mxu0 0.0
        %1469 = vmatprep.subr.mxu0 0.0
        %1470 = vmatpush1.msra.mxu0 0.0
        %1471 = vmatprep.subr.mxu0 0.0
        %1472 = vmatpush1.msra.mxu0 0.0
        %1473 = vmatprep.subr.mxu0 0.0
        %1474 = vmatpush1.msra.mxu0 0.0
        %1475 = vmatprep.subr.mxu0 0.0
        %1476 = vmatpush1.msra.mxu0 0.0
        %1477 = vmatprep.subr.mxu0 0.0
        %1478 = vmatpush1.msra.mxu0 0.0
        %1479 = vmatprep.mubr.f32.mxu0 0.0
        %1480 = vmatmul.mubr.f32.gmra.mrb[0].mxu0 %v1392
        %v1481 = vpop.f32.mrb[0].mxu0
        %v1482 = vadd.f32 %v1354, %v1481
        %v1483 = vpop.f32.mrb[0].mxu0
        %1484 = vmatprep.mubr.f32.mxu0 0.0
        %1485 = vmatmul.mubr.f32.gmra.mrb[0].mxu0 %v1395
        %v1486 = vpop.f32.mrb[0].mxu0
        %v1487 = vadd.f32 %v1359, %v1486
        %v1488 = vpop.f32.mrb[0].mxu0
        %1489 = vmatprep.mubr.f32.mxu0 0.0
        %1490 = vmatmul.mubr.f32.gmra.mrb[0].mxu0 %v1398
        %v1491 = vpop.f32.mrb[0].mxu0
        %v1492 = vadd.f32 %v1364, %v1491
        %v1493 = vpop.f32.mrb[0].mxu0
        %1494 = vmatprep.mubr.f32.mxu0 0.0
        %1495 = vmatmul.mubr.f32.gmra.mrb[0].mxu0 %v1401
        %v1496 = vpop.f32.mrb[0].mxu0
        %v1497 = vadd.f32 %v1369, %v1496
        %v1498 = vpop.f32.mrb[0].mxu0
        %1499 = vmatprep.mubr.f32.mxu0 0.0
        %1500 = vmatmul.mubr.f32.gmra.mrb[0].mxu0 %v1404
        %v1501 = vpop.f32.mrb[0].mxu0
        %v1502 = vadd.f32 %v1374, %v1501
        %v1503 = vpop.f32.mrb[0].mxu0
        %1504 = vmatprep.mubr.f32.mxu0 0.0
        %1505 = vmatmul.mubr.f32.gmra.mrb[0].mxu0 %v1407
        %v1506 = vpop.f32.mrb[0].mxu0
        %v1507 = vadd.f32 %v1379, %v1506
        %v1508 = vpop.f32.mrb[0].mxu0
        %1509 = vmatprep.mubr.f32.mxu0 0.0
        %1510 = vmatmul.mubr.f32.gmra.mrb[0].mxu0 %v1410
        %v1511 = vpop.f32.mrb[0].mxu0
        %v1512 = vadd.f32 %v1384, %v1511
        %v1513 = vpop.f32.mrb[0].mxu0
        %1514 = vmatprep.mubr.f32.mxu0 0.0
        %1515 = vmatmul.mubr.f32.gmra.mrb[0].mxu0 %v1413
        %v1516 = vpop.f32.mrb[0].mxu0
        %v1517 = vadd.f32 %v1389, %v1516
        %v1518 = vpop.f32.mrb[0].mxu0
        %1519 = vdwg.mxu0
        %v1520 = vmax.f32 %v1482, 0.0
        %v1521 = vmax.f32 %v1487, 0.0
        %v1522 = vmax.f32 %v1492, 0.0
        %v1523 = vmax.f32 %v1497, 0.0
        %v1524 = vmax.f32 %v1502, 0.0
        %v1525 = vmax.f32 %v1507, 0.0
        %v1526 = vmax.f32 %v1512, 0.0
        %v1527 = vmax.f32 %v1517, 0.0
        %s1528 = scalar_lea.vmem %s7, 2
        %v1529 = vld [vmem:[%s1528] sm:$0x3]
        %s1530 = scalar_lea.vmem %s8, 2
        %v1531 = vld [vmem:[%s1530] sm:$0x3]
        %1533 = vset.pattern.permute.xlu0 0
        %1534 = vperm.xlu0 %1533, %v1531
        %v1535 = vpop.permute.xlu0 %1534
        %v1538 = vsel %vm589, %v1529, 0
        %1540 = vmatprep.subr.mxu0 0.0
        %1541 = vmatpush1.msra.mxu0 %v1520
        %1542 = vmatprep.subr.mxu0 0.0
        %1543 = vmatpush1.msra.mxu0 %v1521
        %1544 = vmatprep.subr.mxu0 0.0
        %1545 = vmatpush1.msra.mxu0 %v1522
        %1546 = vmatprep.subr.mxu0 0.0
        %1547 = vmatpush1.msra.mxu0 %v1523
        %1548 = vmatprep.subr.mxu0 0.0
        %1549 = vmatpush1.msra.mxu0 %v1524
        %1550 = vmatprep.subr.mxu0 0.0
        %1551 = vmatpush1.msra.mxu0 %v1525
        %1552 = vmatprep.subr.mxu0 0.0
        %1553 = vmatpush1.msra.mxu0 %v1526
        %1554 = vmatprep.subr.mxu0 0.0
        %1555 = vmatpush1.msra.mxu0 %v1527
        %1556 = vmatprep.subr.mxu0 0.0
        %1557 = vmatpush1.msra.mxu0 0.0
        %1558 = vmatprep.subr.mxu0 0.0
        %1559 = vmatpush1.msra.mxu0 0.0
        %1560 = vmatprep.subr.mxu0 0.0
        %1561 = vmatpush1.msra.mxu0 0.0
        %1562 = vmatprep.subr.mxu0 0.0
        %1563 = vmatpush1.msra.mxu0 0.0
        %1564 = vmatprep.subr.mxu0 0.0
        %1565 = vmatpush1.msra.mxu0 0.0
        %1566 = vmatprep.subr.mxu0 0.0
        %1567 = vmatpush1.msra.mxu0 0.0
        %1568 = vmatprep.subr.mxu0 0.0
        %1569 = vmatpush1.msra.mxu0 0.0
        %1570 = vmatprep.subr.mxu0 0.0
        %1571 = vmatpush1.msra.mxu0 0.0
        %1572 = vmatprep.subr.mxu0 0.0
        %1573 = vmatpush1.msra.mxu0 0.0
        %1574 = vmatprep.subr.mxu0 0.0
        %1575 = vmatpush1.msra.mxu0 0.0
        %1576 = vmatprep.subr.mxu0 0.0
        %1577 = vmatpush1.msra.mxu0 0.0
        %1578 = vmatprep.subr.mxu0 0.0
        %1579 = vmatpush1.msra.mxu0 0.0
        %1580 = vmatprep.subr.mxu0 0.0
        %1581 = vmatpush1.msra.mxu0 0.0
        %1582 = vmatprep.subr.mxu0 0.0
        %1583 = vmatpush1.msra.mxu0 0.0
        %1584 = vmatprep.subr.mxu0 0.0
        %1585 = vmatpush1.msra.mxu0 0.0
        %1586 = vmatprep.subr.mxu0 0.0
        %1587 = vmatpush1.msra.mxu0 0.0
        %1588 = vmatprep.subr.mxu0 0.0
        %1589 = vmatpush1.msra.mxu0 0.0
        %1590 = vmatprep.subr.mxu0 0.0
        %1591 = vmatpush1.msra.mxu0 0.0
        %1592 = vmatprep.subr.mxu0 0.0
        %1593 = vmatpush1.msra.mxu0 0.0
        %1594 = vmatprep.subr.mxu0 0.0
        %1595 = vmatpush1.msra.mxu0 0.0
        %1596 = vmatprep.subr.mxu0 0.0
        %1597 = vmatpush1.msra.mxu0 0.0
        %1598 = vmatprep.subr.mxu0 0.0
        %1599 = vmatpush1.msra.mxu0 0.0
        %1600 = vmatprep.subr.mxu0 0.0
        %1601 = vmatpush1.msra.mxu0 0.0
        %1602 = vmatprep.subr.mxu0 0.0
        %1603 = vmatpush1.msra.mxu0 0.0
        %1604 = vmatprep.mubr.f32.mxu0 0.0
        %1605 = vmatmul.mubr.f32.gmra.mrb[0].mxu0 %v1538
        %v1606 = vpop.f32.mrb[0].mxu0
        %v1607 = vadd.f32 %v1535, %v1606
        %v1608 = vpop.f32.mrb[0].mxu0
        %1609 = vdwg.mxu0
        %v1610 = vtanh.pop %v1607
        %s1611 = sld [smem:[#allocation2 + $0x1]]
        %v1612 = vstv %s1611
        %v1613 = vmul.f32 %v1612, %v1610
        %v1614 = vmul.f32 %v1613, 1.442695
        %v1615 = vpow.pop %v1614
        %v1616 = vmul.f32 %v1615, %v407
        %v1618 = vrot.slane %v1610, 1
        %v1620 = vadd.f32 %v1616, %v1618
        %1621 = vst [vmem:[%s402 + $0x1] sm:$0x1] %v1613
        %s1622 = scalar_lea.vmem %s1, 128
        %v1623 = vld [vmem:[%s1622] sm:$0xff]
        %v1624 = vld [vmem:[%s1622 + $0x8] sm:$0xff]
        %v1625 = vld [vmem:[%s1622 + $0x10] sm:$0xff]
        %v1626 = vld [vmem:[%s1622 + $0x18] sm:$0xff]
        %v1627 = vld [vmem:[%s1622 + $0x20] sm:$0xff]
        %v1628 = vld [vmem:[%s1622 + $0x28] sm:$0xff]
        %v1629 = vld [vmem:[%s1622 + $0x30] sm:$0xff]
        %v1630 = vld [vmem:[%s1622 + $0x38] sm:$0xff]
        %1632 = vset.pattern.permute.xlu0 0
        %1633 = vperm.xlu0 %1632, %v1623
        %v1634 = vpop.permute.xlu0 %1633
        %1637 = vset.pattern.permute.xlu0 0
        %1638 = vperm.xlu0 %1637, %v1624
        %v1639 = vpop.permute.xlu0 %1638
        %1642 = vset.pattern.permute.xlu0 0
        %1643 = vperm.xlu0 %1642, %v1625
        %v1644 = vpop.permute.xlu0 %1643
        %1647 = vset.pattern.permute.xlu0 0
        %1648 = vperm.xlu0 %1647, %v1626
        %v1649 = vpop.permute.xlu0 %1648
        %1652 = vset.pattern.permute.xlu0 0
        %1653 = vperm.xlu0 %1652, %v1627
        %v1654 = vpop.permute.xlu0 %1653
        %1657 = vset.pattern.permute.xlu0 0
        %1658 = vperm.xlu0 %1657, %v1628
        %v1659 = vpop.permute.xlu0 %1658
        %1662 = vset.pattern.permute.xlu0 0
        %1663 = vperm.xlu0 %1662, %v1629
        %v1664 = vpop.permute.xlu0 %1663
        %1667 = vset.pattern.permute.xlu0 0
        %1668 = vperm.xlu0 %1667, %v1630
        %v1669 = vpop.permute.xlu0 %1668
        %v1671 = vlaneseq
        %v1672 = vshrl.u32 %v1671, 7
        %v1673 = vsub.s32 0, %v1672
        %v1674 = vrot.slane %v1620, %v1673
        %v1675 = vmul.f32 %v1634, %v1674
        %v1676 = vmul.f32 %v1639, %v1674
        %v1677 = vmul.f32 %v1644, %v1674
        %v1678 = vmul.f32 %v1649, %v1674
        %v1679 = vmul.f32 %v1654, %v1674
        %v1680 = vmul.f32 %v1659, %v1674
        %v1681 = vmul.f32 %v1664, %v1674
        %v1682 = vmul.f32 %v1669, %v1674
        %s1683 = scalar_lea.vmem %s2, 128
        %v1684 = vld [vmem:[%s1683] sm:$0xff]
        %v1685 = vld [vmem:[%s1683 + $0x8] sm:$0xff]
        %v1686 = vld [vmem:[%s1683 + $0x10] sm:$0xff]
        %v1687 = vld [vmem:[%s1683 + $0x18] sm:$0xff]
        %v1688 = vld [vmem:[%s1683 + $0x20] sm:$0xff]
        %v1689 = vld [vmem:[%s1683 + $0x28] sm:$0xff]
        %v1690 = vld [vmem:[%s1683 + $0x30] sm:$0xff]
        %v1691 = vld [vmem:[%s1683 + $0x38] sm:$0xff]
        %1693 = vset.pattern.permute.xlu0 0
        %1694 = vperm.xlu0 %1693, %v1684
        %v1695 = vpop.permute.xlu0 %1694
        %1698 = vset.pattern.permute.xlu0 0
        %1699 = vperm.xlu0 %1698, %v1685
        %v1700 = vpop.permute.xlu0 %1699
        %1703 = vset.pattern.permute.xlu0 0
        %1704 = vperm.xlu0 %1703, %v1686
        %v1705 = vpop.permute.xlu0 %1704
        %1708 = vset.pattern.permute.xlu0 0
        %1709 = vperm.xlu0 %1708, %v1687
        %v1710 = vpop.permute.xlu0 %1709
        %1713 = vset.pattern.permute.xlu0 0
        %1714 = vperm.xlu0 %1713, %v1688
        %v1715 = vpop.permute.xlu0 %1714
        %1718 = vset.pattern.permute.xlu0 0
        %1719 = vperm.xlu0 %1718, %v1689
        %v1720 = vpop.permute.xlu0 %1719
        %1723 = vset.pattern.permute.xlu0 0
        %1724 = vperm.xlu0 %1723, %v1690
        %v1725 = vpop.permute.xlu0 %1724
        %1728 = vset.pattern.permute.xlu0 0
        %1729 = vperm.xlu0 %1728, %v1691
        %v1730 = vpop.permute.xlu0 %1729
        %v1732 = vadd.f32 %v1675, %v1695
        %v1733 = vadd.f32 %v1676, %v1700
        %v1734 = vadd.f32 %v1677, %v1705
        %v1735 = vadd.f32 %v1678, %v1710
        %v1736 = vadd.f32 %v1679, %v1715
        %v1737 = vadd.f32 %v1680, %v1720
        %v1738 = vadd.f32 %v1681, %v1725
        %v1739 = vadd.f32 %v1682, %v1730
        %v1740 = vmax.f32 %v1732, 0.0
        %v1741 = vmax.f32 %v1733, 0.0
        %v1742 = vmax.f32 %v1734, 0.0
        %v1743 = vmax.f32 %v1735, 0.0
        %v1744 = vmax.f32 %v1736, 0.0
        %v1745 = vmax.f32 %v1737, 0.0
        %v1746 = vmax.f32 %v1738, 0.0
        %v1747 = vmax.f32 %v1739, 0.0
        %s1748 = scalar_lea.vmem %s3, 128
        %v1749 = vld [vmem:[%s1748] sm:$0xff]
        %v1750 = vld [vmem:[%s1748 + $0x8] sm:$0xff]
        %v1751 = vld [vmem:[%s1748 + $0x10] sm:$0xff]
        %v1752 = vld [vmem:[%s1748 + $0x18] sm:$0xff]
        %v1753 = vld [vmem:[%s1748 + $0x20] sm:$0xff]
        %v1754 = vld [vmem:[%s1748 + $0x28] sm:$0xff]
        %v1755 = vld [vmem:[%s1748 + $0x30] sm:$0xff]
        %v1756 = vld [vmem:[%s1748 + $0x38] sm:$0xff]
        %s1757 = scalar_lea.vmem %s4, 128
        %v1758 = vld [vmem:[%s1757] sm:$0xff]
        %v1759 = vld [vmem:[%s1757 + $0x8] sm:$0xff]
        %v1760 = vld [vmem:[%s1757 + $0x10] sm:$0xff]
        %v1761 = vld [vmem:[%s1757 + $0x18] sm:$0xff]
        %v1762 = vld [vmem:[%s1757 + $0x20] sm:$0xff]
        %v1763 = vld [vmem:[%s1757 + $0x28] sm:$0xff]
        %v1764 = vld [vmem:[%s1757 + $0x30] sm:$0xff]
        %v1765 = vld [vmem:[%s1757 + $0x38] sm:$0xff]
        %1767 = vset.pattern.permute.xlu0 0
        %1768 = vperm.xlu0 %1767, %v1758
        %v1769 = vpop.permute.xlu0 %1768
        %1772 = vset.pattern.permute.xlu0 0
        %1773 = vperm.xlu0 %1772, %v1759
        %v1774 = vpop.permute.xlu0 %1773
        %1777 = vset.pattern.permute.xlu0 0
        %1778 = vperm.xlu0 %1777, %v1760
        %v1779 = vpop.permute.xlu0 %1778
        %1782 = vset.pattern.permute.xlu0 0
        %1783 = vperm.xlu0 %1782, %v1761
        %v1784 = vpop.permute.xlu0 %1783
        %1787 = vset.pattern.permute.xlu0 0
        %1788 = vperm.xlu0 %1787, %v1762
        %v1789 = vpop.permute.xlu0 %1788
        %1792 = vset.pattern.permute.xlu0 0
        %1793 = vperm.xlu0 %1792, %v1763
        %v1794 = vpop.permute.xlu0 %1793
        %1797 = vset.pattern.permute.xlu0 0
        %1798 = vperm.xlu0 %1797, %v1764
        %v1799 = vpop.permute.xlu0 %1798
        %1802 = vset.pattern.permute.xlu0 0
        %1803 = vperm.xlu0 %1802, %v1765
        %v1804 = vpop.permute.xlu0 %1803
        %v1807 = vsel %vm589, %v1749, 0
        %v1810 = vsel %vm589, %v1750, 0
        %v1813 = vsel %vm589, %v1751, 0
        %v1816 = vsel %vm589, %v1752, 0
        %v1819 = vsel %vm589, %v1753, 0
        %v1822 = vsel %vm589, %v1754, 0
        %v1825 = vsel %vm589, %v1755, 0
        %v1828 = vsel %vm589, %v1756, 0
        %1830 = vmatprep.subr.mxu0 0.0
        %1831 = vmatpush1.msra.mxu0 %v1740
        %1832 = vmatprep.subr.mxu0 0.0
        %1833 = vmatpush1.msra.mxu0 %v1741
        %1834 = vmatprep.subr.mxu0 0.0
        %1835 = vmatpush1.msra.mxu0 %v1742
        %1836 = vmatprep.subr.mxu0 0.0
        %1837 = vmatpush1.msra.mxu0 %v1743
        %1838 = vmatprep.subr.mxu0 0.0
        %1839 = vmatpush1.msra.mxu0 %v1744
        %1840 = vmatprep.subr.mxu0 0.0
        %1841 = vmatpush1.msra.mxu0 %v1745
        %1842 = vmatprep.subr.mxu0 0.0
        %1843 = vmatpush1.msra.mxu0 %v1746
        %1844 = vmatprep.subr.mxu0 0.0
        %1845 = vmatpush1.msra.mxu0 %v1747
        %1846 = vmatprep.subr.mxu0 0.0
        %1847 = vmatpush1.msra.mxu0 0.0
        %1848 = vmatprep.subr.mxu0 0.0
        %1849 = vmatpush1.msra.mxu0 0.0
        %1850 = vmatprep.subr.mxu0 0.0
        %1851 = vmatpush1.msra.mxu0 0.0
        %1852 = vmatprep.subr.mxu0 0.0
        %1853 = vmatpush1.msra.mxu0 0.0
        %1854 = vmatprep.subr.mxu0 0.0
        %1855 = vmatpush1.msra.mxu0 0.0
        %1856 = vmatprep.subr.mxu0 0.0
        %1857 = vmatpush1.msra.mxu0 0.0
        %1858 = vmatprep.subr.mxu0 0.0
        %1859 = vmatpush1.msra.mxu0 0.0
        %1860 = vmatprep.subr.mxu0 0.0
        %1861 = vmatpush1.msra.mxu0 0.0
        %1862 = vmatprep.subr.mxu0 0.0
        %1863 = vmatpush1.msra.mxu0 0.0
        %1864 = vmatprep.subr.mxu0 0.0
        %1865 = vmatpush1.msra.mxu0 0.0
        %1866 = vmatprep.subr.mxu0 0.0
        %1867 = vmatpush1.msra.mxu0 0.0
        %1868 = vmatprep.subr.mxu0 0.0
        %1869 = vmatpush1.msra.mxu0 0.0
        %1870 = vmatprep.subr.mxu0 0.0
        %1871 = vmatpush1.msra.mxu0 0.0
        %1872 = vmatprep.subr.mxu0 0.0
        %1873 = vmatpush1.msra.mxu0 0.0
        %1874 = vmatprep.subr.mxu0 0.0
        %1875 = vmatpush1.msra.mxu0 0.0
        %1876 = vmatprep.subr.mxu0 0.0
        %1877 = vmatpush1.msra.mxu0 0.0
        %1878 = vmatprep.subr.mxu0 0.0
        %1879 = vmatpush1.msra.mxu0 0.0
        %1880 = vmatprep.subr.mxu0 0.0
        %1881 = vmatpush1.msra.mxu0 0.0
        %1882 = vmatprep.subr.mxu0 0.0
        %1883 = vmatpush1.msra.mxu0 0.0
        %1884 = vmatprep.subr.mxu0 0.0
        %1885 = vmatpush1.msra.mxu0 0.0
        %1886 = vmatprep.subr.mxu0 0.0
        %1887 = vmatpush1.msra.mxu0 0.0
        %1888 = vmatprep.subr.mxu0 0.0
        %1889 = vmatpush1.msra.mxu0 0.0
        %1890 = vmatprep.subr.mxu0 0.0
        %1891 = vmatpush1.msra.mxu0 0.0
        %1892 = vmatprep.subr.mxu0 0.0
        %1893 = vmatpush1.msra.mxu0 0.0
        %1894 = vmatprep.mubr.f32.mxu0 0.0
        %1895 = vmatmul.mubr.f32.gmra.mrb[0].mxu0 %v1807
        %v1896 = vpop.f32.mrb[0].mxu0
        %v1897 = vadd.f32 %v1769, %v1896
        %v1898 = vpop.f32.mrb[0].mxu0
        %1899 = vmatprep.mubr.f32.mxu0 0.0
        %1900 = vmatmul.mubr.f32.gmra.mrb[0].mxu0 %v1810
        %v1901 = vpop.f32.mrb[0].mxu0
        %v1902 = vadd.f32 %v1774, %v1901
        %v1903 = vpop.f32.mrb[0].mxu0
        %1904 = vmatprep.mubr.f32.mxu0 0.0
        %1905 = vmatmul.mubr.f32.gmra.mrb[0].mxu0 %v1813
        %v1906 = vpop.f32.mrb[0].mxu0
        %v1907 = vadd.f32 %v1779, %v1906
        %v1908 = vpop.f32.mrb[0].mxu0
        %1909 = vmatprep.mubr.f32.mxu0 0.0
        %1910 = vmatmul.mubr.f32.gmra.mrb[0].mxu0 %v1816
        %v1911 = vpop.f32.mrb[0].mxu0
        %v1912 = vadd.f32 %v1784, %v1911
        %v1913 = vpop.f32.mrb[0].mxu0
        %1914 = vmatprep.mubr.f32.mxu0 0.0
        %1915 = vmatmul.mubr.f32.gmra.mrb[0].mxu0 %v1819
        %v1916 = vpop.f32.mrb[0].mxu0
        %v1917 = vadd.f32 %v1789, %v1916
        %v1918 = vpop.f32.mrb[0].mxu0
        %1919 = vmatprep.mubr.f32.mxu0 0.0
        %1920 = vmatmul.mubr.f32.gmra.mrb[0].mxu0 %v1822
        %v1921 = vpop.f32.mrb[0].mxu0
        %v1922 = vadd.f32 %v1794, %v1921
        %v1923 = vpop.f32.mrb[0].mxu0
        %1924 = vmatprep.mubr.f32.mxu0 0.0
        %1925 = vmatmul.mubr.f32.gmra.mrb[0].mxu0 %v1825
        %v1926 = vpop.f32.mrb[0].mxu0
        %v1927 = vadd.f32 %v1799, %v1926
        %v1928 = vpop.f32.mrb[0].mxu0
        %1929 = vmatprep.mubr.f32.mxu0 0.0
        %1930 = vmatmul.mubr.f32.gmra.mrb[0].mxu0 %v1828
        %v1931 = vpop.f32.mrb[0].mxu0
        %v1932 = vadd.f32 %v1804, %v1931
        %v1933 = vpop.f32.mrb[0].mxu0
        %1934 = vdwg.mxu0
        %v1935 = vmax.f32 %v1897, 0.0
        %v1936 = vmax.f32 %v1902, 0.0
        %v1937 = vmax.f32 %v1907, 0.0
        %v1938 = vmax.f32 %v1912, 0.0
        %v1939 = vmax.f32 %v1917, 0.0
        %v1940 = vmax.f32 %v1922, 0.0
        %v1941 = vmax.f32 %v1927, 0.0
        %v1942 = vmax.f32 %v1932, 0.0
        %s1943 = scalar_lea.vmem %s5, 128
        %v1944 = vld [vmem:[%s1943] sm:$0xff]
        %v1945 = vld [vmem:[%s1943 + $0x8] sm:$0xff]
        %v1946 = vld [vmem:[%s1943 + $0x10] sm:$0xff]
        %v1947 = vld [vmem:[%s1943 + $0x18] sm:$0xff]
        %v1948 = vld [vmem:[%s1943 + $0x20] sm:$0xff]
        %v1949 = vld [vmem:[%s1943 + $0x28] sm:$0xff]
        %v1950 = vld [vmem:[%s1943 + $0x30] sm:$0xff]
        %v1951 = vld [vmem:[%s1943 + $0x38] sm:$0xff]
        %s1952 = scalar_lea.vmem %s6, 128
        %v1953 = vld [vmem:[%s1952] sm:$0xff]
        %v1954 = vld [vmem:[%s1952 + $0x8] sm:$0xff]
        %v1955 = vld [vmem:[%s1952 + $0x10] sm:$0xff]
        %v1956 = vld [vmem:[%s1952 + $0x18] sm:$0xff]
        %v1957 = vld [vmem:[%s1952 + $0x20] sm:$0xff]
        %v1958 = vld [vmem:[%s1952 + $0x28] sm:$0xff]
        %v1959 = vld [vmem:[%s1952 + $0x30] sm:$0xff]
        %v1960 = vld [vmem:[%s1952 + $0x38] sm:$0xff]
        %1962 = vset.pattern.permute.xlu0 0
        %1963 = vperm.xlu0 %1962, %v1953
        %v1964 = vpop.permute.xlu0 %1963
        %1967 = vset.pattern.permute.xlu0 0
        %1968 = vperm.xlu0 %1967, %v1954
        %v1969 = vpop.permute.xlu0 %1968
        %1972 = vset.pattern.permute.xlu0 0
        %1973 = vperm.xlu0 %1972, %v1955
        %v1974 = vpop.permute.xlu0 %1973
        %1977 = vset.pattern.permute.xlu0 0
        %1978 = vperm.xlu0 %1977, %v1956
        %v1979 = vpop.permute.xlu0 %1978
        %1982 = vset.pattern.permute.xlu0 0
        %1983 = vperm.xlu0 %1982, %v1957
        %v1984 = vpop.permute.xlu0 %1983
        %1987 = vset.pattern.permute.xlu0 0
        %1988 = vperm.xlu0 %1987, %v1958
        %v1989 = vpop.permute.xlu0 %1988
        %1992 = vset.pattern.permute.xlu0 0
        %1993 = vperm.xlu0 %1992, %v1959
        %v1994 = vpop.permute.xlu0 %1993
        %1997 = vset.pattern.permute.xlu0 0
        %1998 = vperm.xlu0 %1997, %v1960
        %v1999 = vpop.permute.xlu0 %1998
        %v2002 = vsel %vm589, %v1944, 0
        %v2005 = vsel %vm589, %v1945, 0
        %v2008 = vsel %vm589, %v1946, 0
        %v2011 = vsel %vm589, %v1947, 0
        %v2014 = vsel %vm589, %v1948, 0
        %v2017 = vsel %vm589, %v1949, 0
        %v2020 = vsel %vm589, %v1950, 0
        %v2023 = vsel %vm589, %v1951, 0
        %2025 = vmatprep.subr.mxu0 0.0
        %2026 = vmatpush1.msra.mxu0 %v1935
        %2027 = vmatprep.subr.mxu0 0.0
        %2028 = vmatpush1.msra.mxu0 %v1936
        %2029 = vmatprep.subr.mxu0 0.0
        %2030 = vmatpush1.msra.mxu0 %v1937
        %2031 = vmatprep.subr.mxu0 0.0
        %2032 = vmatpush1.msra.mxu0 %v1938
        %2033 = vmatprep.subr.mxu0 0.0
        %2034 = vmatpush1.msra.mxu0 %v1939
        %2035 = vmatprep.subr.mxu0 0.0
        %2036 = vmatpush1.msra.mxu0 %v1940
        %2037 = vmatprep.subr.mxu0 0.0
        %2038 = vmatpush1.msra.mxu0 %v1941
        %2039 = vmatprep.subr.mxu0 0.0
        %2040 = vmatpush1.msra.mxu0 %v1942
        %2041 = vmatprep.subr.mxu0 0.0
        %2042 = vmatpush1.msra.mxu0 0.0
        %2043 = vmatprep.subr.mxu0 0.0
        %2044 = vmatpush1.msra.mxu0 0.0
        %2045 = vmatprep.subr.mxu0 0.0
        %2046 = vmatpush1.msra.mxu0 0.0
        %2047 = vmatprep.subr.mxu0 0.0
        %2048 = vmatpush1.msra.mxu0 0.0
        %2049 = vmatprep.subr.mxu0 0.0
        %2050 = vmatpush1.msra.mxu0 0.0
        %2051 = vmatprep.subr.mxu0 0.0
        %2052 = vmatpush1.msra.mxu0 0.0
        %2053 = vmatprep.subr.mxu0 0.0
        %2054 = vmatpush1.msra.mxu0 0.0
        %2055 = vmatprep.subr.mxu0 0.0
        %2056 = vmatpush1.msra.mxu0 0.0
        %2057 = vmatprep.subr.mxu0 0.0
        %2058 = vmatpush1.msra.mxu0 0.0
        %2059 = vmatprep.subr.mxu0 0.0
        %2060 = vmatpush1.msra.mxu0 0.0
        %2061 = vmatprep.subr.mxu0 0.0
        %2062 = vmatpush1.msra.mxu0 0.0
        %2063 = vmatprep.subr.mxu0 0.0
        %2064 = vmatpush1.msra.mxu0 0.0
        %2065 = vmatprep.subr.mxu0 0.0
        %2066 = vmatpush1.msra.mxu0 0.0
        %2067 = vmatprep.subr.mxu0 0.0
        %2068 = vmatpush1.msra.mxu0 0.0
        %2069 = vmatprep.subr.mxu0 0.0
        %2070 = vmatpush1.msra.mxu0 0.0
        %2071 = vmatprep.subr.mxu0 0.0
        %2072 = vmatpush1.msra.mxu0 0.0
        %2073 = vmatprep.subr.mxu0 0.0
        %2074 = vmatpush1.msra.mxu0 0.0
        %2075 = vmatprep.subr.mxu0 0.0
        %2076 = vmatpush1.msra.mxu0 0.0
        %2077 = vmatprep.subr.mxu0 0.0
        %2078 = vmatpush1.msra.mxu0 0.0
        %2079 = vmatprep.subr.mxu0 0.0
        %2080 = vmatpush1.msra.mxu0 0.0
        %2081 = vmatprep.subr.mxu0 0.0
        %2082 = vmatpush1.msra.mxu0 0.0
        %2083 = vmatprep.subr.mxu0 0.0
        %2084 = vmatpush1.msra.mxu0 0.0
        %2085 = vmatprep.subr.mxu0 0.0
        %2086 = vmatpush1.msra.mxu0 0.0
        %2087 = vmatprep.subr.mxu0 0.0
        %2088 = vmatpush1.msra.mxu0 0.0
        %2089 = vmatprep.mubr.f32.mxu0 0.0
        %2090 = vmatmul.mubr.f32.gmra.mrb[0].mxu0 %v2002
        %v2091 = vpop.f32.mrb[0].mxu0
        %v2092 = vadd.f32 %v1964, %v2091
        %v2093 = vpop.f32.mrb[0].mxu0
        %2094 = vmatprep.mubr.f32.mxu0 0.0
        %2095 = vmatmul.mubr.f32.gmra.mrb[0].mxu0 %v2005
        %v2096 = vpop.f32.mrb[0].mxu0
        %v2097 = vadd.f32 %v1969, %v2096
        %v2098 = vpop.f32.mrb[0].mxu0
        %2099 = vmatprep.mubr.f32.mxu0 0.0
        %2100 = vmatmul.mubr.f32.gmra.mrb[0].mxu0 %v2008
        %v2101 = vpop.f32.mrb[0].mxu0
        %v2102 = vadd.f32 %v1974, %v2101
        %v2103 = vpop.f32.mrb[0].mxu0
        %2104 = vmatprep.mubr.f32.mxu0 0.0
        %2105 = vmatmul.mubr.f32.gmra.mrb[0].mxu0 %v2011
        %v2106 = vpop.f32.mrb[0].mxu0
        %v2107 = vadd.f32 %v1979, %v2106
        %v2108 = vpop.f32.mrb[0].mxu0
        %2109 = vmatprep.mubr.f32.mxu0 0.0
        %2110 = vmatmul.mubr.f32.gmra.mrb[0].mxu0 %v2014
        %v2111 = vpop.f32.mrb[0].mxu0
        %v2112 = vadd.f32 %v1984, %v2111
        %v2113 = vpop.f32.mrb[0].mxu0
        %2114 = vmatprep.mubr.f32.mxu0 0.0
        %2115 = vmatmul.mubr.f32.gmra.mrb[0].mxu0 %v2017
        %v2116 = vpop.f32.mrb[0].mxu0
        %v2117 = vadd.f32 %v1989, %v2116
        %v2118 = vpop.f32.mrb[0].mxu0
        %2119 = vmatprep.mubr.f32.mxu0 0.0
        %2120 = vmatmul.mubr.f32.gmra.mrb[0].mxu0 %v2020
        %v2121 = vpop.f32.mrb[0].mxu0
        %v2122 = vadd.f32 %v1994, %v2121
        %v2123 = vpop.f32.mrb[0].mxu0
        %2124 = vmatprep.mubr.f32.mxu0 0.0
        %2125 = vmatmul.mubr.f32.gmra.mrb[0].mxu0 %v2023
        %v2126 = vpop.f32.mrb[0].mxu0
        %v2127 = vadd.f32 %v1999, %v2126
        %v2128 = vpop.f32.mrb[0].mxu0
        %2129 = vdwg.mxu0
        %v2130 = vmax.f32 %v2092, 0.0
        %v2131 = vmax.f32 %v2097, 0.0
        %v2132 = vmax.f32 %v2102, 0.0
        %v2133 = vmax.f32 %v2107, 0.0
        %v2134 = vmax.f32 %v2112, 0.0
        %v2135 = vmax.f32 %v2117, 0.0
        %v2136 = vmax.f32 %v2122, 0.0
        %v2137 = vmax.f32 %v2127, 0.0
        %s2138 = scalar_lea.vmem %s7, 4
        %v2139 = vld [vmem:[%s2138] sm:$0x3]
        %s2140 = scalar_lea.vmem %s8, 4
        %v2141 = vld [vmem:[%s2140] sm:$0x3]
        %2143 = vset.pattern.permute.xlu0 0
        %2144 = vperm.xlu0 %2143, %v2141
        %v2145 = vpop.permute.xlu0 %2144
        %v2148 = vsel %vm589, %v2139, 0
        %2150 = vmatprep.subr.mxu0 0.0
        %2151 = vmatpush1.msra.mxu0 %v2130
        %2152 = vmatprep.subr.mxu0 0.0
        %2153 = vmatpush1.msra.mxu0 %v2131
        %2154 = vmatprep.subr.mxu0 0.0
        %2155 = vmatpush1.msra.mxu0 %v2132
        %2156 = vmatprep.subr.mxu0 0.0
        %2157 = vmatpush1.msra.mxu0 %v2133
        %2158 = vmatprep.subr.mxu0 0.0
        %2159 = vmatpush1.msra.mxu0 %v2134
        %2160 = vmatprep.subr.mxu0 0.0
        %2161 = vmatpush1.msra.mxu0 %v2135
        %2162 = vmatprep.subr.mxu0 0.0
        %2163 = vmatpush1.msra.mxu0 %v2136
        %2164 = vmatprep.subr.mxu0 0.0
        %2165 = vmatpush1.msra.mxu0 %v2137
        %2166 = vmatprep.subr.mxu0 0.0
        %2167 = vmatpush1.msra.mxu0 0.0
        %2168 = vmatprep.subr.mxu0 0.0
        %2169 = vmatpush1.msra.mxu0 0.0
        %2170 = vmatprep.subr.mxu0 0.0
        %2171 = vmatpush1.msra.mxu0 0.0
        %2172 = vmatprep.subr.mxu0 0.0
        %2173 = vmatpush1.msra.mxu0 0.0
        %2174 = vmatprep.subr.mxu0 0.0
        %2175 = vmatpush1.msra.mxu0 0.0
        %2176 = vmatprep.subr.mxu0 0.0
        %2177 = vmatpush1.msra.mxu0 0.0
        %2178 = vmatprep.subr.mxu0 0.0
        %2179 = vmatpush1.msra.mxu0 0.0
        %2180 = vmatprep.subr.mxu0 0.0
        %2181 = vmatpush1.msra.mxu0 0.0
        %2182 = vmatprep.subr.mxu0 0.0
        %2183 = vmatpush1.msra.mxu0 0.0
        %2184 = vmatprep.subr.mxu0 0.0
        %2185 = vmatpush1.msra.mxu0 0.0
        %2186 = vmatprep.subr.mxu0 0.0
        %2187 = vmatpush1.msra.mxu0 0.0
        %2188 = vmatprep.subr.mxu0 0.0
        %2189 = vmatpush1.msra.mxu0 0.0
        %2190 = vmatprep.subr.mxu0 0.0
        %2191 = vmatpush1.msra.mxu0 0.0
        %2192 = vmatprep.subr.mxu0 0.0
        %2193 = vmatpush1.msra.mxu0 0.0
        %2194 = vmatprep.subr.mxu0 0.0
        %2195 = vmatpush1.msra.mxu0 0.0
        %2196 = vmatprep.subr.mxu0 0.0
        %2197 = vmatpush1.msra.mxu0 0.0
        %2198 = vmatprep.subr.mxu0 0.0
        %2199 = vmatpush1.msra.mxu0 0.0
        %2200 = vmatprep.subr.mxu0 0.0
        %2201 = vmatpush1.msra.mxu0 0.0
        %2202 = vmatprep.subr.mxu0 0.0
        %2203 = vmatpush1.msra.mxu0 0.0
        %2204 = vmatprep.subr.mxu0 0.0
        %2205 = vmatpush1.msra.mxu0 0.0
        %2206 = vmatprep.subr.mxu0 0.0
        %2207 = vmatpush1.msra.mxu0 0.0
        %2208 = vmatprep.subr.mxu0 0.0
        %2209 = vmatpush1.msra.mxu0 0.0
        %2210 = vmatprep.subr.mxu0 0.0
        %2211 = vmatpush1.msra.mxu0 0.0
        %2212 = vmatprep.subr.mxu0 0.0
        %2213 = vmatpush1.msra.mxu0 0.0
        %2214 = vmatprep.mubr.f32.mxu0 0.0
        %2215 = vmatmul.mubr.f32.gmra.mrb[0].mxu0 %v2148
        %v2216 = vpop.f32.mrb[0].mxu0
        %v2217 = vadd.f32 %v2145, %v2216
        %v2218 = vpop.f32.mrb[0].mxu0
        %2219 = vdwg.mxu0
        %v2220 = vtanh.pop %v2217
        %s2221 = sld [smem:[#allocation2 + $0x2]]
        %v2222 = vstv %s2221
        %v2223 = vmul.f32 %v2222, %v2220
        %v2224 = vmul.f32 %v2223, 1.442695
        %v2225 = vpow.pop %v2224
        %v2226 = vmul.f32 %v2225, %v1010
        %v2228 = vrot.slane %v2220, 1
        %v2230 = vadd.f32 %v2226, %v2228
        %2231 = vst [vmem:[%s402 + $0x2] sm:$0x1] %v2223
        %s2232 = scalar_lea.vmem %s1, 192
        %v2233 = vld [vmem:[%s2232] sm:$0xff]
        %v2234 = vld [vmem:[%s2232 + $0x8] sm:$0xff]
        %v2235 = vld [vmem:[%s2232 + $0x10] sm:$0xff]
        %v2236 = vld [vmem:[%s2232 + $0x18] sm:$0xff]
        %v2237 = vld [vmem:[%s2232 + $0x20] sm:$0xff]
        %v2238 = vld [vmem:[%s2232 + $0x28] sm:$0xff]
        %v2239 = vld [vmem:[%s2232 + $0x30] sm:$0xff]
        %v2240 = vld [vmem:[%s2232 + $0x38] sm:$0xff]
        %2242 = vset.pattern.permute.xlu0 0
        %2243 = vperm.xlu0 %2242, %v2233
        %v2244 = vpop.permute.xlu0 %2243
        %2247 = vset.pattern.permute.xlu0 0
        %2248 = vperm.xlu0 %2247, %v2234
        %v2249 = vpop.permute.xlu0 %2248
        %2252 = vset.pattern.permute.xlu0 0
        %2253 = vperm.xlu0 %2252, %v2235
        %v2254 = vpop.permute.xlu0 %2253
        %2257 = vset.pattern.permute.xlu0 0
        %2258 = vperm.xlu0 %2257, %v2236
        %v2259 = vpop.permute.xlu0 %2258
        %2262 = vset.pattern.permute.xlu0 0
        %2263 = vperm.xlu0 %2262, %v2237
        %v2264 = vpop.permute.xlu0 %2263
        %2267 = vset.pattern.permute.xlu0 0
        %2268 = vperm.xlu0 %2267, %v2238
        %v2269 = vpop.permute.xlu0 %2268
        %2272 = vset.pattern.permute.xlu0 0
        %2273 = vperm.xlu0 %2272, %v2239
        %v2274 = vpop.permute.xlu0 %2273
        %2277 = vset.pattern.permute.xlu0 0
        %2278 = vperm.xlu0 %2277, %v2240
        %v2279 = vpop.permute.xlu0 %2278
        %v2281 = vlaneseq
        %v2282 = vshrl.u32 %v2281, 7
        %v2283 = vsub.s32 0, %v2282
        %v2284 = vrot.slane %v2230, %v2283
        %v2285 = vmul.f32 %v2244, %v2284
        %v2286 = vmul.f32 %v2249, %v2284
        %v2287 = vmul.f32 %v2254, %v2284
        %v2288 = vmul.f32 %v2259, %v2284
        %v2289 = vmul.f32 %v2264, %v2284
        %v2290 = vmul.f32 %v2269, %v2284
        %v2291 = vmul.f32 %v2274, %v2284
        %v2292 = vmul.f32 %v2279, %v2284
        %s2293 = scalar_lea.vmem %s2, 192
        %v2294 = vld [vmem:[%s2293] sm:$0xff]
        %v2295 = vld [vmem:[%s2293 + $0x8] sm:$0xff]
        %v2296 = vld [vmem:[%s2293 + $0x10] sm:$0xff]
        %v2297 = vld [vmem:[%s2293 + $0x18] sm:$0xff]
        %v2298 = vld [vmem:[%s2293 + $0x20] sm:$0xff]
        %v2299 = vld [vmem:[%s2293 + $0x28] sm:$0xff]
        %v2300 = vld [vmem:[%s2293 + $0x30] sm:$0xff]
        %v2301 = vld [vmem:[%s2293 + $0x38] sm:$0xff]
        %2303 = vset.pattern.permute.xlu0 0
        %2304 = vperm.xlu0 %2303, %v2294
        %v2305 = vpop.permute.xlu0 %2304
        %2308 = vset.pattern.permute.xlu0 0
        %2309 = vperm.xlu0 %2308, %v2295
        %v2310 = vpop.permute.xlu0 %2309
        %2313 = vset.pattern.permute.xlu0 0
        %2314 = vperm.xlu0 %2313, %v2296
        %v2315 = vpop.permute.xlu0 %2314
        %2318 = vset.pattern.permute.xlu0 0
        %2319 = vperm.xlu0 %2318, %v2297
        %v2320 = vpop.permute.xlu0 %2319
        %2323 = vset.pattern.permute.xlu0 0
        %2324 = vperm.xlu0 %2323, %v2298
        %v2325 = vpop.permute.xlu0 %2324
        %2328 = vset.pattern.permute.xlu0 0
        %2329 = vperm.xlu0 %2328, %v2299
        %v2330 = vpop.permute.xlu0 %2329
        %2333 = vset.pattern.permute.xlu0 0
        %2334 = vperm.xlu0 %2333, %v2300
        %v2335 = vpop.permute.xlu0 %2334
        %2338 = vset.pattern.permute.xlu0 0
        %2339 = vperm.xlu0 %2338, %v2301
        %v2340 = vpop.permute.xlu0 %2339
        %v2342 = vadd.f32 %v2285, %v2305
        %v2343 = vadd.f32 %v2286, %v2310
        %v2344 = vadd.f32 %v2287, %v2315
        %v2345 = vadd.f32 %v2288, %v2320
        %v2346 = vadd.f32 %v2289, %v2325
        %v2347 = vadd.f32 %v2290, %v2330
        %v2348 = vadd.f32 %v2291, %v2335
        %v2349 = vadd.f32 %v2292, %v2340
        %v2350 = vmax.f32 %v2342, 0.0
        %v2351 = vmax.f32 %v2343, 0.0
        %v2352 = vmax.f32 %v2344, 0.0
        %v2353 = vmax.f32 %v2345, 0.0
        %v2354 = vmax.f32 %v2346, 0.0
        %v2355 = vmax.f32 %v2347, 0.0
        %v2356 = vmax.f32 %v2348, 0.0
        %v2357 = vmax.f32 %v2349, 0.0
        %s2358 = scalar_lea.vmem %s3, 192
        %v2359 = vld [vmem:[%s2358] sm:$0xff]
        %v2360 = vld [vmem:[%s2358 + $0x8] sm:$0xff]
        %v2361 = vld [vmem:[%s2358 + $0x10] sm:$0xff]
        %v2362 = vld [vmem:[%s2358 + $0x18] sm:$0xff]
        %v2363 = vld [vmem:[%s2358 + $0x20] sm:$0xff]
        %v2364 = vld [vmem:[%s2358 + $0x28] sm:$0xff]
        %v2365 = vld [vmem:[%s2358 + $0x30] sm:$0xff]
        %v2366 = vld [vmem:[%s2358 + $0x38] sm:$0xff]
        %s2367 = scalar_lea.vmem %s4, 192
        %v2368 = vld [vmem:[%s2367] sm:$0xff]
        %v2369 = vld [vmem:[%s2367 + $0x8] sm:$0xff]
        %v2370 = vld [vmem:[%s2367 + $0x10] sm:$0xff]
        %v2371 = vld [vmem:[%s2367 + $0x18] sm:$0xff]
        %v2372 = vld [vmem:[%s2367 + $0x20] sm:$0xff]
        %v2373 = vld [vmem:[%s2367 + $0x28] sm:$0xff]
        %v2374 = vld [vmem:[%s2367 + $0x30] sm:$0xff]
        %v2375 = vld [vmem:[%s2367 + $0x38] sm:$0xff]
        %2377 = vset.pattern.permute.xlu0 0
        %2378 = vperm.xlu0 %2377, %v2368
        %v2379 = vpop.permute.xlu0 %2378
        %2382 = vset.pattern.permute.xlu0 0
        %2383 = vperm.xlu0 %2382, %v2369
        %v2384 = vpop.permute.xlu0 %2383
        %2387 = vset.pattern.permute.xlu0 0
        %2388 = vperm.xlu0 %2387, %v2370
        %v2389 = vpop.permute.xlu0 %2388
        %2392 = vset.pattern.permute.xlu0 0
        %2393 = vperm.xlu0 %2392, %v2371
        %v2394 = vpop.permute.xlu0 %2393
        %2397 = vset.pattern.permute.xlu0 0
        %2398 = vperm.xlu0 %2397, %v2372
        %v2399 = vpop.permute.xlu0 %2398
        %2402 = vset.pattern.permute.xlu0 0
        %2403 = vperm.xlu0 %2402, %v2373
        %v2404 = vpop.permute.xlu0 %2403
        %2407 = vset.pattern.permute.xlu0 0
        %2408 = vperm.xlu0 %2407, %v2374
        %v2409 = vpop.permute.xlu0 %2408
        %2412 = vset.pattern.permute.xlu0 0
        %2413 = vperm.xlu0 %2412, %v2375
        %v2414 = vpop.permute.xlu0 %2413
        %v2417 = vsel %vm589, %v2359, 0
        %v2420 = vsel %vm589, %v2360, 0
        %v2423 = vsel %vm589, %v2361, 0
        %v2426 = vsel %vm589, %v2362, 0
        %v2429 = vsel %vm589, %v2363, 0
        %v2432 = vsel %vm589, %v2364, 0
        %v2435 = vsel %vm589, %v2365, 0
        %v2438 = vsel %vm589, %v2366, 0
        %2440 = vmatprep.subr.mxu0 0.0
        %2441 = vmatpush1.msra.mxu0 %v2350
        %2442 = vmatprep.subr.mxu0 0.0
        %2443 = vmatpush1.msra.mxu0 %v2351
        %2444 = vmatprep.subr.mxu0 0.0
        %2445 = vmatpush1.msra.mxu0 %v2352
        %2446 = vmatprep.subr.mxu0 0.0
        %2447 = vmatpush1.msra.mxu0 %v2353
        %2448 = vmatprep.subr.mxu0 0.0
        %2449 = vmatpush1.msra.mxu0 %v2354
        %2450 = vmatprep.subr.mxu0 0.0
        %2451 = vmatpush1.msra.mxu0 %v2355
        %2452 = vmatprep.subr.mxu0 0.0
        %2453 = vmatpush1.msra.mxu0 %v2356
        %2454 = vmatprep.subr.mxu0 0.0
        %2455 = vmatpush1.msra.mxu0 %v2357
        %2456 = vmatprep.subr.mxu0 0.0
        %2457 = vmatpush1.msra.mxu0 0.0
        %2458 = vmatprep.subr.mxu0 0.0
        %2459 = vmatpush1.msra.mxu0 0.0
        %2460 = vmatprep.subr.mxu0 0.0
        %2461 = vmatpush1.msra.mxu0 0.0
        %2462 = vmatprep.subr.mxu0 0.0
        %2463 = vmatpush1.msra.mxu0 0.0
        %2464 = vmatprep.subr.mxu0 0.0
        %2465 = vmatpush1.msra.mxu0 0.0
        %2466 = vmatprep.subr.mxu0 0.0
        %2467 = vmatpush1.msra.mxu0 0.0
        %2468 = vmatprep.subr.mxu0 0.0
        %2469 = vmatpush1.msra.mxu0 0.0
        %2470 = vmatprep.subr.mxu0 0.0
        %2471 = vmatpush1.msra.mxu0 0.0
        %2472 = vmatprep.subr.mxu0 0.0
        %2473 = vmatpush1.msra.mxu0 0.0
        %2474 = vmatprep.subr.mxu0 0.0
        %2475 = vmatpush1.msra.mxu0 0.0
        %2476 = vmatprep.subr.mxu0 0.0
        %2477 = vmatpush1.msra.mxu0 0.0
        %2478 = vmatprep.subr.mxu0 0.0
        %2479 = vmatpush1.msra.mxu0 0.0
        %2480 = vmatprep.subr.mxu0 0.0
        %2481 = vmatpush1.msra.mxu0 0.0
        %2482 = vmatprep.subr.mxu0 0.0
        %2483 = vmatpush1.msra.mxu0 0.0
        %2484 = vmatprep.subr.mxu0 0.0
        %2485 = vmatpush1.msra.mxu0 0.0
        %2486 = vmatprep.subr.mxu0 0.0
        %2487 = vmatpush1.msra.mxu0 0.0
        %2488 = vmatprep.subr.mxu0 0.0
        %2489 = vmatpush1.msra.mxu0 0.0
        %2490 = vmatprep.subr.mxu0 0.0
        %2491 = vmatpush1.msra.mxu0 0.0
        %2492 = vmatprep.subr.mxu0 0.0
        %2493 = vmatpush1.msra.mxu0 0.0
        %2494 = vmatprep.subr.mxu0 0.0
        %2495 = vmatpush1.msra.mxu0 0.0
        %2496 = vmatprep.subr.mxu0 0.0
        %2497 = vmatpush1.msra.mxu0 0.0
        %2498 = vmatprep.subr.mxu0 0.0
        %2499 = vmatpush1.msra.mxu0 0.0
        %2500 = vmatprep.subr.mxu0 0.0
        %2501 = vmatpush1.msra.mxu0 0.0
        %2502 = vmatprep.subr.mxu0 0.0
        %2503 = vmatpush1.msra.mxu0 0.0
        %2504 = vmatprep.mubr.f32.mxu0 0.0
        %2505 = vmatmul.mubr.f32.gmra.mrb[0].mxu0 %v2417
        %v2506 = vpop.f32.mrb[0].mxu0
        %v2507 = vadd.f32 %v2379, %v2506
        %v2508 = vpop.f32.mrb[0].mxu0
        %2509 = vmatprep.mubr.f32.mxu0 0.0
        %2510 = vmatmul.mubr.f32.gmra.mrb[0].mxu0 %v2420
        %v2511 = vpop.f32.mrb[0].mxu0
        %v2512 = vadd.f32 %v2384, %v2511
        %v2513 = vpop.f32.mrb[0].mxu0
        %2514 = vmatprep.mubr.f32.mxu0 0.0
        %2515 = vmatmul.mubr.f32.gmra.mrb[0].mxu0 %v2423
        %v2516 = vpop.f32.mrb[0].mxu0
        %v2517 = vadd.f32 %v2389, %v2516
        %v2518 = vpop.f32.mrb[0].mxu0
        %2519 = vmatprep.mubr.f32.mxu0 0.0
        %2520 = vmatmul.mubr.f32.gmra.mrb[0].mxu0 %v2426
        %v2521 = vpop.f32.mrb[0].mxu0
        %v2522 = vadd.f32 %v2394, %v2521
        %v2523 = vpop.f32.mrb[0].mxu0
        %2524 = vmatprep.mubr.f32.mxu0 0.0
        %2525 = vmatmul.mubr.f32.gmra.mrb[0].mxu0 %v2429
        %v2526 = vpop.f32.mrb[0].mxu0
        %v2527 = vadd.f32 %v2399, %v2526
        %v2528 = vpop.f32.mrb[0].mxu0
        %2529 = vmatprep.mubr.f32.mxu0 0.0
        %2530 = vmatmul.mubr.f32.gmra.mrb[0].mxu0 %v2432
        %v2531 = vpop.f32.mrb[0].mxu0
        %v2532 = vadd.f32 %v2404, %v2531
        %v2533 = vpop.f32.mrb[0].mxu0
        %2534 = vmatprep.mubr.f32.mxu0 0.0
        %2535 = vmatmul.mubr.f32.gmra.mrb[0].mxu0 %v2435
        %v2536 = vpop.f32.mrb[0].mxu0
        %v2537 = vadd.f32 %v2409, %v2536
        %v2538 = vpop.f32.mrb[0].mxu0
        %2539 = vmatprep.mubr.f32.mxu0 0.0
        %2540 = vmatmul.mubr.f32.gmra.mrb[0].mxu0 %v2438
        %v2541 = vpop.f32.mrb[0].mxu0
        %v2542 = vadd.f32 %v2414, %v2541
        %v2543 = vpop.f32.mrb[0].mxu0
        %2544 = vdwg.mxu0
        %v2545 = vmax.f32 %v2507, 0.0
        %v2546 = vmax.f32 %v2512, 0.0
        %v2547 = vmax.f32 %v2517, 0.0
        %v2548 = vmax.f32 %v2522, 0.0
        %v2549 = vmax.f32 %v2527, 0.0
        %v2550 = vmax.f32 %v2532, 0.0
        %v2551 = vmax.f32 %v2537, 0.0
        %v2552 = vmax.f32 %v2542, 0.0
        %s2553 = scalar_lea.vmem %s5, 192
        %v2554 = vld [vmem:[%s2553] sm:$0xff]
        %v2555 = vld [vmem:[%s2553 + $0x8] sm:$0xff]
        %v2556 = vld [vmem:[%s2553 + $0x10] sm:$0xff]
        %v2557 = vld [vmem:[%s2553 + $0x18] sm:$0xff]
        %v2558 = vld [vmem:[%s2553 + $0x20] sm:$0xff]
        %v2559 = vld [vmem:[%s2553 + $0x28] sm:$0xff]
        %v2560 = vld [vmem:[%s2553 + $0x30] sm:$0xff]
        %v2561 = vld [vmem:[%s2553 + $0x38] sm:$0xff]
        %s2562 = scalar_lea.vmem %s6, 192
        %v2563 = vld [vmem:[%s2562] sm:$0xff]
        %v2564 = vld [vmem:[%s2562 + $0x8] sm:$0xff]
        %v2565 = vld [vmem:[%s2562 + $0x10] sm:$0xff]
        %v2566 = vld [vmem:[%s2562 + $0x18] sm:$0xff]
        %v2567 = vld [vmem:[%s2562 + $0x20] sm:$0xff]
        %v2568 = vld [vmem:[%s2562 + $0x28] sm:$0xff]
        %v2569 = vld [vmem:[%s2562 + $0x30] sm:$0xff]
        %v2570 = vld [vmem:[%s2562 + $0x38] sm:$0xff]
        %2572 = vset.pattern.permute.xlu0 0
        %2573 = vperm.xlu0 %2572, %v2563
        %v2574 = vpop.permute.xlu0 %2573
        %2577 = vset.pattern.permute.xlu0 0
        %2578 = vperm.xlu0 %2577, %v2564
        %v2579 = vpop.permute.xlu0 %2578
        %2582 = vset.pattern.permute.xlu0 0
        %2583 = vperm.xlu0 %2582, %v2565
        %v2584 = vpop.permute.xlu0 %2583
        %2587 = vset.pattern.permute.xlu0 0
        %2588 = vperm.xlu0 %2587, %v2566
        %v2589 = vpop.permute.xlu0 %2588
        %2592 = vset.pattern.permute.xlu0 0
        %2593 = vperm.xlu0 %2592, %v2567
        %v2594 = vpop.permute.xlu0 %2593
        %2597 = vset.pattern.permute.xlu0 0
        %2598 = vperm.xlu0 %2597, %v2568
        %v2599 = vpop.permute.xlu0 %2598
        %2602 = vset.pattern.permute.xlu0 0
        %2603 = vperm.xlu0 %2602, %v2569
        %v2604 = vpop.permute.xlu0 %2603
        %2607 = vset.pattern.permute.xlu0 0
        %2608 = vperm.xlu0 %2607, %v2570
        %v2609 = vpop.permute.xlu0 %2608
        %v2612 = vsel %vm589, %v2554, 0
        %v2615 = vsel %vm589, %v2555, 0
        %v2618 = vsel %vm589, %v2556, 0
        %v2621 = vsel %vm589, %v2557, 0
        %v2624 = vsel %vm589, %v2558, 0
        %v2627 = vsel %vm589, %v2559, 0
        %v2630 = vsel %vm589, %v2560, 0
        %v2633 = vsel %vm589, %v2561, 0
        %2635 = vmatprep.subr.mxu0 0.0
        %2636 = vmatpush1.msra.mxu0 %v2545
        %2637 = vmatprep.subr.mxu0 0.0
        %2638 = vmatpush1.msra.mxu0 %v2546
        %2639 = vmatprep.subr.mxu0 0.0
        %2640 = vmatpush1.msra.mxu0 %v2547
        %2641 = vmatprep.subr.mxu0 0.0
        %2642 = vmatpush1.msra.mxu0 %v2548
        %2643 = vmatprep.subr.mxu0 0.0
        %2644 = vmatpush1.msra.mxu0 %v2549
        %2645 = vmatprep.subr.mxu0 0.0
        %2646 = vmatpush1.msra.mxu0 %v2550
        %2647 = vmatprep.subr.mxu0 0.0
        %2648 = vmatpush1.msra.mxu0 %v2551
        %2649 = vmatprep.subr.mxu0 0.0
        %2650 = vmatpush1.msra.mxu0 %v2552
        %2651 = vmatprep.subr.mxu0 0.0
        %2652 = vmatpush1.msra.mxu0 0.0
        %2653 = vmatprep.subr.mxu0 0.0
        %2654 = vmatpush1.msra.mxu0 0.0
        %2655 = vmatprep.subr.mxu0 0.0
        %2656 = vmatpush1.msra.mxu0 0.0
        %2657 = vmatprep.subr.mxu0 0.0
        %2658 = vmatpush1.msra.mxu0 0.0
        %2659 = vmatprep.subr.mxu0 0.0
        %2660 = vmatpush1.msra.mxu0 0.0
        %2661 = vmatprep.subr.mxu0 0.0
        %2662 = vmatpush1.msra.mxu0 0.0
        %2663 = vmatprep.subr.mxu0 0.0
        %2664 = vmatpush1.msra.mxu0 0.0
        %2665 = vmatprep.subr.mxu0 0.0
        %2666 = vmatpush1.msra.mxu0 0.0
        %2667 = vmatprep.subr.mxu0 0.0
        %2668 = vmatpush1.msra.mxu0 0.0
        %2669 = vmatprep.subr.mxu0 0.0
        %2670 = vmatpush1.msra.mxu0 0.0
        %2671 = vmatprep.subr.mxu0 0.0
        %2672 = vmatpush1.msra.mxu0 0.0
        %2673 = vmatprep.subr.mxu0 0.0
        %2674 = vmatpush1.msra.mxu0 0.0
        %2675 = vmatprep.subr.mxu0 0.0
        %2676 = vmatpush1.msra.mxu0 0.0
        %2677 = vmatprep.subr.mxu0 0.0
        %2678 = vmatpush1.msra.mxu0 0.0
        %2679 = vmatprep.subr.mxu0 0.0
        %2680 = vmatpush1.msra.mxu0 0.0
        %2681 = vmatprep.subr.mxu0 0.0
        %2682 = vmatpush1.msra.mxu0 0.0
        %2683 = vmatprep.subr.mxu0 0.0
        %2684 = vmatpush1.msra.mxu0 0.0
        %2685 = vmatprep.subr.mxu0 0.0
        %2686 = vmatpush1.msra.mxu0 0.0
        %2687 = vmatprep.subr.mxu0 0.0
        %2688 = vmatpush1.msra.mxu0 0.0
        %2689 = vmatprep.subr.mxu0 0.0
        %2690 = vmatpush1.msra.mxu0 0.0
        %2691 = vmatprep.subr.mxu0 0.0
        %2692 = vmatpush1.msra.mxu0 0.0
        %2693 = vmatprep.subr.mxu0 0.0
        %2694 = vmatpush1.msra.mxu0 0.0
        %2695 = vmatprep.subr.mxu0 0.0
        %2696 = vmatpush1.msra.mxu0 0.0
        %2697 = vmatprep.subr.mxu0 0.0
        %2698 = vmatpush1.msra.mxu0 0.0
        %2699 = vmatprep.mubr.f32.mxu0 0.0
        %2700 = vmatmul.mubr.f32.gmra.mrb[0].mxu0 %v2612
        %v2701 = vpop.f32.mrb[0].mxu0
        %v2702 = vadd.f32 %v2574, %v2701
        %v2703 = vpop.f32.mrb[0].mxu0
        %2704 = vmatprep.mubr.f32.mxu0 0.0
        %2705 = vmatmul.mubr.f32.gmra.mrb[0].mxu0 %v2615
        %v2706 = vpop.f32.mrb[0].mxu0
        %v2707 = vadd.f32 %v2579, %v2706
        %v2708 = vpop.f32.mrb[0].mxu0
        %2709 = vmatprep.mubr.f32.mxu0 0.0
        %2710 = vmatmul.mubr.f32.gmra.mrb[0].mxu0 %v2618
        %v2711 = vpop.f32.mrb[0].mxu0
        %v2712 = vadd.f32 %v2584, %v2711
        %v2713 = vpop.f32.mrb[0].mxu0
        %2714 = vmatprep.mubr.f32.mxu0 0.0
        %2715 = vmatmul.mubr.f32.gmra.mrb[0].mxu0 %v2621
        %v2716 = vpop.f32.mrb[0].mxu0
        %v2717 = vadd.f32 %v2589, %v2716
        %v2718 = vpop.f32.mrb[0].mxu0
        %2719 = vmatprep.mubr.f32.mxu0 0.0
        %2720 = vmatmul.mubr.f32.gmra.mrb[0].mxu0 %v2624
        %v2721 = vpop.f32.mrb[0].mxu0
        %v2722 = vadd.f32 %v2594, %v2721
        %v2723 = vpop.f32.mrb[0].mxu0
        %2724 = vmatprep.mubr.f32.mxu0 0.0
        %2725 = vmatmul.mubr.f32.gmra.mrb[0].mxu0 %v2627
        %v2726 = vpop.f32.mrb[0].mxu0
        %v2727 = vadd.f32 %v2599, %v2726
        %v2728 = vpop.f32.mrb[0].mxu0
        %2729 = vmatprep.mubr.f32.mxu0 0.0
        %2730 = vmatmul.mubr.f32.gmra.mrb[0].mxu0 %v2630
        %v2731 = vpop.f32.mrb[0].mxu0
        %v2732 = vadd.f32 %v2604, %v2731
        %v2733 = vpop.f32.mrb[0].mxu0
        %2734 = vmatprep.mubr.f32.mxu0 0.0
        %2735 = vmatmul.mubr.f32.gmra.mrb[0].mxu0 %v2633
        %v2736 = vpop.f32.mrb[0].mxu0
        %v2737 = vadd.f32 %v2609, %v2736
        %v2738 = vpop.f32.mrb[0].mxu0
        %2739 = vdwg.mxu0
        %v2740 = vmax.f32 %v2702, 0.0
        %v2741 = vmax.f32 %v2707, 0.0
        %v2742 = vmax.f32 %v2712, 0.0
        %v2743 = vmax.f32 %v2717, 0.0
        %v2744 = vmax.f32 %v2722, 0.0
        %v2745 = vmax.f32 %v2727, 0.0
        %v2746 = vmax.f32 %v2732, 0.0
        %v2747 = vmax.f32 %v2737, 0.0
        %s2748 = scalar_lea.vmem %s7, 6
        %v2749 = vld [vmem:[%s2748] sm:$0x3]
        %s2750 = scalar_lea.vmem %s8, 6
        %v2751 = vld [vmem:[%s2750] sm:$0x3]
        %2753 = vset.pattern.permute.xlu0 0
        %2754 = vperm.xlu0 %2753, %v2751
        %v2755 = vpop.permute.xlu0 %2754
        %v2758 = vsel %vm589, %v2749, 0
        %2760 = vmatprep.subr.mxu0 0.0
        %2761 = vmatpush1.msra.mxu0 %v2740
        %2762 = vmatprep.subr.mxu0 0.0
        %2763 = vmatpush1.msra.mxu0 %v2741
        %2764 = vmatprep.subr.mxu0 0.0
        %2765 = vmatpush1.msra.mxu0 %v2742
        %2766 = vmatprep.subr.mxu0 0.0
        %2767 = vmatpush1.msra.mxu0 %v2743
        %2768 = vmatprep.subr.mxu0 0.0
        %2769 = vmatpush1.msra.mxu0 %v2744
        %2770 = vmatprep.subr.mxu0 0.0
        %2771 = vmatpush1.msra.mxu0 %v2745
        %2772 = vmatprep.subr.mxu0 0.0
        %2773 = vmatpush1.msra.mxu0 %v2746
        %2774 = vmatprep.subr.mxu0 0.0
        %2775 = vmatpush1.msra.mxu0 %v2747
        %2776 = vmatprep.subr.mxu0 0.0
        %2777 = vmatpush1.msra.mxu0 0.0
        %2778 = vmatprep.subr.mxu0 0.0
        %2779 = vmatpush1.msra.mxu0 0.0
        %2780 = vmatprep.subr.mxu0 0.0
        %2781 = vmatpush1.msra.mxu0 0.0
        %2782 = vmatprep.subr.mxu0 0.0
        %2783 = vmatpush1.msra.mxu0 0.0
        %2784 = vmatprep.subr.mxu0 0.0
        %2785 = vmatpush1.msra.mxu0 0.0
        %2786 = vmatprep.subr.mxu0 0.0
        %2787 = vmatpush1.msra.mxu0 0.0
        %2788 = vmatprep.subr.mxu0 0.0
        %2789 = vmatpush1.msra.mxu0 0.0
        %2790 = vmatprep.subr.mxu0 0.0
        %2791 = vmatpush1.msra.mxu0 0.0
        %2792 = vmatprep.subr.mxu0 0.0
        %2793 = vmatpush1.msra.mxu0 0.0
        %2794 = vmatprep.subr.mxu0 0.0
        %2795 = vmatpush1.msra.mxu0 0.0
        %2796 = vmatprep.subr.mxu0 0.0
        %2797 = vmatpush1.msra.mxu0 0.0
        %2798 = vmatprep.subr.mxu0 0.0
        %2799 = vmatpush1.msra.mxu0 0.0
        %2800 = vmatprep.subr.mxu0 0.0
        %2801 = vmatpush1.msra.mxu0 0.0
        %2802 = vmatprep.subr.mxu0 0.0
        %2803 = vmatpush1.msra.mxu0 0.0
        %2804 = vmatprep.subr.mxu0 0.0
        %2805 = vmatpush1.msra.mxu0 0.0
        %2806 = vmatprep.subr.mxu0 0.0
        %2807 = vmatpush1.msra.mxu0 0.0
        %2808 = vmatprep.subr.mxu0 0.0
        %2809 = vmatpush1.msra.mxu0 0.0
        %2810 = vmatprep.subr.mxu0 0.0
        %2811 = vmatpush1.msra.mxu0 0.0
        %2812 = vmatprep.subr.mxu0 0.0
        %2813 = vmatpush1.msra.mxu0 0.0
        %2814 = vmatprep.subr.mxu0 0.0
        %2815 = vmatpush1.msra.mxu0 0.0
        %2816 = vmatprep.subr.mxu0 0.0
        %2817 = vmatpush1.msra.mxu0 0.0
        %2818 = vmatprep.subr.mxu0 0.0
        %2819 = vmatpush1.msra.mxu0 0.0
        %2820 = vmatprep.subr.mxu0 0.0
        %2821 = vmatpush1.msra.mxu0 0.0
        %2822 = vmatprep.subr.mxu0 0.0
        %2823 = vmatpush1.msra.mxu0 0.0
        %2824 = vmatprep.mubr.f32.mxu0 0.0
        %2825 = vmatmul.mubr.f32.gmra.mrb[0].mxu0 %v2758
        %v2826 = vpop.f32.mrb[0].mxu0
        %v2827 = vadd.f32 %v2755, %v2826
        %v2828 = vpop.f32.mrb[0].mxu0
        %2829 = vdwg.mxu0
        %v2830 = vtanh.pop %v2827
        %s2831 = sld [smem:[#allocation2 + $0x3]]
        %v2832 = vstv %s2831
        %v2833 = vmul.f32 %v2832, %v2830
        %v2834 = vmul.f32 %v2833, 1.442695
        %v2835 = vpow.pop %v2834
        %v2836 = vmul.f32 %v2835, %v1620
        %v2838 = vrot.slane %v2830, 1
        %v2840 = vadd.f32 %v2836, %v2838
        %2841 = vst [vmem:[%s402 + $0x3] sm:$0x1] %v2833
        %2842 = vst [vmem:[%s395] sm:$0x1] %v2840
        %2843 = vst [vmem:[%s395 + $0x1] sm:$0x1] %v2230
        %s2844 = sand.u32 %s253, 1
        %s2845 = scalar_lea.sflag [#allocation3], %s2844
        %s2846 = sand.u32 %s253, 1
        %s2847 = smul.addr %s2846, 2
        %s2848 = scalar_lea.vmem [#allocation5], %s2847
        %s2849 = sand.u32 %s279, 1
        %s2850 = scalar_lea.sflag [#allocation7], %s2849
        %s2851 = sand.u32 %s279, 1
        %s2852 = smul.addr %s2851, 4
        %s2853 = scalar_lea.vmem [#allocation6], %s2852
        // Predicated region
        $region65: #{tpu_custom_call.1} parent=59 // pred_check
          %p2854 = pneg %p263
        $region66: #{tpu_custom_call.1} parent=59 // pred_check_branch
          %2856 = sbr.rel (%p2854) target = $region68
        $region67: #{tpu_custom_call.1} parent=59 // pred_region
          %s2858 = ssub.s32 32, 32
          %2859 = vsyncadd %s2845, %s2858
          %s2860 = smul.addr %s30, 32
          %s2861 = scalar_lea.hbm %s10, %s2860
          %s2863 = sshll.u32 %s2848, 4
          %s2864 = int_to_ptr.vmem [resolvable:$true] %s2863
          %2866 = dma.vmem_to_hbm [thread:$0]  %s2864, 32, %s2861, %s2845
        $region68: #{tpu_custom_call.1} parent=59 // pred_fallthru
          _
        // Predicated region
        $region69: #{tpu_custom_call.1} parent=59 // pred_check
          %p2867 = pneg %p289
        $region70: #{tpu_custom_call.1} parent=59 // pred_check_branch
          %2869 = sbr.rel (%p2867) target = $region72
        $region71: #{tpu_custom_call.1} parent=59 // pred_region
          %s2871 = ssub.s32 64, 64
          %2872 = vsyncadd %s2850, %s2871
          %s2873 = smul.addr %s30, 64
          %s2874 = scalar_lea.hbm %s11, %s2873
          %s2876 = sshll.u32 %s2853, 4
          %s2877 = int_to_ptr.vmem [resolvable:$true] %s2876
          %2879 = dma.vmem_to_hbm [thread:$0]  %s2877, 64, %s2874, %s2850
        $region72: #{tpu_custom_call.1} parent=59 // pred_fallthru
          _
      $region60: #{tpu_custom_call.1} parent=5 // pred_fallthru
        _
      %p2880 = scmp.le.s32.totalorder 2, %s25
      // Predicated region
      $region73: #{tpu_custom_call.1} parent=5 // pred_check
        %p2881 = pneg %p2880
      $region74: #{tpu_custom_call.1} parent=5 // pred_check_branch
        %2883 = sbr.rel (%p2881) target = $region76
      $region75: #{tpu_custom_call.1} parent=5 // pred_region
        %s2884 = ssub.s32 %s25, 2
        // Predicated region
        $region77: #{tpu_custom_call.1} parent=75 // pred_check
          %p2885 = pneg %p269
        $region78: #{tpu_custom_call.1} parent=75 // pred_check_branch
          %2887 = sbr.rel (%p2885) target = $region80
        $region79: #{tpu_custom_call.1} parent=75 // pred_region
          %s2888 = sand.u32 %s254, 1
          %s2889 = scalar_lea.sflag [#allocation3], %s2888
          %s2890 = sand.u32 %s254, 1
          %s2891 = smul.addr %s2890, 2
          %s2892 = scalar_lea.vmem [#allocation5], %s2891
          %2893 = dma.done %s2889, 32
        $region80: #{tpu_custom_call.1} parent=75 // pred_fallthru
          _
        // Predicated region
        $region81: #{tpu_custom_call.1} parent=75 // pred_check
          %p2894 = pneg %p295
        $region82: #{tpu_custom_call.1} parent=75 // pred_check_branch
          %2896 = sbr.rel (%p2894) target = $region84
        $region83: #{tpu_custom_call.1} parent=75 // pred_region
          %s2897 = sand.u32 %s280, 1
          %s2898 = scalar_lea.sflag [#allocation7], %s2897
          %s2899 = sand.u32 %s280, 1
          %s2900 = smul.addr %s2899, 4
          %s2901 = scalar_lea.vmem [#allocation6], %s2900
          %2902 = dma.done %s2898, 64
        $region84: #{tpu_custom_call.1} parent=75 // pred_fallthru
          _
      $region76: #{tpu_custom_call.1} parent=5 // pred_fallthru
        _
    $region6: #{tpu_custom_call.1} parent=1 // loop_footer
      %s29 = sadd.s32 1, %s25
    $region7: #{tpu_custom_call.1} parent=1 // loop_footer_branch
      %24 = sbr.rel target = $region3
    $region8: #{tpu_custom_call.1} parent=1 // loop_exit
      _
    %2903 = vsyncpa [#allocation3], 1
    %s2904 = scalar_lea.sflag [#allocation3], 1
    %2905 = vsyncpa %s2904, 1
    %2906 = vsyncpa [#allocation7], 1
    %s2907 = scalar_lea.sflag [#allocation7], 1
    %2908 = vsyncpa %s2907, 1
    %2909 = vsyncpa [#allocation4], 1
    %s2910 = scalar_lea.sflag [#allocation4], 1
    %2911 = vsyncpa %s2910, 1

</llo_original>
